<compile_context>
chip_gen: v5e
topology: v5e:2x2
jax: 0.10.0
libtpu: 0.0.40
codegen_flags: <defaults>
</compile_context>

<pallas_src>
import functools
import math

import jax
import jax.numpy as jnp
from jax.experimental import pallas as pl
from jax.experimental.pallas import tpu as pltpu

_BT_MAX = 128  # max images per grid step


# ---------------------------------------------------------------------------
# Fused kernel
# ---------------------------------------------------------------------------
def _sigmoid(x):
    # Single-EUP-op formulation (one tanh, rest VALU); identical to sigmoid.
    return 0.5 * jnp.tanh(0.5 * x) + 0.5


def _lenet_kernel(x_ref, m1_ref, b1_ref, m2_ref, b2_ref,
                  wf1_ref, bf1_ref, wf2_ref, bf2_ref, wf3_ref, bf3_ref,
                  out_ref, *, bt):
    f32, bf16 = jnp.float32, jnp.bfloat16

    # ---- conv1: one K=140 matmul.  LHS rows = (oh, b), lanes = ki*28 + w.
    #      Output lanes = 128*(ow%2) + (ow//2)*6 + c  (even/odd ow in separate
    #      128-lane halves so the ow-pool is vreg-aligned).
    acc1 = jnp.dot(x_ref[...], m1_ref[...], preferred_element_type=f32)   # (24*bt, 256)

    # ---- maxpool 2x2 BEFORE sigmoid: oh-pairs via leading-axis reshape,
    #      ow-pairs via the two 128-lane halves.
    a = acc1.reshape(12, 2 * bt, 256)
    a = jnp.maximum(a[:, :bt, :], a[:, bt:, :]).reshape(12 * bt, 256)     # pool over oh
    a = jnp.maximum(a[:, :128], a[:, 128:])                               # pool over ow
    p1 = _sigmoid(a + b1_ref[...]).astype(bf16)    # (12*bt, 128): lanes pw*6+c (>=72: 0.5)

    # ---- rows (ph, b) -> per-image lanes: 12 vreg-aligned block copies -> (bt, 1536)
    p1img = jnp.concatenate([p1[ph * bt:(ph + 1) * bt, :] for ph in range(12)], axis=1)

    # ---- conv2: one K=1536 matmul.  Output lanes =
    #      256*(2*(oh%2)+(ow%2)) + 16*((oh//2)*4 + (ow//2)) + co.
    acc2 = jnp.dot(p1img, m2_ref[...], preferred_element_type=f32)        # (bt, 1024)

    # ---- maxpool 2x2: max over the four 256-lane quadrant groups -> (bt, 256)
    a2 = jnp.maximum(jnp.maximum(acc2[:, 0:256], acc2[:, 256:512]),
                     jnp.maximum(acc2[:, 512:768], acc2[:, 768:1024]))
    feat = _sigmoid(a2 + b2_ref[...]).astype(bf16)       # lanes 16*(ph*4+pw) + co

    # ---- fc1 / fc2 / fc3 (weights zero-padded so dead 0.5 lanes contribute 0)
    h1 = _sigmoid(jnp.dot(feat, wf1_ref[...], preferred_element_type=f32)
                  + bf1_ref[...]).astype(bf16)
    h2 = _sigmoid(jnp.dot(h1, wf2_ref[...], preferred_element_type=f32)
                  + bf2_ref[...]).astype(bf16)
    out_ref[...] = jnp.dot(h2, wf3_ref[...], preferred_element_type=f32) + bf3_ref[...]


# ---------------------------------------------------------------------------
# Glue: banded / permuted / zero-padded weight matrices matching the layout
# ---------------------------------------------------------------------------
def _conv1_mat(w):
    # w: (6,1,5,5) OIHW.  m1[ki*28 + ow + kj, 128*(ow%2) + (ow//2)*6 + c] = w[c,0,ki,kj]
    wc = w[:, 0].astype(jnp.float32)
    ki, kj, ow, c = jnp.meshgrid(jnp.arange(5), jnp.arange(5),
                                 jnp.arange(24), jnp.arange(6), indexing="ij")
    rows = ki * 28 + ow + kj
    cols = 128 * (ow % 2) + (ow // 2) * 6 + c
    return jnp.zeros((140, 256), jnp.float32).at[rows, cols].set(wc[c, ki, kj])


def _conv2_mat(w):
    # w: (16,6,5,5).  rows = ph*128 + pw*6 + ci  (ph=oh+ki, pw=ow+kj);
    # cols = 256*(2*(oh%2)+(ow%2)) + 16*((oh//2)*4 + (ow//2)) + co.
    wf = w.astype(jnp.float32)
    oh, ow, ki, kj, ci, co = jnp.meshgrid(
        jnp.arange(8), jnp.arange(8), jnp.arange(5), jnp.arange(5),
        jnp.arange(6), jnp.arange(16), indexing="ij")
    rows = (oh + ki) * 128 + (ow + kj) * 6 + ci
    cols = 256 * (2 * (oh % 2) + (ow % 2)) + 16 * ((oh // 2) * 4 + (ow // 2)) + co
    return jnp.zeros((1536, 1024), jnp.float32).at[rows, cols].set(wf[co, ci, ki, kj])


def _fc1_mat(w):
    # w: (120,256) torch (out,in); torch flatten index = co*16 + s, kernel lane = 16*s + co.
    wf = w.astype(jnp.float32)
    s, co, n = jnp.meshgrid(jnp.arange(16), jnp.arange(16), jnp.arange(120), indexing="ij")
    return jnp.zeros((256, 128), jnp.float32).at[16 * s + co, n].set(wf[n, co * 16 + s])


def _fc_pad(w, k_real, n_real):
    # torch (out,in) -> (128,128) zero-padded; zero rows neutralize dead 0.5 lanes.
    return jnp.zeros((128, 128), jnp.float32).at[:k_real, :n_real].set(
        w.astype(jnp.float32).T)


def _bias_pad(b, width):
    return jnp.zeros((1, width), jnp.float32).at[0, :b.shape[0]].set(b.astype(jnp.float32))


def _pick_tiling(batch):
    # Tile up to 128 images/step; force >= 2 grid steps so both v7x cores work.
    bt = min(_BT_MAX, 8 * max(1, math.ceil(math.ceil(batch / 2) / 8)))
    n_tiles = max(2, math.ceil(batch / bt))
    return bt, n_tiles


@jax.jit
def lenet_forward(params, img):
    """img: (B, 1, 28, 28) float32 (PyTorch NCHW).  Returns (B, 10)."""
    B = img.shape[0]
    bt, n_tiles = _pick_tiling(B)
    Bp = n_tiles * bt

    # Pack the input: rows (tile, oh, b), lanes ki*28 + w holding img[b, oh+ki, w].
    x = img.astype(jnp.float32).reshape(B, 28, 28)
    x = jnp.pad(x, ((0, Bp - B), (0, 0), (0, 0)))
    x = x.reshape(n_tiles, bt, 28, 28)
    h_idx = jnp.arange(24)[:, None] + jnp.arange(5)[None, :]           # (24, 5)
    x = x[:, :, h_idx, :]                                              # (nt, bt, 24, 5, 28)
    x = x.transpose(0, 2, 1, 3, 4).reshape(n_tiles * 24 * bt, 140).astype(jnp.bfloat16)

    m1 = _conv1_mat(params["conv1_w"]).astype(jnp.bfloat16)
    b1 = jnp.zeros((1, 128), jnp.float32).at[0, :72].set(
        jnp.tile(params["conv1_b"].astype(jnp.float32), 12))
    m2 = _conv2_mat(params["conv2_w"]).astype(jnp.bfloat16)
    b2 = jnp.tile(params["conv2_b"].astype(jnp.float32), 16).reshape(1, 256)
    wf1 = _fc1_mat(params["fc1_w"]).astype(jnp.bfloat16)
    bf1 = _bias_pad(params["fc1_b"], 128)
    wf2 = _fc_pad(params["fc2_w"], 120, 84).astype(jnp.bfloat16)
    bf2 = _bias_pad(params["fc2_b"], 128)
    wf3 = _fc_pad(params["fc3_w"], 84, 10).astype(jnp.bfloat16)
    bf3 = _bias_pad(params["fc3_b"], 128)

    def const(shape):  # whole-array weight block, constant index_map (never re-fetched)
        return pl.BlockSpec(shape, lambda i: (0,) * len(shape))

    out = pl.pallas_call(
        functools.partial(_lenet_kernel, bt=bt),
        grid=(n_tiles,),
        in_specs=[
            pl.BlockSpec((24 * bt, 140), lambda i: (i, 0)),   # packed input batch tile
            const((140, 256)), const((1, 128)),               # conv1 banded mat + bias
            const((1536, 1024)), const((1, 256)),             # conv2 banded mat + bias
            const((256, 128)), const((1, 128)),                # fc1 (pool2/flatten folded)
            const((128, 128)), const((1, 128)),                # fc2 (zero-padded)
            const((128, 128)), const((1, 128)),                # fc3 (zero-padded)
        ],
        out_specs=pl.BlockSpec((bt, 128), lambda i: (i, 0)),
        out_shape=jax.ShapeDtypeStruct((Bp, 128), jnp.float32),
        compiler_params=pltpu.CompilerParams(
            dimension_semantics=("parallel",),       # megacore batch split on v7x
            vmem_limit_bytes=32 * 1024 * 1024),
    )(x, m1, b1, m2, b2, wf1, bf1, wf2, bf2, wf3, bf3)
    return out[:B, :10]


# ---------------------------------------------------------------------------
# Deterministic init (torch layout / torch-style uniform) + pure-JAX reference
# ---------------------------------------------------------------------------
def init_lenet_params(key):
    def uinit(k, shape, fan_in):
        bound = 1.0 / (fan_in ** 0.5)
        return jax.random.uniform(k, shape, jnp.float32, -bound, bound)
    ks = jax.random.split(key, 10)
    return {
        "conv1_w": uinit(ks[0], (6, 1, 5, 5), 25),
        "conv1_b": uinit(ks[1], (6,), 25),
        "conv2_w": uinit(ks[2], (16, 6, 5, 5), 150),
        "conv2_b": uinit(ks[3], (16,), 150),
        "fc1_w": uinit(ks[4], (120, 256), 256),
        "fc1_b": uinit(ks[5], (120,), 256),
        "fc2_w": uinit(ks[6], (84, 120), 120),
        "fc2_b": uinit(ks[7], (84,), 120),
        "fc3_w": uinit(ks[8], (10, 84), 84),
        "fc3_b": uinit(ks[9], (10,), 84),
    }


def lenet_reference(params, img):
    hi = jax.lax.Precision.HIGHEST
    dn = ("NCHW", "OIHW", "NCHW")
    y = jax.lax.conv_general_dilated(img, params["conv1_w"], (1, 1), "VALID",
                                     dimension_numbers=dn, precision=hi)
    y = jax.nn.sigmoid(y + params["conv1_b"][None, :, None, None])
    y = jax.lax.reduce_window(y, -jnp.inf, jax.lax.max, (1, 1, 2, 2), (1, 1, 2, 2), "VALID")
    y = jax.lax.conv_general_dilated(y, params["conv2_w"], (1, 1), "VALID",
                                     dimension_numbers=dn, precision=hi)
    y = jax.nn.sigmoid(y + params["conv2_b"][None, :, None, None])
    y = jax.lax.reduce_window(y, -jnp.inf, jax.lax.max, (1, 1, 2, 2), (1, 1, 2, 2), "VALID")
    feat = y.reshape(img.shape[0], -1)                       # NCHW flatten, like torch .view
    h = jax.nn.sigmoid(jnp.dot(feat, params["fc1_w"].T, precision=hi) + params["fc1_b"])
    h = jax.nn.sigmoid(jnp.dot(h, params["fc2_w"].T, precision=hi) + params["fc2_b"])
    return jnp.dot(h, params["fc3_w"].T, precision=hi) + params["fc3_b"]


if __name__ == "__main__":
    key = jax.random.PRNGKey(0)
    pkey, xkey = jax.random.split(key)
    params = init_lenet_params(pkey)
    img = jax.random.normal(xkey, (2, 1, 28, 28), jnp.float32)

    out = lenet_forward(params, img)
    jax.block_until_ready(out)

    assert out.shape == (2, 10) and out.dtype == jnp.float32
    assert bool(jnp.all(jnp.isfinite(out)))
    ref = lenet_reference(params, img)
    err = float(jnp.max(jnp.abs(out - ref)))
    assert err < 1e-2, err
    print("KERNEL_OK")
</pallas_src>

<mosaic_0001>
module attributes {stable_mosaic.version = 11 : i64} {
  func.func @_lenet_kernel(%arg0: i32, %arg1: memref<192x140xbf16, #tpu.memory_space<vmem>>, %arg2: memref<140x256xbf16, #tpu.memory_space<vmem>>, %arg3: memref<1x128xf32, #tpu.memory_space<vmem>>, %arg4: memref<1536x1024xbf16, #tpu.memory_space<vmem>>, %arg5: memref<1x256xf32, #tpu.memory_space<vmem>>, %arg6: memref<256x128xbf16, #tpu.memory_space<vmem>>, %arg7: memref<1x128xf32, #tpu.memory_space<vmem>>, %arg8: memref<128x128xbf16, #tpu.memory_space<vmem>>, %arg9: memref<1x128xf32, #tpu.memory_space<vmem>>, %arg10: memref<128x128xbf16, #tpu.memory_space<vmem>>, %arg11: memref<1x128xf32, #tpu.memory_space<vmem>>, %arg12: memref<8x128xf32, #tpu.memory_space<vmem>>) attributes {dimension_semantics = [#tpu.dimension_semantics<parallel>], iteration_bounds = array<i64: 2>, scalar_prefetch = 0 : i64, scratch_operands = 0 : i64, tpu.core_type = #tpu.core_type<tc>, window_params = [{transform_indices = @transform_0, window_bounds = array<i64: 192, 140>}, {pipeline_mode = #tpu.pipeline_mode<synchronous>, transform_indices = @transform_1, window_bounds = array<i64: 140, 256>}, {pipeline_mode = #tpu.pipeline_mode<synchronous>, transform_indices = @transform_2, window_bounds = array<i64: 1, 128>}, {pipeline_mode = #tpu.pipeline_mode<synchronous>, transform_indices = @transform_3, window_bounds = array<i64: 1536, 1024>}, {pipeline_mode = #tpu.pipeline_mode<synchronous>, transform_indices = @transform_4, window_bounds = array<i64: 1, 256>}, {pipeline_mode = #tpu.pipeline_mode<synchronous>, transform_indices = @transform_5, window_bounds = array<i64: 256, 128>}, {pipeline_mode = #tpu.pipeline_mode<synchronous>, transform_indices = @transform_6, window_bounds = array<i64: 1, 128>}, {pipeline_mode = #tpu.pipeline_mode<synchronous>, transform_indices = @transform_7, window_bounds = array<i64: 128, 128>}, {pipeline_mode = #tpu.pipeline_mode<synchronous>, transform_indices = @transform_8, window_bounds = array<i64: 1, 128>}, {pipeline_mode = #tpu.pipeline_mode<synchronous>, transform_indices = @transform_9, window_bounds = array<i64: 128, 128>}, {pipeline_mode = #tpu.pipeline_mode<synchronous>, transform_indices = @transform_10, window_bounds = array<i64: 1, 128>}, {transform_indices = @transform_11, window_bounds = array<i64: 8, 128>}]} {
    %c0 = arith.constant 0 : index
    %c0_0 = arith.constant 0 : index
    %0 = vector.load %arg1[%c0, %c0_0] : memref<192x140xbf16, #tpu.memory_space<vmem>>, vector<192x140xbf16>
    %c0_1 = arith.constant 0 : index
    %c0_2 = arith.constant 0 : index
    %1 = vector.load %arg2[%c0_1, %c0_2] : memref<140x256xbf16, #tpu.memory_space<vmem>>, vector<140x256xbf16>
    %cst = arith.constant dense<0.000000e+00> : vector<192x256xf32>
    %2 = tpu.matmul %0, %1, %cst {dimension_numbers = #tpu.dot_dimension_numbers<[1], [0], [0], [1], [0, 0, 1, 1], [], []>} : vector<192x140xbf16>, vector<140x256xbf16>, vector<192x256xf32> -> vector<192x256xf32>
    %3 = vector.shape_cast %2 : vector<192x256xf32> to vector<12x16x256xf32>
    %4 = vector.extract_strided_slice %3 {offsets = [0, 0, 0], sizes = [12, 8, 256], strides = [1, 1, 1]} : vector<12x16x256xf32> to vector<12x8x256xf32>
    %5 = vector.extract_strided_slice %3 {offsets = [0, 8, 0], sizes = [12, 8, 256], strides = [1, 1, 1]} : vector<12x16x256xf32> to vector<12x8x256xf32>
    %6 = arith.maximumf %4, %5 : vector<12x8x256xf32>
    %7 = vector.shape_cast %6 : vector<12x8x256xf32> to vector<96x256xf32>
    %8 = vector.extract_strided_slice %7 {offsets = [0, 0], sizes = [96, 128], strides = [1, 1]} : vector<96x256xf32> to vector<96x128xf32>
    %9 = vector.extract_strided_slice %7 {offsets = [0, 128], sizes = [96, 128], strides = [1, 1]} : vector<96x256xf32> to vector<96x128xf32>
    %10 = arith.maximumf %8, %9 : vector<96x128xf32>
    %c0_3 = arith.constant 0 : index
    %c0_4 = arith.constant 0 : index
    %11 = vector.load %arg3[%c0_3, %c0_4] : memref<1x128xf32, #tpu.memory_space<vmem>>, vector<1x128xf32>
    %12 = vector.broadcast %11 : vector<1x128xf32> to vector<96x128xf32>
    %13 = arith.addf %10, %12 : vector<96x128xf32>
    %cst_5 = arith.constant 5.000000e-01 : f32
    %14 = vector.broadcast %cst_5 : f32 to vector<96x128xf32>
    %15 = arith.mulf %14, %13 : vector<96x128xf32>
    %16 = math.tanh %15 : vector<96x128xf32>
    %cst_6 = arith.constant 5.000000e-01 : f32
    %17 = vector.broadcast %cst_6 : f32 to vector<96x128xf32>
    %18 = arith.mulf %17, %16 : vector<96x128xf32>
    %cst_7 = arith.constant 5.000000e-01 : f32
    %19 = vector.broadcast %cst_7 : f32 to vector<96x128xf32>
    %20 = arith.addf %18, %19 : vector<96x128xf32>
    %21 = arith.truncf %20 : vector<96x128xf32> to vector<96x128xbf16>
    %22 = vector.extract_strided_slice %21 {offsets = [0, 0], sizes = [8, 128], strides = [1, 1]} : vector<96x128xbf16> to vector<8x128xbf16>
    %23 = vector.extract_strided_slice %21 {offsets = [8, 0], sizes = [8, 128], strides = [1, 1]} : vector<96x128xbf16> to vector<8x128xbf16>
    %24 = vector.extract_strided_slice %21 {offsets = [16, 0], sizes = [8, 128], strides = [1, 1]} : vector<96x128xbf16> to vector<8x128xbf16>
    %25 = vector.extract_strided_slice %21 {offsets = [24, 0], sizes = [8, 128], strides = [1, 1]} : vector<96x128xbf16> to vector<8x128xbf16>
    %26 = vector.extract_strided_slice %21 {offsets = [32, 0], sizes = [8, 128], strides = [1, 1]} : vector<96x128xbf16> to vector<8x128xbf16>
    %27 = vector.extract_strided_slice %21 {offsets = [40, 0], sizes = [8, 128], strides = [1, 1]} : vector<96x128xbf16> to vector<8x128xbf16>
    %28 = vector.extract_strided_slice %21 {offsets = [48, 0], sizes = [8, 128], strides = [1, 1]} : vector<96x128xbf16> to vector<8x128xbf16>
    %29 = vector.extract_strided_slice %21 {offsets = [56, 0], sizes = [8, 128], strides = [1, 1]} : vector<96x128xbf16> to vector<8x128xbf16>
    %30 = vector.extract_strided_slice %21 {offsets = [64, 0], sizes = [8, 128], strides = [1, 1]} : vector<96x128xbf16> to vector<8x128xbf16>
    %31 = vector.extract_strided_slice %21 {offsets = [72, 0], sizes = [8, 128], strides = [1, 1]} : vector<96x128xbf16> to vector<8x128xbf16>
    %32 = vector.extract_strided_slice %21 {offsets = [80, 0], sizes = [8, 128], strides = [1, 1]} : vector<96x128xbf16> to vector<8x128xbf16>
    %33 = vector.extract_strided_slice %21 {offsets = [88, 0], sizes = [8, 128], strides = [1, 1]} : vector<96x128xbf16> to vector<8x128xbf16>
    %34 = tpu.concatenate %22, %23, %24, %25, %26, %27, %28, %29, %30, %31, %32, %33 in 1 : vector<8x128xbf16>, vector<8x128xbf16>, vector<8x128xbf16>, vector<8x128xbf16>, vector<8x128xbf16>, vector<8x128xbf16>, vector<8x128xbf16>, vector<8x128xbf16>, vector<8x128xbf16>, vector<8x128xbf16>, vector<8x128xbf16>, vector<8x128xbf16> -> vector<8x1536xbf16>
    %c0_8 = arith.constant 0 : index
    %c0_9 = arith.constant 0 : index
    %35 = vector.load %arg4[%c0_8, %c0_9] : memref<1536x1024xbf16, #tpu.memory_space<vmem>>, vector<1536x1024xbf16>
    %cst_10 = arith.constant dense<0.000000e+00> : vector<8x1024xf32>
    %36 = tpu.matmul %34, %35, %cst_10 {dimension_numbers = #tpu.dot_dimension_numbers<[1], [0], [0], [1], [0, 0, 1, 1], [], []>} : vector<8x1536xbf16>, vector<1536x1024xbf16>, vector<8x1024xf32> -> vector<8x1024xf32>
    %37 = vector.extract_strided_slice %36 {offsets = [0, 0], sizes = [8, 256], strides = [1, 1]} : vector<8x1024xf32> to vector<8x256xf32>
    %38 = vector.extract_strided_slice %36 {offsets = [0, 256], sizes = [8, 256], strides = [1, 1]} : vector<8x1024xf32> to vector<8x256xf32>
    %39 = arith.maximumf %37, %38 : vector<8x256xf32>
    %40 = vector.extract_strided_slice %36 {offsets = [0, 512], sizes = [8, 256], strides = [1, 1]} : vector<8x1024xf32> to vector<8x256xf32>
    %41 = vector.extract_strided_slice %36 {offsets = [0, 768], sizes = [8, 256], strides = [1, 1]} : vector<8x1024xf32> to vector<8x256xf32>
    %42 = arith.maximumf %40, %41 : vector<8x256xf32>
    %43 = arith.maximumf %39, %42 : vector<8x256xf32>
    %c0_11 = arith.constant 0 : index
    %c0_12 = arith.constant 0 : index
    %44 = vector.load %arg5[%c0_11, %c0_12] : memref<1x256xf32, #tpu.memory_space<vmem>>, vector<1x256xf32>
    %45 = vector.broadcast %44 : vector<1x256xf32> to vector<8x256xf32>
    %46 = arith.addf %43, %45 : vector<8x256xf32>
    %cst_13 = arith.constant 5.000000e-01 : f32
    %47 = vector.broadcast %cst_13 : f32 to vector<8x256xf32>
    %48 = arith.mulf %47, %46 : vector<8x256xf32>
    %49 = math.tanh %48 : vector<8x256xf32>
    %cst_14 = arith.constant 5.000000e-01 : f32
    %50 = vector.broadcast %cst_14 : f32 to vector<8x256xf32>
    %51 = arith.mulf %50, %49 : vector<8x256xf32>
    %cst_15 = arith.constant 5.000000e-01 : f32
    %52 = vector.broadcast %cst_15 : f32 to vector<8x256xf32>
    %53 = arith.addf %51, %52 : vector<8x256xf32>
    %54 = arith.truncf %53 : vector<8x256xf32> to vector<8x256xbf16>
    %c0_16 = arith.constant 0 : index
    %c0_17 = arith.constant 0 : index
    %55 = vector.load %arg6[%c0_16, %c0_17] : memref<256x128xbf16, #tpu.memory_space<vmem>>, vector<256x128xbf16>
    %cst_18 = arith.constant dense<0.000000e+00> : vector<8x128xf32>
    %56 = tpu.matmul %54, %55, %cst_18 {dimension_numbers = #tpu.dot_dimension_numbers<[1], [0], [0], [1], [0, 0, 1, 1], [], []>} : vector<8x256xbf16>, vector<256x128xbf16>, vector<8x128xf32> -> vector<8x128xf32>
    %c0_19 = arith.constant 0 : index
    %c0_20 = arith.constant 0 : index
    %57 = vector.load %arg7[%c0_19, %c0_20] : memref<1x128xf32, #tpu.memory_space<vmem>>, vector<1x128xf32>
    %58 = vector.broadcast %57 : vector<1x128xf32> to vector<8x128xf32>
    %59 = arith.addf %56, %58 : vector<8x128xf32>
    %cst_21 = arith.constant 5.000000e-01 : f32
    %60 = vector.broadcast %cst_21 : f32 to vector<8x128xf32>
    %61 = arith.mulf %60, %59 : vector<8x128xf32>
    %62 = math.tanh %61 : vector<8x128xf32>
    %cst_22 = arith.constant 5.000000e-01 : f32
    %63 = vector.broadcast %cst_22 : f32 to vector<8x128xf32>
    %64 = arith.mulf %63, %62 : vector<8x128xf32>
    %cst_23 = arith.constant 5.000000e-01 : f32
    %65 = vector.broadcast %cst_23 : f32 to vector<8x128xf32>
    %66 = arith.addf %64, %65 : vector<8x128xf32>
    %67 = arith.truncf %66 : vector<8x128xf32> to vector<8x128xbf16>
    %c0_24 = arith.constant 0 : index
    %c0_25 = arith.constant 0 : index
    %68 = vector.load %arg8[%c0_24, %c0_25] : memref<128x128xbf16, #tpu.memory_space<vmem>>, vector<128x128xbf16>
    %cst_26 = arith.constant dense<0.000000e+00> : vector<8x128xf32>
    %69 = tpu.matmul %67, %68, %cst_26 {dimension_numbers = #tpu.dot_dimension_numbers<[1], [0], [0], [1], [0, 0, 1, 1], [], []>} : vector<8x128xbf16>, vector<128x128xbf16>, vector<8x128xf32> -> vector<8x128xf32>
    %c0_27 = arith.constant 0 : index
    %c0_28 = arith.constant 0 : index
    %70 = vector.load %arg9[%c0_27, %c0_28] : memref<1x128xf32, #tpu.memory_space<vmem>>, vector<1x128xf32>
    %71 = vector.broadcast %70 : vector<1x128xf32> to vector<8x128xf32>
    %72 = arith.addf %69, %71 : vector<8x128xf32>
    %cst_29 = arith.constant 5.000000e-01 : f32
    %73 = vector.broadcast %cst_29 : f32 to vector<8x128xf32>
    %74 = arith.mulf %73, %72 : vector<8x128xf32>
    %75 = math.tanh %74 : vector<8x128xf32>
    %cst_30 = arith.constant 5.000000e-01 : f32
    %76 = vector.broadcast %cst_30 : f32 to vector<8x128xf32>
    %77 = arith.mulf %76, %75 : vector<8x128xf32>
    %cst_31 = arith.constant 5.000000e-01 : f32
    %78 = vector.broadcast %cst_31 : f32 to vector<8x128xf32>
    %79 = arith.addf %77, %78 : vector<8x128xf32>
    %80 = arith.truncf %79 : vector<8x128xf32> to vector<8x128xbf16>
    %c0_32 = arith.constant 0 : index
    %c0_33 = arith.constant 0 : index
    %81 = vector.load %arg10[%c0_32, %c0_33] : memref<128x128xbf16, #tpu.memory_space<vmem>>, vector<128x128xbf16>
    %cst_34 = arith.constant dense<0.000000e+00> : vector<8x128xf32>
    %82 = tpu.matmul %80, %81, %cst_34 {dimension_numbers = #tpu.dot_dimension_numbers<[1], [0], [0], [1], [0, 0, 1, 1], [], []>} : vector<8x128xbf16>, vector<128x128xbf16>, vector<8x128xf32> -> vector<8x128xf32>
    %c0_35 = arith.constant 0 : index
    %c0_36 = arith.constant 0 : index
    %83 = vector.load %arg11[%c0_35, %c0_36] : memref<1x128xf32, #tpu.memory_space<vmem>>, vector<1x128xf32>
    %84 = vector.broadcast %83 : vector<1x128xf32> to vector<8x128xf32>
    %85 = arith.addf %82, %84 : vector<8x128xf32>
    %c0_37 = arith.constant 0 : index
    %c0_38 = arith.constant 0 : index
    %86 = vector.load %arg12[%c0_37, %c0_38] : memref<8x128xf32, #tpu.memory_space<vmem>>, vector<8x128xf32>
    tpu.vector_store %arg12[%c0_37, %c0_38], %85 {strides = array<i32>} : memref<8x128xf32, #tpu.memory_space<vmem>>, vector<8x128xf32>,
    return
  }
  func.func @transform_0(%arg0: i32) -> (i32, i32) {
    %c0_i32 = arith.constant 0 : i32
    %c0_i32_0 = arith.constant 0 : i32
    return %arg0, %c0_i32 : i32, i32
  }
  func.func @transform_1(%arg0: i32) -> (i32, i32) {
    %c0_i32 = arith.constant 0 : i32
    %c0_i32_0 = arith.constant 0 : i32
    %c0_i32_1 = arith.constant 0 : i32
    return %c0_i32, %c0_i32_0 : i32, i32
  }
  func.func @transform_2(%arg0: i32) -> (i32, i32) {
    %c0_i32 = arith.constant 0 : i32
    %c0_i32_0 = arith.constant 0 : i32
    %c0_i32_1 = arith.constant 0 : i32
    return %c0_i32, %c0_i32_0 : i32, i32
  }
  func.func @transform_3(%arg0: i32) -> (i32, i32) {
    %c0_i32 = arith.constant 0 : i32
    %c0_i32_0 = arith.constant 0 : i32
    %c0_i32_1 = arith.constant 0 : i32
    return %c0_i32, %c0_i32_0 : i32, i32
  }
  func.func @transform_4(%arg0: i32) -> (i32, i32) {
    %c0_i32 = arith.constant 0 : i32
    %c0_i32_0 = arith.constant 0 : i32
    %c0_i32_1 = arith.constant 0 : i32
    return %c0_i32, %c0_i32_0 : i32, i32
  }
  func.func @transform_5(%arg0: i32) -> (i32, i32) {
    %c0_i32 = arith.constant 0 : i32
    %c0_i32_0 = arith.constant 0 : i32
    %c0_i32_1 = arith.constant 0 : i32
    return %c0_i32, %c0_i32_0 : i32, i32
  }
  func.func @transform_6(%arg0: i32) -> (i32, i32) {
    %c0_i32 = arith.constant 0 : i32
    %c0_i32_0 = arith.constant 0 : i32
    %c0_i32_1 = arith.constant 0 : i32
    return %c0_i32, %c0_i32_0 : i32, i32
  }
  func.func @transform_7(%arg0: i32) -> (i32, i32) {
    %c0_i32 = arith.constant 0 : i32
    %c0_i32_0 = arith.constant 0 : i32
    %c0_i32_1 = arith.constant 0 : i32
    return %c0_i32, %c0_i32_0 : i32, i32
  }
  func.func @transform_8(%arg0: i32) -> (i32, i32) {
    %c0_i32 = arith.constant 0 : i32
    %c0_i32_0 = arith.constant 0 : i32
    %c0_i32_1 = arith.constant 0 : i32
    return %c0_i32, %c0_i32_0 : i32, i32
  }
  func.func @transform_9(%arg0: i32) -> (i32, i32) {
    %c0_i32 = arith.constant 0 : i32
    %c0_i32_0 = arith.constant 0 : i32
    %c0_i32_1 = arith.constant 0 : i32
    return %c0_i32, %c0_i32_0 : i32, i32
  }
  func.func @transform_10(%arg0: i32) -> (i32, i32) {
    %c0_i32 = arith.constant 0 : i32
    %c0_i32_0 = arith.constant 0 : i32
    %c0_i32_1 = arith.constant 0 : i32
    return %c0_i32, %c0_i32_0 : i32, i32
  }
  func.func @transform_11(%arg0: i32) -> (i32, i32) {
    %c0_i32 = arith.constant 0 : i32
    %c0_i32_0 = arith.constant 0 : i32
    return %arg0, %c0_i32 : i32, i32
  }
}

</mosaic_0001>

<llo_original>
// kernel: tile.18
$region0: #{tile.18}
  #allocation0 [shape = 's32[1]{0}', space=sflag, size = 0x4, scoped, tag = 'scoped memory for tile.18']
  %s0 = inlined_call_operand.vmem [shape: f32[16], index: 0, kind: input, shape index: {}]
  %s1 = inlined_call_operand.vmem [shape: f32[16,16], index: 1, kind: output, shape index: {}]
  // Predicated region
  $region2: #{tile.18} parent=0 // pred_check
    _
  $region3: #{tile.18} parent=0 // pred_check_branch
    %3 = sbr.rel (0) target = $region5
  $region4: #{tile.18} parent=0 // pred_region
    _
  $region5: #{tile.18} parent=0 // pred_fallthru
    _
  %v4 = vld [vmem:[%s0] ss:$0 sm:$0xff]
  %5 = vst [vmem:[%s1] sm:$0xff] %v4
  %s6 = scalar_lea.vmem %s1, 8
  %7 = vst [vmem:[%s6] sm:$0xff] %v4

// kernel: tile.19
$region0: #{tile.19}
  %s0 = inlined_call_operand.vmem [shape: f32[16,16], index: 0, kind: input, shape index: {}]
  %s1 = inlined_call_operand.vmem [shape: f32[1,256], index: 1, kind: output, shape index: {}]
  $region1: #{tile.19} parent=0
    #allocation0 [shape = 'u8[8192]{0}', space=vmem, size = 0x2000, scoped, tag = 'scoped mem for output reshape']
    %s2 = smov 3
    %v3 = vld [vmem:[%s0] ss:$8 sm:%s2]
    %vm4 = vcmask 130048
    %5 = vst.msk [vmem:[#allocation0] ss:$8 sm:$0x3] %vm4, %v3
    %s6 = scalar_lea.vmem %s0, 7
    %s7 = smov 3
    %v8 = vld [vmem:[%s6] ss:$8 sm:%s7]
    %9 = vrot.lane.b32.xlu0 %v8, 112
    %v10 = vpop.permute.xlu0 %9
    %vm11 = vcmask 1048448
    %12 = vst.msk [vmem:[#allocation0] ss:$8 sm:$0x3] %vm11, %v10
    %s13 = scalar_lea.vmem %s0, 6
    %s14 = smov 3
    %v15 = vld [vmem:[%s13] ss:$8 sm:%s14]
    %16 = vrot.lane.b32.xlu0 %v15, 96
    %v17 = vpop.permute.xlu0 %16
    %vm18 = vcmask 917248
    %19 = vst.msk [vmem:[#allocation0] ss:$8 sm:$0x3] %vm18, %v17
    %s20 = scalar_lea.vmem %s0, 5
    %s21 = smov 3
    %v22 = vld [vmem:[%s20] ss:$8 sm:%s21]
    %23 = vrot.lane.b32.xlu0 %v22, 80
    %v24 = vpop.permute.xlu0 %23
    %vm25 = vcmask 786048
    %26 = vst.msk [vmem:[#allocation0] ss:$8 sm:$0x3] %vm25, %v24
    %s27 = scalar_lea.vmem %s0, 4
    %s28 = smov 3
    %v29 = vld [vmem:[%s27] ss:$8 sm:%s28]
    %30 = vrot.lane.b32.xlu0 %v29, 64
    %v31 = vpop.permute.xlu0 %30
    %vm32 = vcmask 654848
    %33 = vst.msk [vmem:[#allocation0] ss:$8 sm:$0x3] %vm32, %v31
    %s34 = scalar_lea.vmem %s0, 3
    %s35 = smov 3
    %v36 = vld [vmem:[%s34] ss:$8 sm:%s35]
    %37 = vrot.lane.b32.xlu0 %v36, 48
    %v38 = vpop.permute.xlu0 %37
    %vm39 = vcmask 523648
    %40 = vst.msk [vmem:[#allocation0] ss:$8 sm:$0x3] %vm39, %v38
    %s41 = scalar_lea.vmem %s0, 2
    %s42 = smov 3
    %v43 = vld [vmem:[%s41] ss:$8 sm:%s42]
    %44 = vrot.lane.b32.xlu0 %v43, 32
    %v45 = vpop.permute.xlu0 %44
    %vm46 = vcmask 392448
    %47 = vst.msk [vmem:[#allocation0] ss:$8 sm:$0x3] %vm46, %v45
    %s48 = scalar_lea.vmem %s0, 1
    %s49 = smov 3
    %v50 = vld [vmem:[%s48] ss:$8 sm:%s49]
    %51 = vrot.lane.b32.xlu0 %v50, 16
    %v52 = vpop.permute.xlu0 %51
    %vm53 = vcmask 261248
    %54 = vst.msk [vmem:[#allocation0] ss:$8 sm:$0x3] %vm53, %v52
    %s56 = ssub.s32 2, 1
    %v57 = vld [vmem:[#allocation0] sm:%s56]
    %s59 = ssub.s32 2, 1
    %60 = vst [vmem:[%s1] sm:%s59] %v57
    %s61 = scalar_lea.vmem [#allocation0], 8
    %v62 = vld [vmem:[%s61] sm:%s56]
    %s64 = ssub.s32 2, 1
    %s65 = scalar_lea.vmem %s1, 1
    %66 = vst [vmem:[%s65] sm:%s64] %v62

// kernel: lenet_forward.1
$region0: #{lenet_forward.1}
  #allocation0 [shape = 'u32[]', space=smem, size = 0x4, offset = 0x4, fixed_abs, tag = 'smem constant byte address 0x4 - core index']
  #allocation1 [shape = 'u32[72,128]{1,0:T(1,128)}', space=vmem, size = 0x9000, scoped, tag = 'internal scratch']
  %s0 = inlined_call_operand.vmem [shape: bf16[384,140], index: 0, kind: input, shape index: {}]
  %s1 = inlined_call_operand.vmem [shape: bf16[140,256], index: 1, kind: input, shape index: {}]
  %s2 = inlined_call_operand.vmem [shape: f32[1,128], index: 2, kind: input, shape index: {}]
  %s3 = inlined_call_operand.vmem [shape: bf16[1536,1024], index: 3, kind: input, shape index: {}]
  %s4 = inlined_call_operand.vmem [shape: f32[1,256], index: 4, kind: input, shape index: {}]
  %s5 = inlined_call_operand.vmem [shape: bf16[256,128], index: 5, kind: input, shape index: {}]
  %s6 = inlined_call_operand.vmem [shape: f32[1,128], index: 6, kind: input, shape index: {}]
  %s7 = inlined_call_operand.vmem [shape: bf16[128,128], index: 7, kind: input, shape index: {}]
  %s8 = inlined_call_operand.vmem [shape: f32[1,128], index: 8, kind: input, shape index: {}]
  %s9 = inlined_call_operand.vmem [shape: bf16[128,128], index: 9, kind: input, shape index: {}]
  %s10 = inlined_call_operand.vmem [shape: f32[1,128], index: 10, kind: input, shape index: {}]
  %s11 = inlined_call_operand.vmem [shape: f32[16,128], index: 11, kind: output, shape index: {}]
  %s12 = sld [smem:[#allocation0]]
  $region77: #{lenet_forward.1} parent=0
    _
  %s14 = ssub.s32 1, %s12
  %s15 = scalar_select 0, %s14, %s12
  loop: start=0, step=1, limit=4
  $region2: #{lenet_forward.1} parent=0 // loop_pre_header
    _
  $region3: #{lenet_forward.1} parent=0 // loop_header
    %s17 = sphi 0, %s21
    %p18 = scmp.ge.s32.totalorder %s17, 4
    %s27 = sphi 0, %s29
    %s30 = sphi 0, %s27
    %s31 = sphi 0, %s30
    %s47 = sphi 0, %s31
    %s51 = sphi 0, %s51
    %s53 = sphi 0, %s51
    %s54 = sphi 0, %s53
    %s68 = sphi 0, %s54
    %s72 = sphi 0, %s72
    %s74 = sphi 0, %s72
    %s75 = sphi 0, %s74
    %s89 = sphi 0, %s75
    %s93 = sphi 0, %s93
    %s95 = sphi 0, %s93
    %s96 = sphi 0, %s95
    %s110 = sphi 0, %s96
    %s114 = sphi 0, %s114
    %s116 = sphi 0, %s114
    %s117 = sphi 0, %s116
    %s131 = sphi 0, %s117
    %s135 = sphi 0, %s135
    %s137 = sphi 0, %s135
    %s138 = sphi 0, %s137
    %s152 = sphi 0, %s138
    %s156 = sphi 0, %s156
    %s158 = sphi 0, %s156
    %s159 = sphi 0, %s158
    %s173 = sphi 0, %s159
    %s177 = sphi 0, %s177
    %s179 = sphi 0, %s177
    %s180 = sphi 0, %s179
    %s194 = sphi 0, %s180
    %s198 = sphi 0, %s198
    %s200 = sphi 0, %s198
    %s201 = sphi 0, %s200
    %s215 = sphi 0, %s201
    %s219 = sphi 0, %s219
    %s221 = sphi 0, %s219
    %s222 = sphi 0, %s221
    %s236 = sphi 0, %s222
    %s240 = sphi 0, %s240
    %s242 = sphi 0, %s240
    %s243 = sphi 0, %s242
    %s257 = sphi 0, %s243
    %s263 = sphi 0, %s265
    %s266 = sphi 0, %s263
    %s267 = sphi 0, %s266
    %s283 = sphi 0, %s267
  $region4: #{lenet_forward.1} parent=0 // loop_header_branch
    %20 = sbr.rel (%p18) target = $region8
  $region5: #{lenet_forward.1} parent=0 // loop_body
    %s22 = ssub.s32 %s17, 1
    %s23 = ssub.s32 %s17, 2
    %s24 = sadd.s32 %s17, 1
    %s25 = ssub.s32 %s17, %s24
    %p26 = scmp.eq.s32.totalorder %s25, 0
    %s28 = sadd.s32 %s27, 1
    %s29 = scalar_select %p26, %s27, %s28
    %p32 = pneg %p26
    %p33 = scmp.eq.s32.totalorder %s17, 1
    %p34 = por %p32, %p33
    %p35 = scmp.ne.s32.totalorder %s27, %s30
    %p36 = scmp.eq.s32.totalorder %s17, 0
    %p37 = por %p35, %p36
    %p38 = scmp.ne.s32.totalorder %s27, %s30
    %p39 = scmp.eq.s32.totalorder %s22, 1
    %p40 = por %p38, %p39
    %p41 = scmp.ne.s32.totalorder %s30, %s31
    %p42 = scmp.eq.s32.totalorder %s22, 0
    %p43 = por %p41, %p42
    %p44 = scmp.ne.s32.totalorder %s30, %s31
    %p45 = scmp.eq.s32.totalorder %s23, 1
    %p46 = por %p44, %p45
    %p48 = scmp.ne.s32.totalorder %s31, %s47
    %p49 = scmp.eq.s32.totalorder %s23, 0
    %p50 = por %p48, %p49
    %s52 = sadd.s32 %s51, 1
    %p55 = scmp.eq.s32.totalorder %s17, 1
    %p56 = scmp.ne.s32.totalorder %s51, %s53
    %p57 = scmp.eq.s32.totalorder %s17, 0
    %p58 = por %p56, %p57
    %p59 = scmp.ne.s32.totalorder %s51, %s53
    %p60 = scmp.eq.s32.totalorder %s22, 1
    %p61 = por %p59, %p60
    %p62 = scmp.ne.s32.totalorder %s53, %s54
    %p63 = scmp.eq.s32.totalorder %s22, 0
    %p64 = por %p62, %p63
    %p65 = scmp.ne.s32.totalorder %s53, %s54
    %p66 = scmp.eq.s32.totalorder %s23, 1
    %p67 = por %p65, %p66
    %p69 = scmp.ne.s32.totalorder %s54, %s68
    %p70 = scmp.eq.s32.totalorder %s23, 0
    %p71 = por %p69, %p70
    %s73 = sadd.s32 %s72, 1
    %p76 = scmp.eq.s32.totalorder %s17, 1
    %p77 = scmp.ne.s32.totalorder %s72, %s74
    %p78 = scmp.eq.s32.totalorder %s17, 0
    %p79 = por %p77, %p78
    %p80 = scmp.ne.s32.totalorder %s72, %s74
    %p81 = scmp.eq.s32.totalorder %s22, 1
    %p82 = por %p80, %p81
    %p83 = scmp.ne.s32.totalorder %s74, %s75
    %p84 = scmp.eq.s32.totalorder %s22, 0
    %p85 = por %p83, %p84
    %p86 = scmp.ne.s32.totalorder %s74, %s75
    %p87 = scmp.eq.s32.totalorder %s23, 1
    %p88 = por %p86, %p87
    %p90 = scmp.ne.s32.totalorder %s75, %s89
    %p91 = scmp.eq.s32.totalorder %s23, 0
    %p92 = por %p90, %p91
    %s94 = sadd.s32 %s93, 1
    %p97 = scmp.eq.s32.totalorder %s17, 1
    %p98 = scmp.ne.s32.totalorder %s93, %s95
    %p99 = scmp.eq.s32.totalorder %s17, 0
    %p100 = por %p98, %p99
    %p101 = scmp.ne.s32.totalorder %s93, %s95
    %p102 = scmp.eq.s32.totalorder %s22, 1
    %p103 = por %p101, %p102
    %p104 = scmp.ne.s32.totalorder %s95, %s96
    %p105 = scmp.eq.s32.totalorder %s22, 0
    %p106 = por %p104, %p105
    %p107 = scmp.ne.s32.totalorder %s95, %s96
    %p108 = scmp.eq.s32.totalorder %s23, 1
    %p109 = por %p107, %p108
    %p111 = scmp.ne.s32.totalorder %s96, %s110
    %p112 = scmp.eq.s32.totalorder %s23, 0
    %p113 = por %p111, %p112
    %s115 = sadd.s32 %s114, 1
    %p118 = scmp.eq.s32.totalorder %s17, 1
    %p119 = scmp.ne.s32.totalorder %s114, %s116
    %p120 = scmp.eq.s32.totalorder %s17, 0
    %p121 = por %p119, %p120
    %p122 = scmp.ne.s32.totalorder %s114, %s116
    %p123 = scmp.eq.s32.totalorder %s22, 1
    %p124 = por %p122, %p123
    %p125 = scmp.ne.s32.totalorder %s116, %s117
    %p126 = scmp.eq.s32.totalorder %s22, 0
    %p127 = por %p125, %p126
    %p128 = scmp.ne.s32.totalorder %s116, %s117
    %p129 = scmp.eq.s32.totalorder %s23, 1
    %p130 = por %p128, %p129
    %p132 = scmp.ne.s32.totalorder %s117, %s131
    %p133 = scmp.eq.s32.totalorder %s23, 0
    %p134 = por %p132, %p133
    %s136 = sadd.s32 %s135, 1
    %p139 = scmp.eq.s32.totalorder %s17, 1
    %p140 = scmp.ne.s32.totalorder %s135, %s137
    %p141 = scmp.eq.s32.totalorder %s17, 0
    %p142 = por %p140, %p141
    %p143 = scmp.ne.s32.totalorder %s135, %s137
    %p144 = scmp.eq.s32.totalorder %s22, 1
    %p145 = por %p143, %p144
    %p146 = scmp.ne.s32.totalorder %s137, %s138
    %p147 = scmp.eq.s32.totalorder %s22, 0
    %p148 = por %p146, %p147
    %p149 = scmp.ne.s32.totalorder %s137, %s138
    %p150 = scmp.eq.s32.totalorder %s23, 1
    %p151 = por %p149, %p150
    %p153 = scmp.ne.s32.totalorder %s138, %s152
    %p154 = scmp.eq.s32.totalorder %s23, 0
    %p155 = por %p153, %p154
    %s157 = sadd.s32 %s156, 1
    %p160 = scmp.eq.s32.totalorder %s17, 1
    %p161 = scmp.ne.s32.totalorder %s156, %s158
    %p162 = scmp.eq.s32.totalorder %s17, 0
    %p163 = por %p161, %p162
    %p164 = scmp.ne.s32.totalorder %s156, %s158
    %p165 = scmp.eq.s32.totalorder %s22, 1
    %p166 = por %p164, %p165
    %p167 = scmp.ne.s32.totalorder %s158, %s159
    %p168 = scmp.eq.s32.totalorder %s22, 0
    %p169 = por %p167, %p168
    %p170 = scmp.ne.s32.totalorder %s158, %s159
    %p171 = scmp.eq.s32.totalorder %s23, 1
    %p172 = por %p170, %p171
    %p174 = scmp.ne.s32.totalorder %s159, %s173
    %p175 = scmp.eq.s32.totalorder %s23, 0
    %p176 = por %p174, %p175
    %s178 = sadd.s32 %s177, 1
    %p181 = scmp.eq.s32.totalorder %s17, 1
    %p182 = scmp.ne.s32.totalorder %s177, %s179
    %p183 = scmp.eq.s32.totalorder %s17, 0
    %p184 = por %p182, %p183
    %p185 = scmp.ne.s32.totalorder %s177, %s179
    %p186 = scmp.eq.s32.totalorder %s22, 1
    %p187 = por %p185, %p186
    %p188 = scmp.ne.s32.totalorder %s179, %s180
    %p189 = scmp.eq.s32.totalorder %s22, 0
    %p190 = por %p188, %p189
    %p191 = scmp.ne.s32.totalorder %s179, %s180
    %p192 = scmp.eq.s32.totalorder %s23, 1
    %p193 = por %p191, %p192
    %p195 = scmp.ne.s32.totalorder %s180, %s194
    %p196 = scmp.eq.s32.totalorder %s23, 0
    %p197 = por %p195, %p196
    %s199 = sadd.s32 %s198, 1
    %p202 = scmp.eq.s32.totalorder %s17, 1
    %p203 = scmp.ne.s32.totalorder %s198, %s200
    %p204 = scmp.eq.s32.totalorder %s17, 0
    %p205 = por %p203, %p204
    %p206 = scmp.ne.s32.totalorder %s198, %s200
    %p207 = scmp.eq.s32.totalorder %s22, 1
    %p208 = por %p206, %p207
    %p209 = scmp.ne.s32.totalorder %s200, %s201
    %p210 = scmp.eq.s32.totalorder %s22, 0
    %p211 = por %p209, %p210
    %p212 = scmp.ne.s32.totalorder %s200, %s201
    %p213 = scmp.eq.s32.totalorder %s23, 1
    %p214 = por %p212, %p213
    %p216 = scmp.ne.s32.totalorder %s201, %s215
    %p217 = scmp.eq.s32.totalorder %s23, 0
    %p218 = por %p216, %p217
    %s220 = sadd.s32 %s219, 1
    %p223 = scmp.eq.s32.totalorder %s17, 1
    %p224 = scmp.ne.s32.totalorder %s219, %s221
    %p225 = scmp.eq.s32.totalorder %s17, 0
    %p226 = por %p224, %p225
    %p227 = scmp.ne.s32.totalorder %s219, %s221
    %p228 = scmp.eq.s32.totalorder %s22, 1
    %p229 = por %p227, %p228
    %p230 = scmp.ne.s32.totalorder %s221, %s222
    %p231 = scmp.eq.s32.totalorder %s22, 0
    %p232 = por %p230, %p231
    %p233 = scmp.ne.s32.totalorder %s221, %s222
    %p234 = scmp.eq.s32.totalorder %s23, 1
    %p235 = por %p233, %p234
    %p237 = scmp.ne.s32.totalorder %s222, %s236
    %p238 = scmp.eq.s32.totalorder %s23, 0
    %p239 = por %p237, %p238
    %s241 = sadd.s32 %s240, 1
    %p244 = scmp.eq.s32.totalorder %s17, 1
    %p245 = scmp.ne.s32.totalorder %s240, %s242
    %p246 = scmp.eq.s32.totalorder %s17, 0
    %p247 = por %p245, %p246
    %p248 = scmp.ne.s32.totalorder %s240, %s242
    %p249 = scmp.eq.s32.totalorder %s22, 1
    %p250 = por %p248, %p249
    %p251 = scmp.ne.s32.totalorder %s242, %s243
    %p252 = scmp.eq.s32.totalorder %s22, 0
    %p253 = por %p251, %p252
    %p254 = scmp.ne.s32.totalorder %s242, %s243
    %p255 = scmp.eq.s32.totalorder %s23, 1
    %p256 = por %p254, %p255
    %p258 = scmp.ne.s32.totalorder %s243, %s257
    %p259 = scmp.eq.s32.totalorder %s23, 0
    %p260 = por %p258, %p259
    %s261 = ssub.s32 %s17, %s24
    %p262 = scmp.eq.s32.totalorder %s261, 0
    %s264 = sadd.s32 %s263, 1
    %s265 = scalar_select %p262, %s263, %s264
    %p268 = pneg %p262
    %p269 = scmp.eq.s32.totalorder %s17, 1
    %p270 = por %p268, %p269
    %p271 = scmp.ne.s32.totalorder %s263, %s266
    %p272 = scmp.eq.s32.totalorder %s17, 0
    %p273 = por %p271, %p272
    %p274 = scmp.ne.s32.totalorder %s263, %s266
    %p275 = scmp.eq.s32.totalorder %s22, 1
    %p276 = por %p274, %p275
    %p277 = scmp.ne.s32.totalorder %s266, %s267
    %p278 = scmp.eq.s32.totalorder %s22, 0
    %p279 = por %p277, %p278
    %p280 = scmp.ne.s32.totalorder %s266, %s267
    %p281 = scmp.eq.s32.totalorder %s23, 1
    %p282 = por %p280, %p281
    %p284 = scmp.ne.s32.totalorder %s267, %s283
    %p285 = scmp.eq.s32.totalorder %s23, 0
    %p286 = por %p284, %p285
    %p287 = scmp.le.s32.totalorder 1, %s17
    %p288 = scmp.lt.s32.totalorder %s17, 3
    %p289 = pnand %p287, %p288
    %p290 = pneg %p289
    // Predicated region
    $region9: #{lenet_forward.1} parent=5 // pred_check
      _
    $region10: #{lenet_forward.1} parent=5 // pred_check_branch
      %292 = sbr.rel (%p289) target = $region12
    $region11: #{lenet_forward.1} parent=5 // pred_region
      %s293 = ssub.s32 %s17, 1
      // Predicated region
      $region13: #{lenet_forward.1} parent=11 // pred_check
        %p294 = pneg %p64
      $region14: #{lenet_forward.1} parent=11 // pred_check_branch
        %296 = sbr.rel (%p294) target = $region16
      $region15: #{lenet_forward.1} parent=11 // pred_region
        _
      $region16: #{lenet_forward.1} parent=11 // pred_fallthru
        _
      // Predicated region
      $region17: #{lenet_forward.1} parent=11 // pred_check
        %p297 = pneg %p85
      $region18: #{lenet_forward.1} parent=11 // pred_check_branch
        %299 = sbr.rel (%p297) target = $region20
      $region19: #{lenet_forward.1} parent=11 // pred_region
        _
      $region20: #{lenet_forward.1} parent=11 // pred_fallthru
        _
      // Predicated region
      $region21: #{lenet_forward.1} parent=11 // pred_check
        %p300 = pneg %p106
      $region22: #{lenet_forward.1} parent=11 // pred_check_branch
        %302 = sbr.rel (%p300) target = $region24
      $region23: #{lenet_forward.1} parent=11 // pred_region
        _
      $region24: #{lenet_forward.1} parent=11 // pred_fallthru
        _
      // Predicated region
      $region25: #{lenet_forward.1} parent=11 // pred_check
        %p303 = pneg %p127
      $region26: #{lenet_forward.1} parent=11 // pred_check_branch
        %305 = sbr.rel (%p303) target = $region28
      $region27: #{lenet_forward.1} parent=11 // pred_region
        _
      $region28: #{lenet_forward.1} parent=11 // pred_fallthru
        _
      // Predicated region
      $region29: #{lenet_forward.1} parent=11 // pred_check
        %p306 = pneg %p148
      $region30: #{lenet_forward.1} parent=11 // pred_check_branch
        %308 = sbr.rel (%p306) target = $region32
      $region31: #{lenet_forward.1} parent=11 // pred_region
        _
      $region32: #{lenet_forward.1} parent=11 // pred_fallthru
        _
      // Predicated region
      $region33: #{lenet_forward.1} parent=11 // pred_check
        %p309 = pneg %p169
      $region34: #{lenet_forward.1} parent=11 // pred_check_branch
        %311 = sbr.rel (%p309) target = $region36
      $region35: #{lenet_forward.1} parent=11 // pred_region
        _
      $region36: #{lenet_forward.1} parent=11 // pred_fallthru
        _
      // Predicated region
      $region37: #{lenet_forward.1} parent=11 // pred_check
        %p312 = pneg %p190
      $region38: #{lenet_forward.1} parent=11 // pred_check_branch
        %314 = sbr.rel (%p312) target = $region40
      $region39: #{lenet_forward.1} parent=11 // pred_region
        _
      $region40: #{lenet_forward.1} parent=11 // pred_fallthru
        _
      // Predicated region
      $region41: #{lenet_forward.1} parent=11 // pred_check
        %p315 = pneg %p211
      $region42: #{lenet_forward.1} parent=11 // pred_check_branch
        %317 = sbr.rel (%p315) target = $region44
      $region43: #{lenet_forward.1} parent=11 // pred_region
        _
      $region44: #{lenet_forward.1} parent=11 // pred_fallthru
        _
      // Predicated region
      $region45: #{lenet_forward.1} parent=11 // pred_check
        %p318 = pneg %p232
      $region46: #{lenet_forward.1} parent=11 // pred_check_branch
        %320 = sbr.rel (%p318) target = $region48
      $region47: #{lenet_forward.1} parent=11 // pred_region
        _
      $region48: #{lenet_forward.1} parent=11 // pred_fallthru
        _
      // Predicated region
      $region49: #{lenet_forward.1} parent=11 // pred_check
        %p321 = pneg %p253
      $region50: #{lenet_forward.1} parent=11 // pred_check_branch
        %323 = sbr.rel (%p321) target = $region52
      $region51: #{lenet_forward.1} parent=11 // pred_region
        _
      $region52: #{lenet_forward.1} parent=11 // pred_fallthru
        _
    $region12: #{lenet_forward.1} parent=5 // pred_fallthru
      _
    %p324 = scmp.lt.s32.totalorder %s17, 2
    // Predicated region
    $region53: #{lenet_forward.1} parent=5 // pred_check
      %p325 = pneg %p324
    $region54: #{lenet_forward.1} parent=5 // pred_check_branch
      %327 = sbr.rel (%p325) target = $region56
    $region55: #{lenet_forward.1} parent=5 // pred_region
      // Predicated region
      $region57: #{lenet_forward.1} parent=55 // pred_check
        %p328 = pneg %p37
      $region58: #{lenet_forward.1} parent=55 // pred_check_branch
        %330 = sbr.rel (%p328) target = $region60
      $region59: #{lenet_forward.1} parent=55 // pred_region
        %s331 = smul.u32 24, %s17
        %p332 = scmp.lt.s32.totalorder %s331, 47
        %s333 = scalar_select %p332, %s331, 47
        %s334 = smul.addr %s333, 2
        %s335 = smul.addr %s334, 4
        %s336 = scalar_lea.vmem %s0, %s335
        %s337 = smul.u32 24, %s17
      $region60: #{lenet_forward.1} parent=55 // pred_fallthru
        _
    $region56: #{lenet_forward.1} parent=5 // pred_fallthru
      _
    %p338 = scmp.le.s32.totalorder 1, %s17
    %p339 = scmp.lt.s32.totalorder %s17, 3
    %p340 = pnand %p338, %p339
    %p341 = pneg %p340
    // Predicated region
    $region61: #{lenet_forward.1} parent=5 // pred_check
      _
    $region62: #{lenet_forward.1} parent=5 // pred_check_branch
      %343 = sbr.rel (%p340) target = $region64
    $region63: #{lenet_forward.1} parent=5 // pred_region
      %s344 = ssub.s32 %s17, 1
      %s345 = smul.u32 24, %s22
      %p346 = scmp.lt.s32.totalorder %s345, 47
      %s347 = scalar_select %p346, %s345, 47
      %s348 = smul.addr %s347, 2
      %s349 = smul.addr %s348, 4
      %s350 = scalar_lea.vmem %s0, %s349
      %p351 = pneg %p43
      %p352 = pneg %p40
      %p353 = pneg %p64
      %p354 = pneg %p61
      %p355 = pneg %p85
      %p356 = pneg %p82
      %p357 = pneg %p106
      %p358 = pneg %p103
      %p359 = pneg %p127
      %p360 = pneg %p124
      %p361 = pneg %p148
      %p362 = pneg %p145
      %p363 = pneg %p169
      %p364 = pneg %p166
      %p365 = pneg %p190
      %p366 = pneg %p187
      %p367 = pneg %p211
      %p368 = pneg %p208
      %p369 = pneg %p232
      %p370 = pneg %p229
      %p371 = pneg %p253
      %p372 = pneg %p250
      %p373 = pneg %p279
      %p374 = pneg %p276
      %p375 = scmp.lt.s32.totalorder %s22, 1
      %s376 = scalar_select %p375, %s22, 1
      %s377 = smul.addr %s376, 8
      %s378 = scalar_lea.vmem %s11, %s377
      %s379 = smul.u32 24, %s22
      %p380 = scmp.lt.s32.totalorder %s379, 47
      %s381 = scalar_select %p380, %s379, 47
      %s382 = smul.addr %s381, 2
      %s383 = smul.addr %s382, 4
      %s384 = scalar_lea.vmem %s0, %s383
      %s385 = smul.u32 24, %s22
      %p386 = scmp.lt.s32.totalorder %s22, 1
      %s387 = scalar_select %p386, %s22, 1
      %s388 = smul.addr %s387, 8
      %s389 = scalar_lea.vmem %s11, %s388
      %v391 = vld [vmem:[%s384] sm:$0xff]
      %v392 = vld [vmem:[%s384 + $0x8] sm:$0xff]
      %v393 = vld [vmem:[%s384 + $0x10] sm:$0xff]
      %v394 = vld [vmem:[%s384 + $0x18] sm:$0xff]
      %v395 = vld [vmem:[%s384 + $0x20] sm:$0xff]
      %v396 = vld [vmem:[%s384 + $0x28] sm:$0xff]
      %v397 = vld [vmem:[%s384 + $0x30] sm:$0xff]
      %v398 = vld [vmem:[%s384 + $0x38] sm:$0xff]
      %v399 = vld [vmem:[%s384 + $0x40] sm:$0xff]
      %v400 = vld [vmem:[%s384 + $0x48] sm:$0xff]
      %v401 = vld [vmem:[%s384 + $0x50] sm:$0xff]
      %v402 = vld [vmem:[%s384 + $0x58] sm:$0xff]
      %v403 = vld [vmem:[%s384 + $0x60] sm:$0xff]
      %v404 = vld [vmem:[%s384 + $0x68] sm:$0xff]
      %v405 = vld [vmem:[%s384 + $0x70] sm:$0xff]
      %v406 = vld [vmem:[%s384 + $0x78] sm:$0xff]
      %v407 = vld [vmem:[%s384 + $0x80] sm:$0xff]
      %v408 = vld [vmem:[%s384 + $0x88] sm:$0xff]
      %v409 = vld [vmem:[%s384 + $0x90] sm:$0xff]
      %v410 = vld [vmem:[%s384 + $0x98] sm:$0xff]
      %v411 = vld [vmem:[%s384 + $0xa0] sm:$0xff]
      %v412 = vld [vmem:[%s384 + $0xa8] sm:$0xff]
      %v413 = vld [vmem:[%s384 + $0xb0] sm:$0xff]
      %v414 = vld [vmem:[%s384 + $0xb8] sm:$0xff]
      %v415 = vld [vmem:[%s1] sm:$0xff]
      %v416 = vld [vmem:[%s1 + $0x8] sm:$0xff]
      %v417 = vld [vmem:[%s1 + $0x10] sm:$0xff]
      %v418 = vld [vmem:[%s1 + $0x18] sm:$0xff]
      %v419 = vld [vmem:[%s1 + $0x20] sm:$0xff]
      %v420 = vld [vmem:[%s1 + $0x28] sm:$0xff]
      %v421 = vld [vmem:[%s1 + $0x30] sm:$0xff]
      %v422 = vld [vmem:[%s1 + $0x38] sm:$0xff]
      %v423 = vld [vmem:[%s1 + $0x40] sm:$0xff]
      %v424 = vld [vmem:[%s1 + $0x48] sm:$0xff]
      %v425 = vld [vmem:[%s1 + $0x50] sm:$0xff]
      %v426 = vld [vmem:[%s1 + $0x58] sm:$0xff]
      %v427 = vld [vmem:[%s1 + $0x60] sm:$0xff]
      %v428 = vld [vmem:[%s1 + $0x68] sm:$0xff]
      %v429 = vld [vmem:[%s1 + $0x70] sm:$0xff]
      %v430 = vld [vmem:[%s1 + $0x78] sm:$0xff]
      %v431 = vld [vmem:[%s1 + $0x80] sm:$0xff]
      %v432 = vld [vmem:[%s1 + $0x88] sm:$0x33]
      %v457 = vunpack.c.l.b16 %v391
      %v458 = vunpack.c.h.b16 %v391
      %v459 = vunpack.c.l.b16 %v392
      %v460 = vunpack.c.h.b16 %v392
      %v461 = vunpack.c.l.b16 %v393
      %v462 = vunpack.c.h.b16 %v393
      %v463 = vunpack.c.l.b16 %v394
      %v464 = vunpack.c.h.b16 %v394
      %v465 = vunpack.c.l.b16 %v395
      %v466 = vunpack.c.h.b16 %v395
      %v467 = vunpack.c.l.b16 %v396
      %v468 = vunpack.c.h.b16 %v396
      %v469 = vunpack.c.l.b16 %v397
      %v470 = vunpack.c.h.b16 %v397
      %v471 = vunpack.c.l.b16 %v398
      %v472 = vunpack.c.h.b16 %v398
      %v473 = vunpack.c.l.b16 %v399
      %v474 = vunpack.c.h.b16 %v399
      %v475 = vunpack.c.l.b16 %v400
      %v476 = vunpack.c.h.b16 %v400
      %v477 = vunpack.c.l.b16 %v401
      %v478 = vunpack.c.h.b16 %v401
      %v479 = vunpack.c.l.b16 %v402
      %v480 = vunpack.c.h.b16 %v402
      %v481 = vunpack.c.l.b16 %v403
      %v482 = vunpack.c.h.b16 %v403
      %v483 = vunpack.c.l.b16 %v404
      %v484 = vunpack.c.h.b16 %v404
      %v485 = vunpack.c.l.b16 %v405
      %v486 = vunpack.c.h.b16 %v405
      %v487 = vunpack.c.l.b16 %v406
      %v488 = vunpack.c.h.b16 %v406
      %v489 = vunpack.c.l.b16 %v407
      %v490 = vunpack.c.h.b16 %v407
      %v491 = vunpack.c.l.b16 %v408
      %v492 = vunpack.c.h.b16 %v408
      %v493 = vunpack.c.l.b16 %v409
      %v494 = vunpack.c.h.b16 %v409
      %v495 = vunpack.c.l.b16 %v410
      %v496 = vunpack.c.h.b16 %v410
      %v497 = vunpack.c.l.b16 %v411
      %v498 = vunpack.c.h.b16 %v411
      %v499 = vunpack.c.l.b16 %v412
      %v500 = vunpack.c.h.b16 %v412
      %v501 = vunpack.c.l.b16 %v413
      %v502 = vunpack.c.h.b16 %v413
      %v503 = vunpack.c.l.b16 %v414
      %v504 = vunpack.c.h.b16 %v414
      %v505 = vpack.c.b16 %v459, %v457
      %v506 = vpack.c.b16 %v460, %v458
      %v507 = vpack.c.b16 %v463, %v461
      %v508 = vpack.c.b16 %v464, %v462
      %v509 = vpack.c.b16 %v467, %v465
      %v510 = vpack.c.b16 %v468, %v466
      %v511 = vpack.c.b16 %v471, %v469
      %v512 = vpack.c.b16 %v472, %v470
      %v513 = vpack.c.b16 %v475, %v473
      %v514 = vpack.c.b16 %v476, %v474
      %v515 = vpack.c.b16 %v479, %v477
      %v516 = vpack.c.b16 %v480, %v478
      %v517 = vpack.c.b16 %v483, %v481
      %v518 = vpack.c.b16 %v484, %v482
      %v519 = vpack.c.b16 %v487, %v485
      %v520 = vpack.c.b16 %v488, %v486
      %v521 = vpack.c.b16 %v491, %v489
      %v522 = vpack.c.b16 %v492, %v490
      %v523 = vpack.c.b16 %v495, %v493
      %v524 = vpack.c.b16 %v496, %v494
      %v525 = vpack.c.b16 %v499, %v497
      %v526 = vpack.c.b16 %v500, %v498
      %v527 = vpack.c.b16 %v503, %v501
      %v528 = vpack.c.b16 %v504, %v502
      %v559 = vunpack.c.l.b16 %v415
      %v560 = vunpack.c.h.b16 %v415
      %v561 = vunpack.c.l.b16 %v416
      %v562 = vunpack.c.h.b16 %v416
      %v563 = vunpack.c.l.b16 %v417
      %v564 = vunpack.c.h.b16 %v417
      %v565 = vunpack.c.l.b16 %v418
      %v566 = vunpack.c.h.b16 %v418
      %v567 = vunpack.c.l.b16 %v419
      %v568 = vunpack.c.h.b16 %v419
      %v569 = vunpack.c.l.b16 %v420
      %v570 = vunpack.c.h.b16 %v420
      %v571 = vunpack.c.l.b16 %v421
      %v572 = vunpack.c.h.b16 %v421
      %v573 = vunpack.c.l.b16 %v422
      %v574 = vunpack.c.h.b16 %v422
      %v575 = vunpack.c.l.b16 %v423
      %v576 = vunpack.c.h.b16 %v423
      %v577 = vunpack.c.l.b16 %v424
      %v578 = vunpack.c.h.b16 %v424
      %v579 = vunpack.c.l.b16 %v425
      %v580 = vunpack.c.h.b16 %v425
      %v581 = vunpack.c.l.b16 %v426
      %v582 = vunpack.c.h.b16 %v426
      %v583 = vunpack.c.l.b16 %v427
      %v584 = vunpack.c.h.b16 %v427
      %v585 = vunpack.c.l.b16 %v428
      %v586 = vunpack.c.h.b16 %v428
      %v587 = vunpack.c.l.b16 %v429
      %v588 = vunpack.c.h.b16 %v429
      %v589 = vunpack.c.l.b16 %v430
      %v590 = vunpack.c.h.b16 %v430
      %v591 = vunpack.c.l.b16 %v431
      %v592 = vunpack.c.h.b16 %v431
      %v593 = vunpack.c.l.b16 %v432
      %v594 = vunpack.c.h.b16 %v432
      %v595 = vpack.c.b16 %v561, %v559
      %v596 = vpack.c.b16 %v562, %v560
      %v597 = vpack.c.b16 %v565, %v563
      %v598 = vpack.c.b16 %v566, %v564
      %v599 = vpack.c.b16 %v569, %v567
      %v600 = vpack.c.b16 %v570, %v568
      %v601 = vpack.c.b16 %v573, %v571
      %v602 = vpack.c.b16 %v574, %v572
      %v603 = vpack.c.b16 %v577, %v575
      %v604 = vpack.c.b16 %v578, %v576
      %v605 = vpack.c.b16 %v581, %v579
      %v606 = vpack.c.b16 %v582, %v580
      %v607 = vpack.c.b16 %v585, %v583
      %v608 = vpack.c.b16 %v586, %v584
      %v609 = vpack.c.b16 %v589, %v587
      %v610 = vpack.c.b16 %v590, %v588
      %v611 = vpack.c.b16 %v593, %v591
      %v612 = vpack.c.b16 %v594, %v592
      %vm629 = vcmask 97280
      %v631 = vsel %vm629, %v506, 0
      %v634 = vsel %vm629, %v508, 0
      %v637 = vsel %vm629, %v510, 0
      %v640 = vsel %vm629, %v512, 0
      %v643 = vsel %vm629, %v514, 0
      %v646 = vsel %vm629, %v516, 0
      %v649 = vsel %vm629, %v518, 0
      %v652 = vsel %vm629, %v520, 0
      %v655 = vsel %vm629, %v522, 0
      %v658 = vsel %vm629, %v524, 0
      %v661 = vsel %vm629, %v526, 0
      %v664 = vsel %vm629, %v528, 0
      %vm666 = vcmask 1045504
      %v668 = vsel %vm666, %v611, 0
      %v671 = vsel %vm666, %v612, 0
      %673 = vmatpush.bf16.msra.mxu0 %v609
      %674 = vmatpush.bf16.msra.mxu0 %v607
      %675 = vmatpush.bf16.msra.mxu0 %v605
      %676 = vmatpush.bf16.msra.mxu0 %v603
      %677 = vmatpush.bf16.msra.mxu0 %v601
      %678 = vmatpush.bf16.msra.mxu0 %v599
      %679 = vmatpush.bf16.msra.mxu0 %v597
      %680 = vmatpush.bf16.msra.mxu0 %v595
      %681 = vmatmul.bf16.gmra.mxu0 %v505
      %v682 = vpop.f32.mrf.mxu0
      %v683 = vadd.f32 0.0, %v682
      %v684 = vpop.f32.mrf.mxu0
      %v685 = vadd.f32 0.0, %v684
      %686 = vmatmul.bf16.gmra.mxu0 %v507
      %v687 = vpop.f32.mrf.mxu0
      %v688 = vadd.f32 0.0, %v687
      %v689 = vpop.f32.mrf.mxu0
      %v690 = vadd.f32 0.0, %v689
      %691 = vmatmul.bf16.gmra.mxu0 %v509
      %v692 = vpop.f32.mrf.mxu0
      %v693 = vadd.f32 0.0, %v692
      %v694 = vpop.f32.mrf.mxu0
      %v695 = vadd.f32 0.0, %v694
      %696 = vmatmul.bf16.gmra.mxu0 %v511
      %v697 = vpop.f32.mrf.mxu0
      %v698 = vadd.f32 0.0, %v697
      %v699 = vpop.f32.mrf.mxu0
      %v700 = vadd.f32 0.0, %v699
      %701 = vmatmul.bf16.gmra.mxu0 %v513
      %v702 = vpop.f32.mrf.mxu0
      %v703 = vadd.f32 0.0, %v702
      %v704 = vpop.f32.mrf.mxu0
      %v705 = vadd.f32 0.0, %v704
      %706 = vmatmul.bf16.gmra.mxu0 %v515
      %v707 = vpop.f32.mrf.mxu0
      %v708 = vadd.f32 0.0, %v707
      %v709 = vpop.f32.mrf.mxu0
      %v710 = vadd.f32 0.0, %v709
      %711 = vmatmul.bf16.gmra.mxu0 %v517
      %v712 = vpop.f32.mrf.mxu0
      %v713 = vadd.f32 0.0, %v712
      %v714 = vpop.f32.mrf.mxu0
      %v715 = vadd.f32 0.0, %v714
      %716 = vmatmul.bf16.gmra.mxu0 %v519
      %v717 = vpop.f32.mrf.mxu0
      %v718 = vadd.f32 0.0, %v717
      %v719 = vpop.f32.mrf.mxu0
      %v720 = vadd.f32 0.0, %v719
      %721 = vmatmul.bf16.gmra.mxu0 %v521
      %v722 = vpop.f32.mrf.mxu0
      %v723 = vadd.f32 0.0, %v722
      %v724 = vpop.f32.mrf.mxu0
      %v725 = vadd.f32 0.0, %v724
      %726 = vmatmul.bf16.gmra.mxu0 %v523
      %v727 = vpop.f32.mrf.mxu0
      %v728 = vadd.f32 0.0, %v727
      %v729 = vpop.f32.mrf.mxu0
      %v730 = vadd.f32 0.0, %v729
      %731 = vmatmul.bf16.gmra.mxu0 %v525
      %v732 = vpop.f32.mrf.mxu0
      %v733 = vadd.f32 0.0, %v732
      %v734 = vpop.f32.mrf.mxu0
      %v735 = vadd.f32 0.0, %v734
      %736 = vmatmul.bf16.gmra.mxu0 %v527
      %v737 = vpop.f32.mrf.mxu0
      %v738 = vadd.f32 0.0, %v737
      %v739 = vpop.f32.mrf.mxu0
      %v740 = vadd.f32 0.0, %v739
      %741 = vdwg.mxu0
      %742 = vmatpush.bf16.msra.mxu0 0
      %743 = vmatpush.bf16.msra.mxu0 0
      %744 = vmatpush.bf16.msra.mxu0 0
      %745 = vmatpush.bf16.msra.mxu0 0
      %746 = vmatpush.bf16.msra.mxu0 0
      %747 = vmatpush.bf16.msra.mxu0 0
      %748 = vmatpush.bf16.msra.mxu0 0
      %749 = vmatpush.bf16.msra.mxu0 %v668
      %750 = vmatmul.bf16.gmra.mxu0 %v631
      %v751 = vpop.f32.mrf.mxu0
      %v752 = vadd.f32 %v683, %v751
      %v753 = vpop.f32.mrf.mxu0
      %v754 = vadd.f32 %v685, %v753
      %755 = vmatmul.bf16.gmra.mxu0 %v634
      %v756 = vpop.f32.mrf.mxu0
      %v757 = vadd.f32 %v688, %v756
      %v758 = vpop.f32.mrf.mxu0
      %v759 = vadd.f32 %v690, %v758
      %760 = vmatmul.bf16.gmra.mxu0 %v637
      %v761 = vpop.f32.mrf.mxu0
      %v762 = vadd.f32 %v693, %v761
      %v763 = vpop.f32.mrf.mxu0
      %v764 = vadd.f32 %v695, %v763
      %765 = vmatmul.bf16.gmra.mxu0 %v640
      %v766 = vpop.f32.mrf.mxu0
      %v767 = vadd.f32 %v698, %v766
      %v768 = vpop.f32.mrf.mxu0
      %v769 = vadd.f32 %v700, %v768
      %770 = vmatmul.bf16.gmra.mxu0 %v643
      %v771 = vpop.f32.mrf.mxu0
      %v772 = vadd.f32 %v703, %v771
      %v773 = vpop.f32.mrf.mxu0
      %v774 = vadd.f32 %v705, %v773
      %775 = vmatmul.bf16.gmra.mxu0 %v646
      %v776 = vpop.f32.mrf.mxu0
      %v777 = vadd.f32 %v708, %v776
      %v778 = vpop.f32.mrf.mxu0
      %v779 = vadd.f32 %v710, %v778
      %780 = vmatmul.bf16.gmra.mxu0 %v649
      %v781 = vpop.f32.mrf.mxu0
      %v782 = vadd.f32 %v713, %v781
      %v783 = vpop.f32.mrf.mxu0
      %v784 = vadd.f32 %v715, %v783
      %785 = vmatmul.bf16.gmra.mxu0 %v652
      %v786 = vpop.f32.mrf.mxu0
      %v787 = vadd.f32 %v718, %v786
      %v788 = vpop.f32.mrf.mxu0
      %v789 = vadd.f32 %v720, %v788
      %790 = vmatmul.bf16.gmra.mxu0 %v655
      %v791 = vpop.f32.mrf.mxu0
      %v792 = vadd.f32 %v723, %v791
      %v793 = vpop.f32.mrf.mxu0
      %v794 = vadd.f32 %v725, %v793
      %795 = vmatmul.bf16.gmra.mxu0 %v658
      %v796 = vpop.f32.mrf.mxu0
      %v797 = vadd.f32 %v728, %v796
      %v798 = vpop.f32.mrf.mxu0
      %v799 = vadd.f32 %v730, %v798
      %800 = vmatmul.bf16.gmra.mxu0 %v661
      %v801 = vpop.f32.mrf.mxu0
      %v802 = vadd.f32 %v733, %v801
      %v803 = vpop.f32.mrf.mxu0
      %v804 = vadd.f32 %v735, %v803
      %805 = vmatmul.bf16.gmra.mxu0 %v664
      %v806 = vpop.f32.mrf.mxu0
      %v807 = vadd.f32 %v738, %v806
      %v808 = vpop.f32.mrf.mxu0
      %v809 = vadd.f32 %v740, %v808
      %810 = vdwg.mxu0
      %811 = vmatpush.bf16.msra.mxu0 %v610
      %812 = vmatpush.bf16.msra.mxu0 %v608
      %813 = vmatpush.bf16.msra.mxu0 %v606
      %814 = vmatpush.bf16.msra.mxu0 %v604
      %815 = vmatpush.bf16.msra.mxu0 %v602
      %816 = vmatpush.bf16.msra.mxu0 %v600
      %817 = vmatpush.bf16.msra.mxu0 %v598
      %818 = vmatpush.bf16.msra.mxu0 %v596
      %819 = vmatmul.bf16.gmra.mxu0 %v505
      %v820 = vpop.f32.mrf.mxu0
      %v821 = vadd.f32 0.0, %v820
      %v822 = vpop.f32.mrf.mxu0
      %v823 = vadd.f32 0.0, %v822
      %824 = vmatmul.bf16.gmra.mxu0 %v507
      %v825 = vpop.f32.mrf.mxu0
      %v826 = vadd.f32 0.0, %v825
      %v827 = vpop.f32.mrf.mxu0
      %v828 = vadd.f32 0.0, %v827
      %829 = vmatmul.bf16.gmra.mxu0 %v509
      %v830 = vpop.f32.mrf.mxu0
      %v831 = vadd.f32 0.0, %v830
      %v832 = vpop.f32.mrf.mxu0
      %v833 = vadd.f32 0.0, %v832
      %834 = vmatmul.bf16.gmra.mxu0 %v511
      %v835 = vpop.f32.mrf.mxu0
      %v836 = vadd.f32 0.0, %v835
      %v837 = vpop.f32.mrf.mxu0
      %v838 = vadd.f32 0.0, %v837
      %839 = vmatmul.bf16.gmra.mxu0 %v513
      %v840 = vpop.f32.mrf.mxu0
      %v841 = vadd.f32 0.0, %v840
      %v842 = vpop.f32.mrf.mxu0
      %v843 = vadd.f32 0.0, %v842
      %844 = vmatmul.bf16.gmra.mxu0 %v515
      %v845 = vpop.f32.mrf.mxu0
      %v846 = vadd.f32 0.0, %v845
      %v847 = vpop.f32.mrf.mxu0
      %v848 = vadd.f32 0.0, %v847
      %849 = vmatmul.bf16.gmra.mxu0 %v517
      %v850 = vpop.f32.mrf.mxu0
      %v851 = vadd.f32 0.0, %v850
      %v852 = vpop.f32.mrf.mxu0
      %v853 = vadd.f32 0.0, %v852
      %854 = vmatmul.bf16.gmra.mxu0 %v519
      %v855 = vpop.f32.mrf.mxu0
      %v856 = vadd.f32 0.0, %v855
      %v857 = vpop.f32.mrf.mxu0
      %v858 = vadd.f32 0.0, %v857
      %859 = vmatmul.bf16.gmra.mxu0 %v521
      %v860 = vpop.f32.mrf.mxu0
      %v861 = vadd.f32 0.0, %v860
      %v862 = vpop.f32.mrf.mxu0
      %v863 = vadd.f32 0.0, %v862
      %864 = vmatmul.bf16.gmra.mxu0 %v523
      %v865 = vpop.f32.mrf.mxu0
      %v866 = vadd.f32 0.0, %v865
      %v867 = vpop.f32.mrf.mxu0
      %v868 = vadd.f32 0.0, %v867
      %869 = vmatmul.bf16.gmra.mxu0 %v525
      %v870 = vpop.f32.mrf.mxu0
      %v871 = vadd.f32 0.0, %v870
      %v872 = vpop.f32.mrf.mxu0
      %v873 = vadd.f32 0.0, %v872
      %874 = vmatmul.bf16.gmra.mxu0 %v527
      %v875 = vpop.f32.mrf.mxu0
      %v876 = vadd.f32 0.0, %v875
      %v877 = vpop.f32.mrf.mxu0
      %v878 = vadd.f32 0.0, %v877
      %879 = vdwg.mxu0
      %880 = vmatpush.bf16.msra.mxu0 0
      %881 = vmatpush.bf16.msra.mxu0 0
      %882 = vmatpush.bf16.msra.mxu0 0
      %883 = vmatpush.bf16.msra.mxu0 0
      %884 = vmatpush.bf16.msra.mxu0 0
      %885 = vmatpush.bf16.msra.mxu0 0
      %886 = vmatpush.bf16.msra.mxu0 0
      %887 = vmatpush.bf16.msra.mxu0 %v671
      %888 = vmatmul.bf16.gmra.mxu0 %v631
      %v889 = vpop.f32.mrf.mxu0
      %v890 = vadd.f32 %v821, %v889
      %v891 = vpop.f32.mrf.mxu0
      %v892 = vadd.f32 %v823, %v891
      %893 = vmatmul.bf16.gmra.mxu0 %v634
      %v894 = vpop.f32.mrf.mxu0
      %v895 = vadd.f32 %v826, %v894
      %v896 = vpop.f32.mrf.mxu0
      %v897 = vadd.f32 %v828, %v896
      %898 = vmatmul.bf16.gmra.mxu0 %v637
      %v899 = vpop.f32.mrf.mxu0
      %v900 = vadd.f32 %v831, %v899
      %v901 = vpop.f32.mrf.mxu0
      %v902 = vadd.f32 %v833, %v901
      %903 = vmatmul.bf16.gmra.mxu0 %v640
      %v904 = vpop.f32.mrf.mxu0
      %v905 = vadd.f32 %v836, %v904
      %v906 = vpop.f32.mrf.mxu0
      %v907 = vadd.f32 %v838, %v906
      %908 = vmatmul.bf16.gmra.mxu0 %v643
      %v909 = vpop.f32.mrf.mxu0
      %v910 = vadd.f32 %v841, %v909
      %v911 = vpop.f32.mrf.mxu0
      %v912 = vadd.f32 %v843, %v911
      %913 = vmatmul.bf16.gmra.mxu0 %v646
      %v914 = vpop.f32.mrf.mxu0
      %v915 = vadd.f32 %v846, %v914
      %v916 = vpop.f32.mrf.mxu0
      %v917 = vadd.f32 %v848, %v916
      %918 = vmatmul.bf16.gmra.mxu0 %v649
      %v919 = vpop.f32.mrf.mxu0
      %v920 = vadd.f32 %v851, %v919
      %v921 = vpop.f32.mrf.mxu0
      %v922 = vadd.f32 %v853, %v921
      %923 = vmatmul.bf16.gmra.mxu0 %v652
      %v924 = vpop.f32.mrf.mxu0
      %v925 = vadd.f32 %v856, %v924
      %v926 = vpop.f32.mrf.mxu0
      %v927 = vadd.f32 %v858, %v926
      %928 = vmatmul.bf16.gmra.mxu0 %v655
      %v929 = vpop.f32.mrf.mxu0
      %v930 = vadd.f32 %v861, %v929
      %v931 = vpop.f32.mrf.mxu0
      %v932 = vadd.f32 %v863, %v931
      %933 = vmatmul.bf16.gmra.mxu0 %v658
      %v934 = vpop.f32.mrf.mxu0
      %v935 = vadd.f32 %v866, %v934
      %v936 = vpop.f32.mrf.mxu0
      %v937 = vadd.f32 %v868, %v936
      %938 = vmatmul.bf16.gmra.mxu0 %v661
      %v939 = vpop.f32.mrf.mxu0
      %v940 = vadd.f32 %v871, %v939
      %v941 = vpop.f32.mrf.mxu0
      %v942 = vadd.f32 %v873, %v941
      %943 = vmatmul.bf16.gmra.mxu0 %v664
      %v944 = vpop.f32.mrf.mxu0
      %v945 = vadd.f32 %v876, %v944
      %v946 = vpop.f32.mrf.mxu0
      %v947 = vadd.f32 %v878, %v946
      %948 = vdwg.mxu0
      %v949 = vmax.f32 %v752, %v754
      %v950 = vmax.f32 %v890, %v892
      %v951 = vmax.f32 %v757, %v759
      %v952 = vmax.f32 %v895, %v897
      %v953 = vmax.f32 %v762, %v764
      %v954 = vmax.f32 %v900, %v902
      %v955 = vmax.f32 %v767, %v769
      %v956 = vmax.f32 %v905, %v907
      %v957 = vmax.f32 %v772, %v774
      %v958 = vmax.f32 %v910, %v912
      %v959 = vmax.f32 %v777, %v779
      %v960 = vmax.f32 %v915, %v917
      %v961 = vmax.f32 %v782, %v784
      %v962 = vmax.f32 %v920, %v922
      %v963 = vmax.f32 %v787, %v789
      %v964 = vmax.f32 %v925, %v927
      %v965 = vmax.f32 %v792, %v794
      %v966 = vmax.f32 %v930, %v932
      %v967 = vmax.f32 %v797, %v799
      %v968 = vmax.f32 %v935, %v937
      %v969 = vmax.f32 %v802, %v804
      %v970 = vmax.f32 %v940, %v942
      %v971 = vmax.f32 %v807, %v809
      %v972 = vmax.f32 %v945, %v947
      %v973 = vmax.f32 %v949, %v950
      %v974 = vmax.f32 %v951, %v952
      %v975 = vmax.f32 %v953, %v954
      %v976 = vmax.f32 %v955, %v956
      %v977 = vmax.f32 %v957, %v958
      %v978 = vmax.f32 %v959, %v960
      %v979 = vmax.f32 %v961, %v962
      %v980 = vmax.f32 %v963, %v964
      %v981 = vmax.f32 %v965, %v966
      %v982 = vmax.f32 %v967, %v968
      %v983 = vmax.f32 %v969, %v970
      %v984 = vmax.f32 %v971, %v972
      %v985 = vld [vmem:[%s2] sm:$0x1]
      %v987 = vperm.slane %v985, 0
      %v989 = vadd.f32 %v973, %v987
      %v990 = vadd.f32 %v974, %v987
      %v991 = vadd.f32 %v975, %v987
      %v992 = vadd.f32 %v976, %v987
      %v993 = vadd.f32 %v977, %v987
      %v994 = vadd.f32 %v978, %v987
      %v995 = vadd.f32 %v979, %v987
      %v996 = vadd.f32 %v980, %v987
      %v997 = vadd.f32 %v981, %v987
      %v998 = vadd.f32 %v982, %v987
      %v999 = vadd.f32 %v983, %v987
      %v1000 = vadd.f32 %v984, %v987
      %v1001 = vmul.f32 %v989, 0.5
      %v1002 = vmul.f32 %v990, 0.5
      %v1003 = vmul.f32 %v991, 0.5
      %v1004 = vmul.f32 %v992, 0.5
      %v1005 = vmul.f32 %v993, 0.5
      %v1006 = vmul.f32 %v994, 0.5
      %v1007 = vmul.f32 %v995, 0.5
      %v1008 = vmul.f32 %v996, 0.5
      %v1009 = vmul.f32 %v997, 0.5
      %v1010 = vmul.f32 %v998, 0.5
      %v1011 = vmul.f32 %v999, 0.5
      %v1012 = vmul.f32 %v1000, 0.5
      %v1013 = vtanh.pop %v1001
      %v1014 = vtanh.pop %v1002
      %v1015 = vtanh.pop %v1003
      %v1016 = vtanh.pop %v1004
      %v1017 = vtanh.pop %v1005
      %v1018 = vtanh.pop %v1006
      %v1019 = vtanh.pop %v1007
      %v1020 = vtanh.pop %v1008
      %v1021 = vtanh.pop %v1009
      %v1022 = vtanh.pop %v1010
      %v1023 = vtanh.pop %v1011
      %v1024 = vtanh.pop %v1012
      %v1025 = vmul.f32 %v1013, 0.5
      %v1026 = vmul.f32 %v1014, 0.5
      %v1027 = vmul.f32 %v1015, 0.5
      %v1028 = vmul.f32 %v1016, 0.5
      %v1029 = vmul.f32 %v1017, 0.5
      %v1030 = vmul.f32 %v1018, 0.5
      %v1031 = vmul.f32 %v1019, 0.5
      %v1032 = vmul.f32 %v1020, 0.5
      %v1033 = vmul.f32 %v1021, 0.5
      %v1034 = vmul.f32 %v1022, 0.5
      %v1035 = vmul.f32 %v1023, 0.5
      %v1036 = vmul.f32 %v1024, 0.5
      %v1037 = vadd.f32 %v1025, 0.5
      %v1038 = vadd.f32 %v1026, 0.5
      %v1039 = vadd.f32 %v1027, 0.5
      %v1040 = vadd.f32 %v1028, 0.5
      %v1041 = vadd.f32 %v1029, 0.5
      %v1042 = vadd.f32 %v1030, 0.5
      %v1043 = vadd.f32 %v1031, 0.5
      %v1044 = vadd.f32 %v1032, 0.5
      %v1045 = vadd.f32 %v1033, 0.5
      %v1046 = vadd.f32 %v1034, 0.5
      %v1047 = vadd.f32 %v1035, 0.5
      %v1048 = vadd.f32 %v1036, 0.5
      %v1049 = vpack.c.bf16 %v1037, %v1037
      %v1050 = vpack.c.bf16 %v1038, %v1038
      %v1051 = vpack.c.bf16 %v1039, %v1039
      %v1052 = vpack.c.bf16 %v1040, %v1040
      %v1053 = vpack.c.bf16 %v1041, %v1041
      %v1054 = vpack.c.bf16 %v1042, %v1042
      %v1055 = vpack.c.bf16 %v1043, %v1043
      %v1056 = vpack.c.bf16 %v1044, %v1044
      %v1057 = vpack.c.bf16 %v1045, %v1045
      %v1058 = vpack.c.bf16 %v1046, %v1046
      %v1059 = vpack.c.bf16 %v1047, %v1047
      %v1060 = vpack.c.bf16 %v1048, %v1048
      %v1061 = vld [vmem:[%s3] sm:$0xff]
      %v1062 = vld [vmem:[%s3 + $0x8] sm:$0xff]
      %v1063 = vld [vmem:[%s3 + $0x10] sm:$0xff]
      %v1064 = vld [vmem:[%s3 + $0x18] sm:$0xff]
      %v1065 = vld [vmem:[%s3 + $0x20] sm:$0xff]
      %v1066 = vld [vmem:[%s3 + $0x28] sm:$0xff]
      %v1067 = vld [vmem:[%s3 + $0x30] sm:$0xff]
      %v1068 = vld [vmem:[%s3 + $0x38] sm:$0xff]
      %v1069 = vld [vmem:[%s3 + $0x40] sm:$0xff]
      %v1070 = vld [vmem:[%s3 + $0x48] sm:$0xff]
      %v1071 = vld [vmem:[%s3 + $0x50] sm:$0xff]
      %v1072 = vld [vmem:[%s3 + $0x58] sm:$0xff]
      %v1073 = vld [vmem:[%s3 + $0x60] sm:$0xff]
      %v1074 = vld [vmem:[%s3 + $0x68] sm:$0xff]
      %v1075 = vld [vmem:[%s3 + $0x70] sm:$0xff]
      %v1076 = vld [vmem:[%s3 + $0x78] sm:$0xff]
      %v1077 = vld [vmem:[%s3 + $0x80] sm:$0xff]
      %v1078 = vld [vmem:[%s3 + $0x88] sm:$0xff]
      %v1079 = vld [vmem:[%s3 + $0x90] sm:$0xff]
      %v1080 = vld [vmem:[%s3 + $0x98] sm:$0xff]
      %v1081 = vld [vmem:[%s3 + $0xa0] sm:$0xff]
      %v1082 = vld [vmem:[%s3 + $0xa8] sm:$0xff]
      %v1083 = vld [vmem:[%s3 + $0xb0] sm:$0xff]
      %v1084 = vld [vmem:[%s3 + $0xb8] sm:$0xff]
      %v1085 = vld [vmem:[%s3 + $0xc0] sm:$0xff]
      %v1086 = vld [vmem:[%s3 + $0xc8] sm:$0xff]
      %v1087 = vld [vmem:[%s3 + $0xd0] sm:$0xff]
      %v1088 = vld [vmem:[%s3 + $0xd8] sm:$0xff]
      %v1089 = vld [vmem:[%s3 + $0xe0] sm:$0xff]
      %v1090 = vld [vmem:[%s3 + $0xe8] sm:$0xff]
      %v1091 = vld [vmem:[%s3 + $0xf0] sm:$0xff]
      %v1092 = vld [vmem:[%s3 + $0xf8] sm:$0xff]
      %v1093 = vld [vmem:[%s3 + $0x100] sm:$0xff]
      %v1094 = vld [vmem:[%s3 + $0x108] sm:$0xff]
      %v1095 = vld [vmem:[%s3 + $0x110] sm:$0xff]
      %v1096 = vld [vmem:[%s3 + $0x118] sm:$0xff]
      %v1097 = vld [vmem:[%s3 + $0x120] sm:$0xff]
      %v1098 = vld [vmem:[%s3 + $0x128] sm:$0xff]
      %v1099 = vld [vmem:[%s3 + $0x130] sm:$0xff]
      %v1100 = vld [vmem:[%s3 + $0x138] sm:$0xff]
      %v1101 = vld [vmem:[%s3 + $0x140] sm:$0xff]
      %v1102 = vld [vmem:[%s3 + $0x148] sm:$0xff]
      %v1103 = vld [vmem:[%s3 + $0x150] sm:$0xff]
      %v1104 = vld [vmem:[%s3 + $0x158] sm:$0xff]
      %v1105 = vld [vmem:[%s3 + $0x160] sm:$0xff]
      %v1106 = vld [vmem:[%s3 + $0x168] sm:$0xff]
      %v1107 = vld [vmem:[%s3 + $0x170] sm:$0xff]
      %v1108 = vld [vmem:[%s3 + $0x178] sm:$0xff]
      %v1109 = vld [vmem:[%s3 + $0x180] sm:$0xff]
      %v1110 = vld [vmem:[%s3 + $0x188] sm:$0xff]
      %v1111 = vld [vmem:[%s3 + $0x190] sm:$0xff]
      %v1112 = vld [vmem:[%s3 + $0x198] sm:$0xff]
      %v1113 = vld [vmem:[%s3 + $0x1a0] sm:$0xff]
      %v1114 = vld [vmem:[%s3 + $0x1a8] sm:$0xff]
      %v1115 = vld [vmem:[%s3 + $0x1b0] sm:$0xff]
      %v1116 = vld [vmem:[%s3 + $0x1b8] sm:$0xff]
      %v1117 = vld [vmem:[%s3 + $0x1c0] sm:$0xff]
      %v1118 = vld [vmem:[%s3 + $0x1c8] sm:$0xff]
      %v1119 = vld [vmem:[%s3 + $0x1d0] sm:$0xff]
      %v1120 = vld [vmem:[%s3 + $0x1d8] sm:$0xff]
      %v1121 = vld [vmem:[%s3 + $0x1e0] sm:$0xff]
      %v1122 = vld [vmem:[%s3 + $0x1e8] sm:$0xff]
      %v1123 = vld [vmem:[%s3 + $0x1f0] sm:$0xff]
      %v1124 = vld [vmem:[%s3 + $0x1f8] sm:$0xff]
      %v1125 = vld [vmem:[%s3 + $0x200] sm:$0xff]
      %v1126 = vld [vmem:[%s3 + $0x208] sm:$0xff]
      %v1127 = vld [vmem:[%s3 + $0x210] sm:$0xff]
      %v1128 = vld [vmem:[%s3 + $0x218] sm:$0xff]
      %v1129 = vld [vmem:[%s3 + $0x220] sm:$0xff]
      %v1130 = vld [vmem:[%s3 + $0x228] sm:$0xff]
      %v1131 = vld [vmem:[%s3 + $0x230] sm:$0xff]
      %v1132 = vld [vmem:[%s3 + $0x238] sm:$0xff]
      %v1133 = vld [vmem:[%s3 + $0x240] sm:$0xff]
      %v1134 = vld [vmem:[%s3 + $0x248] sm:$0xff]
      %v1135 = vld [vmem:[%s3 + $0x250] sm:$0xff]
      %v1136 = vld [vmem:[%s3 + $0x258] sm:$0xff]
      %v1137 = vld [vmem:[%s3 + $0x260] sm:$0xff]
      %v1138 = vld [vmem:[%s3 + $0x268] sm:$0xff]
      %v1139 = vld [vmem:[%s3 + $0x270] sm:$0xff]
      %v1140 = vld [vmem:[%s3 + $0x278] sm:$0xff]
      %v1141 = vld [vmem:[%s3 + $0x280] sm:$0xff]
      %v1142 = vld [vmem:[%s3 + $0x288] sm:$0xff]
      %v1143 = vld [vmem:[%s3 + $0x290] sm:$0xff]
      %v1144 = vld [vmem:[%s3 + $0x298] sm:$0xff]
      %v1145 = vld [vmem:[%s3 + $0x2a0] sm:$0xff]
      %v1146 = vld [vmem:[%s3 + $0x2a8] sm:$0xff]
      %v1147 = vld [vmem:[%s3 + $0x2b0] sm:$0xff]
      %v1148 = vld [vmem:[%s3 + $0x2b8] sm:$0xff]
      %v1149 = vld [vmem:[%s3 + $0x2c0] sm:$0xff]
      %v1150 = vld [vmem:[%s3 + $0x2c8] sm:$0xff]
      %v1151 = vld [vmem:[%s3 + $0x2d0] sm:$0xff]
      %v1152 = vld [vmem:[%s3 + $0x2d8] sm:$0xff]
      %v1153 = vld [vmem:[%s3 + $0x2e0] sm:$0xff]
      %v1154 = vld [vmem:[%s3 + $0x2e8] sm:$0xff]
      %v1155 = vld [vmem:[%s3 + $0x2f0] sm:$0xff]
      %v1156 = vld [vmem:[%s3 + $0x2f8] sm:$0xff]
      %v1157 = vld [vmem:[%s3 + $0x300] sm:$0xff]
      %v1158 = vld [vmem:[%s3 + $0x308] sm:$0xff]
      %v1159 = vld [vmem:[%s3 + $0x310] sm:$0xff]
      %v1160 = vld [vmem:[%s3 + $0x318] sm:$0xff]
      %v1161 = vld [vmem:[%s3 + $0x320] sm:$0xff]
      %v1162 = vld [vmem:[%s3 + $0x328] sm:$0xff]
      %v1163 = vld [vmem:[%s3 + $0x330] sm:$0xff]
      %v1164 = vld [vmem:[%s3 + $0x338] sm:$0xff]
      %v1165 = vld [vmem:[%s3 + $0x340] sm:$0xff]
      %v1166 = vld [vmem:[%s3 + $0x348] sm:$0xff]
      %v1167 = vld [vmem:[%s3 + $0x350] sm:$0xff]
      %v1168 = vld [vmem:[%s3 + $0x358] sm:$0xff]
      %v1169 = vld [vmem:[%s3 + $0x360] sm:$0xff]
      %v1170 = vld [vmem:[%s3 + $0x368] sm:$0xff]
      %v1171 = vld [vmem:[%s3 + $0x370] sm:$0xff]
      %v1172 = vld [vmem:[%s3 + $0x378] sm:$0xff]
      %v1173 = vld [vmem:[%s3 + $0x380] sm:$0xff]
      %v1174 = vld [vmem:[%s3 + $0x388] sm:$0xff]
      %v1175 = vld [vmem:[%s3 + $0x390] sm:$0xff]
      %v1176 = vld [vmem:[%s3 + $0x398] sm:$0xff]
      %v1177 = vld [vmem:[%s3 + $0x3a0] sm:$0xff]
      %v1178 = vld [vmem:[%s3 + $0x3a8] sm:$0xff]
      %v1179 = vld [vmem:[%s3 + $0x3b0] sm:$0xff]
      %v1180 = vld [vmem:[%s3 + $0x3b8] sm:$0xff]
      %v1181 = vld [vmem:[%s3 + $0x3c0] sm:$0xff]
      %v1182 = vld [vmem:[%s3 + $0x3c8] sm:$0xff]
      %v1183 = vld [vmem:[%s3 + $0x3d0] sm:$0xff]
      %v1184 = vld [vmem:[%s3 + $0x3d8] sm:$0xff]
      %v1185 = vld [vmem:[%s3 + $0x3e0] sm:$0xff]
      %v1186 = vld [vmem:[%s3 + $0x3e8] sm:$0xff]
      %v1187 = vld [vmem:[%s3 + $0x3f0] sm:$0xff]
      %v1188 = vld [vmem:[%s3 + $0x3f8] sm:$0xff]
      %v1189 = vld [vmem:[%s3 + $0x400] sm:$0xff]
      %v1190 = vld [vmem:[%s3 + $0x408] sm:$0xff]
      %v1191 = vld [vmem:[%s3 + $0x410] sm:$0xff]
      %v1192 = vld [vmem:[%s3 + $0x418] sm:$0xff]
      %v1193 = vld [vmem:[%s3 + $0x420] sm:$0xff]
      %v1194 = vld [vmem:[%s3 + $0x428] sm:$0xff]
      %v1195 = vld [vmem:[%s3 + $0x430] sm:$0xff]
      %v1196 = vld [vmem:[%s3 + $0x438] sm:$0xff]
      %v1197 = vld [vmem:[%s3 + $0x440] sm:$0xff]
      %v1198 = vld [vmem:[%s3 + $0x448] sm:$0xff]
      %v1199 = vld [vmem:[%s3 + $0x450] sm:$0xff]
      %v1200 = vld [vmem:[%s3 + $0x458] sm:$0xff]
      %v1201 = vld [vmem:[%s3 + $0x460] sm:$0xff]
      %v1202 = vld [vmem:[%s3 + $0x468] sm:$0xff]
      %v1203 = vld [vmem:[%s3 + $0x470] sm:$0xff]
      %v1204 = vld [vmem:[%s3 + $0x478] sm:$0xff]
      %v1205 = vld [vmem:[%s3 + $0x480] sm:$0xff]
      %v1206 = vld [vmem:[%s3 + $0x488] sm:$0xff]
      %v1207 = vld [vmem:[%s3 + $0x490] sm:$0xff]
      %v1208 = vld [vmem:[%s3 + $0x498] sm:$0xff]
      %v1209 = vld [vmem:[%s3 + $0x4a0] sm:$0xff]
      %v1210 = vld [vmem:[%s3 + $0x4a8] sm:$0xff]
      %v1211 = vld [vmem:[%s3 + $0x4b0] sm:$0xff]
      %v1212 = vld [vmem:[%s3 + $0x4b8] sm:$0xff]
      %v1213 = vld [vmem:[%s3 + $0x4c0] sm:$0xff]
      %v1214 = vld [vmem:[%s3 + $0x4c8] sm:$0xff]
      %v1215 = vld [vmem:[%s3 + $0x4d0] sm:$0xff]
      %v1216 = vld [vmem:[%s3 + $0x4d8] sm:$0xff]
      %v1217 = vld [vmem:[%s3 + $0x4e0] sm:$0xff]
      %v1218 = vld [vmem:[%s3 + $0x4e8] sm:$0xff]
      %v1219 = vld [vmem:[%s3 + $0x4f0] sm:$0xff]
      %v1220 = vld [vmem:[%s3 + $0x4f8] sm:$0xff]
      %v1221 = vld [vmem:[%s3 + $0x500] sm:$0xff]
      %v1222 = vld [vmem:[%s3 + $0x508] sm:$0xff]
      %v1223 = vld [vmem:[%s3 + $0x510] sm:$0xff]
      %v1224 = vld [vmem:[%s3 + $0x518] sm:$0xff]
      %v1225 = vld [vmem:[%s3 + $0x520] sm:$0xff]
      %v1226 = vld [vmem:[%s3 + $0x528] sm:$0xff]
      %v1227 = vld [vmem:[%s3 + $0x530] sm:$0xff]
      %v1228 = vld [vmem:[%s3 + $0x538] sm:$0xff]
      %v1229 = vld [vmem:[%s3 + $0x540] sm:$0xff]
      %v1230 = vld [vmem:[%s3 + $0x548] sm:$0xff]
      %v1231 = vld [vmem:[%s3 + $0x550] sm:$0xff]
      %v1232 = vld [vmem:[%s3 + $0x558] sm:$0xff]
      %v1233 = vld [vmem:[%s3 + $0x560] sm:$0xff]
      %v1234 = vld [vmem:[%s3 + $0x568] sm:$0xff]
      %v1235 = vld [vmem:[%s3 + $0x570] sm:$0xff]
      %v1236 = vld [vmem:[%s3 + $0x578] sm:$0xff]
      %v1237 = vld [vmem:[%s3 + $0x580] sm:$0xff]
      %v1238 = vld [vmem:[%s3 + $0x588] sm:$0xff]
      %v1239 = vld [vmem:[%s3 + $0x590] sm:$0xff]
      %v1240 = vld [vmem:[%s3 + $0x598] sm:$0xff]
      %v1241 = vld [vmem:[%s3 + $0x5a0] sm:$0xff]
      %v1242 = vld [vmem:[%s3 + $0x5a8] sm:$0xff]
      %v1243 = vld [vmem:[%s3 + $0x5b0] sm:$0xff]
      %v1244 = vld [vmem:[%s3 + $0x5b8] sm:$0xff]
      %v1245 = vld [vmem:[%s3 + $0x5c0] sm:$0xff]
      %v1246 = vld [vmem:[%s3 + $0x5c8] sm:$0xff]
      %v1247 = vld [vmem:[%s3 + $0x5d0] sm:$0xff]
      %v1248 = vld [vmem:[%s3 + $0x5d8] sm:$0xff]
      %v1249 = vld [vmem:[%s3 + $0x5e0] sm:$0xff]
      %v1250 = vld [vmem:[%s3 + $0x5e8] sm:$0xff]
      %v1251 = vld [vmem:[%s3 + $0x5f0] sm:$0xff]
      %v1252 = vld [vmem:[%s3 + $0x5f8] sm:$0xff]
      %v1253 = vld [vmem:[%s3 + $0x600] sm:$0xff]
      %v1254 = vld [vmem:[%s3 + $0x608] sm:$0xff]
      %v1255 = vld [vmem:[%s3 + $0x610] sm:$0xff]
      %v1256 = vld [vmem:[%s3 + $0x618] sm:$0xff]
      %v1257 = vld [vmem:[%s3 + $0x620] sm:$0xff]
      %v1258 = vld [vmem:[%s3 + $0x628] sm:$0xff]
      %v1259 = vld [vmem:[%s3 + $0x630] sm:$0xff]
      %v1260 = vld [vmem:[%s3 + $0x638] sm:$0xff]
      %v1261 = vld [vmem:[%s3 + $0x640] sm:$0xff]
      %v1262 = vld [vmem:[%s3 + $0x648] sm:$0xff]
      %v1263 = vld [vmem:[%s3 + $0x650] sm:$0xff]
      %v1264 = vld [vmem:[%s3 + $0x658] sm:$0xff]
      %v1265 = vld [vmem:[%s3 + $0x660] sm:$0xff]
      %v1266 = vld [vmem:[%s3 + $0x668] sm:$0xff]
      %v1267 = vld [vmem:[%s3 + $0x670] sm:$0xff]
      %v1268 = vld [vmem:[%s3 + $0x678] sm:$0xff]
      %v1269 = vld [vmem:[%s3 + $0x680] sm:$0xff]
      %v1270 = vld [vmem:[%s3 + $0x688] sm:$0xff]
      %v1271 = vld [vmem:[%s3 + $0x690] sm:$0xff]
      %v1272 = vld [vmem:[%s3 + $0x698] sm:$0xff]
      %v1273 = vld [vmem:[%s3 + $0x6a0] sm:$0xff]
      %v1274 = vld [vmem:[%s3 + $0x6a8] sm:$0xff]
      %v1275 = vld [vmem:[%s3 + $0x6b0] sm:$0xff]
      %v1276 = vld [vmem:[%s3 + $0x6b8] sm:$0xff]
      %v1277 = vld [vmem:[%s3 + $0x6c0] sm:$0xff]
      %v1278 = vld [vmem:[%s3 + $0x6c8] sm:$0xff]
      %v1279 = vld [vmem:[%s3 + $0x6d0] sm:$0xff]
      %v1280 = vld [vmem:[%s3 + $0x6d8] sm:$0xff]
      %v1281 = vld [vmem:[%s3 + $0x6e0] sm:$0xff]
      %v1282 = vld [vmem:[%s3 + $0x6e8] sm:$0xff]
      %v1283 = vld [vmem:[%s3 + $0x6f0] sm:$0xff]
      %v1284 = vld [vmem:[%s3 + $0x6f8] sm:$0xff]
      %v1285 = vld [vmem:[%s3 + $0x700] sm:$0xff]
      %v1286 = vld [vmem:[%s3 + $0x708] sm:$0xff]
      %v1287 = vld [vmem:[%s3 + $0x710] sm:$0xff]
      %v1288 = vld [vmem:[%s3 + $0x718] sm:$0xff]
      %v1289 = vld [vmem:[%s3 + $0x720] sm:$0xff]
      %v1290 = vld [vmem:[%s3 + $0x728] sm:$0xff]
      %v1291 = vld [vmem:[%s3 + $0x730] sm:$0xff]
      %v1292 = vld [vmem:[%s3 + $0x738] sm:$0xff]
      %v1293 = vld [vmem:[%s3 + $0x740] sm:$0xff]
      %v1294 = vld [vmem:[%s3 + $0x748] sm:$0xff]
      %v1295 = vld [vmem:[%s3 + $0x750] sm:$0xff]
      %v1296 = vld [vmem:[%s3 + $0x758] sm:$0xff]
      %v1297 = vld [vmem:[%s3 + $0x760] sm:$0xff]
      %v1298 = vld [vmem:[%s3 + $0x768] sm:$0xff]
      %v1299 = vld [vmem:[%s3 + $0x770] sm:$0xff]
      %v1300 = vld [vmem:[%s3 + $0x778] sm:$0xff]
      %v1301 = vld [vmem:[%s3 + $0x780] sm:$0xff]
      %v1302 = vld [vmem:[%s3 + $0x788] sm:$0xff]
      %v1303 = vld [vmem:[%s3 + $0x790] sm:$0xff]
      %v1304 = vld [vmem:[%s3 + $0x798] sm:$0xff]
      %v1305 = vld [vmem:[%s3 + $0x7a0] sm:$0xff]
      %v1306 = vld [vmem:[%s3 + $0x7a8] sm:$0xff]
      %v1307 = vld [vmem:[%s3 + $0x7b0] sm:$0xff]
      %v1308 = vld [vmem:[%s3 + $0x7b8] sm:$0xff]
      %v1309 = vld [vmem:[%s3 + $0x7c0] sm:$0xff]
      %v1310 = vld [vmem:[%s3 + $0x7c8] sm:$0xff]
      %v1311 = vld [vmem:[%s3 + $0x7d0] sm:$0xff]
      %v1312 = vld [vmem:[%s3 + $0x7d8] sm:$0xff]
      %v1313 = vld [vmem:[%s3 + $0x7e0] sm:$0xff]
      %v1314 = vld [vmem:[%s3 + $0x7e8] sm:$0xff]
      %v1315 = vld [vmem:[%s3 + $0x7f0] sm:$0xff]
      %v1316 = vld [vmem:[%s3 + $0x7f8] sm:$0xff]
      %v1317 = vld [vmem:[%s3 + $0x800] sm:$0xff]
      %v1318 = vld [vmem:[%s3 + $0x808] sm:$0xff]
      %v1319 = vld [vmem:[%s3 + $0x810] sm:$0xff]
      %v1320 = vld [vmem:[%s3 + $0x818] sm:$0xff]
      %v1321 = vld [vmem:[%s3 + $0x820] sm:$0xff]
      %v1322 = vld [vmem:[%s3 + $0x828] sm:$0xff]
      %v1323 = vld [vmem:[%s3 + $0x830] sm:$0xff]
      %v1324 = vld [vmem:[%s3 + $0x838] sm:$0xff]
      %v1325 = vld [vmem:[%s3 + $0x840] sm:$0xff]
      %v1326 = vld [vmem:[%s3 + $0x848] sm:$0xff]
      %v1327 = vld [vmem:[%s3 + $0x850] sm:$0xff]
      %v1328 = vld [vmem:[%s3 + $0x858] sm:$0xff]
      %v1329 = vld [vmem:[%s3 + $0x860] sm:$0xff]
      %v1330 = vld [vmem:[%s3 + $0x868] sm:$0xff]
      %v1331 = vld [vmem:[%s3 + $0x870] sm:$0xff]
      %v1332 = vld [vmem:[%s3 + $0x878] sm:$0xff]
      %v1333 = vld [vmem:[%s3 + $0x880] sm:$0xff]
      %v1334 = vld [vmem:[%s3 + $0x888] sm:$0xff]
      %v1335 = vld [vmem:[%s3 + $0x890] sm:$0xff]
      %v1336 = vld [vmem:[%s3 + $0x898] sm:$0xff]
      %v1337 = vld [vmem:[%s3 + $0x8a0] sm:$0xff]
      %v1338 = vld [vmem:[%s3 + $0x8a8] sm:$0xff]
      %v1339 = vld [vmem:[%s3 + $0x8b0] sm:$0xff]
      %v1340 = vld [vmem:[%s3 + $0x8b8] sm:$0xff]
      %v1341 = vld [vmem:[%s3 + $0x8c0] sm:$0xff]
      %v1342 = vld [vmem:[%s3 + $0x8c8] sm:$0xff]
      %v1343 = vld [vmem:[%s3 + $0x8d0] sm:$0xff]
      %v1344 = vld [vmem:[%s3 + $0x8d8] sm:$0xff]
      %v1345 = vld [vmem:[%s3 + $0x8e0] sm:$0xff]
      %v1346 = vld [vmem:[%s3 + $0x8e8] sm:$0xff]
      %v1347 = vld [vmem:[%s3 + $0x8f0] sm:$0xff]
      %v1348 = vld [vmem:[%s3 + $0x8f8] sm:$0xff]
      %v1349 = vld [vmem:[%s3 + $0x900] sm:$0xff]
      %v1350 = vld [vmem:[%s3 + $0x908] sm:$0xff]
      %v1351 = vld [vmem:[%s3 + $0x910] sm:$0xff]
      %v1352 = vld [vmem:[%s3 + $0x918] sm:$0xff]
      %v1353 = vld [vmem:[%s3 + $0x920] sm:$0xff]
      %v1354 = vld [vmem:[%s3 + $0x928] sm:$0xff]
      %v1355 = vld [vmem:[%s3 + $0x930] sm:$0xff]
      %v1356 = vld [vmem:[%s3 + $0x938] sm:$0xff]
      %v1357 = vld [vmem:[%s3 + $0x940] sm:$0xff]
      %v1358 = vld [vmem:[%s3 + $0x948] sm:$0xff]
      %v1359 = vld [vmem:[%s3 + $0x950] sm:$0xff]
      %v1360 = vld [vmem:[%s3 + $0x958] sm:$0xff]
      %v1361 = vld [vmem:[%s3 + $0x960] sm:$0xff]
      %v1362 = vld [vmem:[%s3 + $0x968] sm:$0xff]
      %v1363 = vld [vmem:[%s3 + $0x970] sm:$0xff]
      %v1364 = vld [vmem:[%s3 + $0x978] sm:$0xff]
      %v1365 = vld [vmem:[%s3 + $0x980] sm:$0xff]
      %v1366 = vld [vmem:[%s3 + $0x988] sm:$0xff]
      %v1367 = vld [vmem:[%s3 + $0x990] sm:$0xff]
      %v1368 = vld [vmem:[%s3 + $0x998] sm:$0xff]
      %v1369 = vld [vmem:[%s3 + $0x9a0] sm:$0xff]
      %v1370 = vld [vmem:[%s3 + $0x9a8] sm:$0xff]
      %v1371 = vld [vmem:[%s3 + $0x9b0] sm:$0xff]
      %v1372 = vld [vmem:[%s3 + $0x9b8] sm:$0xff]
      %v1373 = vld [vmem:[%s3 + $0x9c0] sm:$0xff]
      %v1374 = vld [vmem:[%s3 + $0x9c8] sm:$0xff]
      %v1375 = vld [vmem:[%s3 + $0x9d0] sm:$0xff]
      %v1376 = vld [vmem:[%s3 + $0x9d8] sm:$0xff]
      %v1377 = vld [vmem:[%s3 + $0x9e0] sm:$0xff]
      %v1378 = vld [vmem:[%s3 + $0x9e8] sm:$0xff]
      %v1379 = vld [vmem:[%s3 + $0x9f0] sm:$0xff]
      %v1380 = vld [vmem:[%s3 + $0x9f8] sm:$0xff]
      %v1381 = vld [vmem:[%s3 + $0xa00] sm:$0xff]
      %v1382 = vld [vmem:[%s3 + $0xa08] sm:$0xff]
      %v1383 = vld [vmem:[%s3 + $0xa10] sm:$0xff]
      %v1384 = vld [vmem:[%s3 + $0xa18] sm:$0xff]
      %v1385 = vld [vmem:[%s3 + $0xa20] sm:$0xff]
      %v1386 = vld [vmem:[%s3 + $0xa28] sm:$0xff]
      %v1387 = vld [vmem:[%s3 + $0xa30] sm:$0xff]
      %v1388 = vld [vmem:[%s3 + $0xa38] sm:$0xff]
      %v1389 = vld [vmem:[%s3 + $0xa40] sm:$0xff]
      %v1390 = vld [vmem:[%s3 + $0xa48] sm:$0xff]
      %v1391 = vld [vmem:[%s3 + $0xa50] sm:$0xff]
      %v1392 = vld [vmem:[%s3 + $0xa58] sm:$0xff]
      %v1393 = vld [vmem:[%s3 + $0xa60] sm:$0xff]
      %v1394 = vld [vmem:[%s3 + $0xa68] sm:$0xff]
      %v1395 = vld [vmem:[%s3 + $0xa70] sm:$0xff]
      %v1396 = vld [vmem:[%s3 + $0xa78] sm:$0xff]
      %v1397 = vld [vmem:[%s3 + $0xa80] sm:$0xff]
      %v1398 = vld [vmem:[%s3 + $0xa88] sm:$0xff]
      %v1399 = vld [vmem:[%s3 + $0xa90] sm:$0xff]
      %v1400 = vld [vmem:[%s3 + $0xa98] sm:$0xff]
      %v1401 = vld [vmem:[%s3 + $0xaa0] sm:$0xff]
      %v1402 = vld [vmem:[%s3 + $0xaa8] sm:$0xff]
      %v1403 = vld [vmem:[%s3 + $0xab0] sm:$0xff]
      %v1404 = vld [vmem:[%s3 + $0xab8] sm:$0xff]
      %v1405 = vld [vmem:[%s3 + $0xac0] sm:$0xff]
      %v1406 = vld [vmem:[%s3 + $0xac8] sm:$0xff]
      %v1407 = vld [vmem:[%s3 + $0xad0] sm:$0xff]
      %v1408 = vld [vmem:[%s3 + $0xad8] sm:$0xff]
      %v1409 = vld [vmem:[%s3 + $0xae0] sm:$0xff]
      %v1410 = vld [vmem:[%s3 + $0xae8] sm:$0xff]
      %v1411 = vld [vmem:[%s3 + $0xaf0] sm:$0xff]
      %v1412 = vld [vmem:[%s3 + $0xaf8] sm:$0xff]
      %v1413 = vld [vmem:[%s3 + $0xb00] sm:$0xff]
      %v1414 = vld [vmem:[%s3 + $0xb08] sm:$0xff]
      %v1415 = vld [vmem:[%s3 + $0xb10] sm:$0xff]
      %v1416 = vld [vmem:[%s3 + $0xb18] sm:$0xff]
      %v1417 = vld [vmem:[%s3 + $0xb20] sm:$0xff]
      %v1418 = vld [vmem:[%s3 + $0xb28] sm:$0xff]
      %v1419 = vld [vmem:[%s3 + $0xb30] sm:$0xff]
      %v1420 = vld [vmem:[%s3 + $0xb38] sm:$0xff]
      %v1421 = vld [vmem:[%s3 + $0xb40] sm:$0xff]
      %v1422 = vld [vmem:[%s3 + $0xb48] sm:$0xff]
      %v1423 = vld [vmem:[%s3 + $0xb50] sm:$0xff]
      %v1424 = vld [vmem:[%s3 + $0xb58] sm:$0xff]
      %v1425 = vld [vmem:[%s3 + $0xb60] sm:$0xff]
      %v1426 = vld [vmem:[%s3 + $0xb68] sm:$0xff]
      %v1427 = vld [vmem:[%s3 + $0xb70] sm:$0xff]
      %v1428 = vld [vmem:[%s3 + $0xb78] sm:$0xff]
      %v1429 = vld [vmem:[%s3 + $0xb80] sm:$0xff]
      %v1430 = vld [vmem:[%s3 + $0xb88] sm:$0xff]
      %v1431 = vld [vmem:[%s3 + $0xb90] sm:$0xff]
      %v1432 = vld [vmem:[%s3 + $0xb98] sm:$0xff]
      %v1433 = vld [vmem:[%s3 + $0xba0] sm:$0xff]
      %v1434 = vld [vmem:[%s3 + $0xba8] sm:$0xff]
      %v1435 = vld [vmem:[%s3 + $0xbb0] sm:$0xff]
      %v1436 = vld [vmem:[%s3 + $0xbb8] sm:$0xff]
      %v1437 = vld [vmem:[%s3 + $0xbc0] sm:$0xff]
      %v1438 = vld [vmem:[%s3 + $0xbc8] sm:$0xff]
      %v1439 = vld [vmem:[%s3 + $0xbd0] sm:$0xff]
      %v1440 = vld [vmem:[%s3 + $0xbd8] sm:$0xff]
      %v1441 = vld [vmem:[%s3 + $0xbe0] sm:$0xff]
      %v1442 = vld [vmem:[%s3 + $0xbe8] sm:$0xff]
      %v1443 = vld [vmem:[%s3 + $0xbf0] sm:$0xff]
      %v1444 = vld [vmem:[%s3 + $0xbf8] sm:$0xff]
      %v1445 = vld [vmem:[%s3 + $0xc00] sm:$0xff]
      %v1446 = vld [vmem:[%s3 + $0xc08] sm:$0xff]
      %v1447 = vld [vmem:[%s3 + $0xc10] sm:$0xff]
      %v1448 = vld [vmem:[%s3 + $0xc18] sm:$0xff]
      %v1449 = vld [vmem:[%s3 + $0xc20] sm:$0xff]
      %v1450 = vld [vmem:[%s3 + $0xc28] sm:$0xff]
      %v1451 = vld [vmem:[%s3 + $0xc30] sm:$0xff]
      %v1452 = vld [vmem:[%s3 + $0xc38] sm:$0xff]
      %v1453 = vld [vmem:[%s3 + $0xc40] sm:$0xff]
      %v1454 = vld [vmem:[%s3 + $0xc48] sm:$0xff]
      %v1455 = vld [vmem:[%s3 + $0xc50] sm:$0xff]
      %v1456 = vld [vmem:[%s3 + $0xc58] sm:$0xff]
      %v1457 = vld [vmem:[%s3 + $0xc60] sm:$0xff]
      %v1458 = vld [vmem:[%s3 + $0xc68] sm:$0xff]
      %v1459 = vld [vmem:[%s3 + $0xc70] sm:$0xff]
      %v1460 = vld [vmem:[%s3 + $0xc78] sm:$0xff]
      %v1461 = vld [vmem:[%s3 + $0xc80] sm:$0xff]
      %v1462 = vld [vmem:[%s3 + $0xc88] sm:$0xff]
      %v1463 = vld [vmem:[%s3 + $0xc90] sm:$0xff]
      %v1464 = vld [vmem:[%s3 + $0xc98] sm:$0xff]
      %v1465 = vld [vmem:[%s3 + $0xca0] sm:$0xff]
      %v1466 = vld [vmem:[%s3 + $0xca8] sm:$0xff]
      %v1467 = vld [vmem:[%s3 + $0xcb0] sm:$0xff]
      %v1468 = vld [vmem:[%s3 + $0xcb8] sm:$0xff]
      %v1469 = vld [vmem:[%s3 + $0xcc0] sm:$0xff]
      %v1470 = vld [vmem:[%s3 + $0xcc8] sm:$0xff]
      %v1471 = vld [vmem:[%s3 + $0xcd0] sm:$0xff]
      %v1472 = vld [vmem:[%s3 + $0xcd8] sm:$0xff]
      %v1473 = vld [vmem:[%s3 + $0xce0] sm:$0xff]
      %v1474 = vld [vmem:[%s3 + $0xce8] sm:$0xff]
      %v1475 = vld [vmem:[%s3 + $0xcf0] sm:$0xff]
      %v1476 = vld [vmem:[%s3 + $0xcf8] sm:$0xff]
      %v1477 = vld [vmem:[%s3 + $0xd00] sm:$0xff]
      %v1478 = vld [vmem:[%s3 + $0xd08] sm:$0xff]
      %v1479 = vld [vmem:[%s3 + $0xd10] sm:$0xff]
      %v1480 = vld [vmem:[%s3 + $0xd18] sm:$0xff]
      %v1481 = vld [vmem:[%s3 + $0xd20] sm:$0xff]
      %v1482 = vld [vmem:[%s3 + $0xd28] sm:$0xff]
      %v1483 = vld [vmem:[%s3 + $0xd30] sm:$0xff]
      %v1484 = vld [vmem:[%s3 + $0xd38] sm:$0xff]
      %v1485 = vld [vmem:[%s3 + $0xd40] sm:$0xff]
      %v1486 = vld [vmem:[%s3 + $0xd48] sm:$0xff]
      %v1487 = vld [vmem:[%s3 + $0xd50] sm:$0xff]
      %v1488 = vld [vmem:[%s3 + $0xd58] sm:$0xff]
      %v1489 = vld [vmem:[%s3 + $0xd60] sm:$0xff]
      %v1490 = vld [vmem:[%s3 + $0xd68] sm:$0xff]
      %v1491 = vld [vmem:[%s3 + $0xd70] sm:$0xff]
      %v1492 = vld [vmem:[%s3 + $0xd78] sm:$0xff]
      %v1493 = vld [vmem:[%s3 + $0xd80] sm:$0xff]
      %v1494 = vld [vmem:[%s3 + $0xd88] sm:$0xff]
      %v1495 = vld [vmem:[%s3 + $0xd90] sm:$0xff]
      %v1496 = vld [vmem:[%s3 + $0xd98] sm:$0xff]
      %v1497 = vld [vmem:[%s3 + $0xda0] sm:$0xff]
      %v1498 = vld [vmem:[%s3 + $0xda8] sm:$0xff]
      %v1499 = vld [vmem:[%s3 + $0xdb0] sm:$0xff]
      %v1500 = vld [vmem:[%s3 + $0xdb8] sm:$0xff]
      %v1501 = vld [vmem:[%s3 + $0xdc0] sm:$0xff]
      %v1502 = vld [vmem:[%s3 + $0xdc8] sm:$0xff]
      %v1503 = vld [vmem:[%s3 + $0xdd0] sm:$0xff]
      %v1504 = vld [vmem:[%s3 + $0xdd8] sm:$0xff]
      %v1505 = vld [vmem:[%s3 + $0xde0] sm:$0xff]
      %v1506 = vld [vmem:[%s3 + $0xde8] sm:$0xff]
      %v1507 = vld [vmem:[%s3 + $0xdf0] sm:$0xff]
      %v1508 = vld [vmem:[%s3 + $0xdf8] sm:$0xff]
      %v1509 = vld [vmem:[%s3 + $0xe00] sm:$0xff]
      %v1510 = vld [vmem:[%s3 + $0xe08] sm:$0xff]
      %v1511 = vld [vmem:[%s3 + $0xe10] sm:$0xff]
      %v1512 = vld [vmem:[%s3 + $0xe18] sm:$0xff]
      %v1513 = vld [vmem:[%s3 + $0xe20] sm:$0xff]
      %v1514 = vld [vmem:[%s3 + $0xe28] sm:$0xff]
      %v1515 = vld [vmem:[%s3 + $0xe30] sm:$0xff]
      %v1516 = vld [vmem:[%s3 + $0xe38] sm:$0xff]
      %v1517 = vld [vmem:[%s3 + $0xe40] sm:$0xff]
      %v1518 = vld [vmem:[%s3 + $0xe48] sm:$0xff]
      %v1519 = vld [vmem:[%s3 + $0xe50] sm:$0xff]
      %v1520 = vld [vmem:[%s3 + $0xe58] sm:$0xff]
      %v1521 = vld [vmem:[%s3 + $0xe60] sm:$0xff]
      %v1522 = vld [vmem:[%s3 + $0xe68] sm:$0xff]
      %v1523 = vld [vmem:[%s3 + $0xe70] sm:$0xff]
      %v1524 = vld [vmem:[%s3 + $0xe78] sm:$0xff]
      %v1525 = vld [vmem:[%s3 + $0xe80] sm:$0xff]
      %v1526 = vld [vmem:[%s3 + $0xe88] sm:$0xff]
      %v1527 = vld [vmem:[%s3 + $0xe90] sm:$0xff]
      %v1528 = vld [vmem:[%s3 + $0xe98] sm:$0xff]
      %v1529 = vld [vmem:[%s3 + $0xea0] sm:$0xff]
      %v1530 = vld [vmem:[%s3 + $0xea8] sm:$0xff]
      %v1531 = vld [vmem:[%s3 + $0xeb0] sm:$0xff]
      %v1532 = vld [vmem:[%s3 + $0xeb8] sm:$0xff]
      %v1533 = vld [vmem:[%s3 + $0xec0] sm:$0xff]
      %v1534 = vld [vmem:[%s3 + $0xec8] sm:$0xff]
      %v1535 = vld [vmem:[%s3 + $0xed0] sm:$0xff]
      %v1536 = vld [vmem:[%s3 + $0xed8] sm:$0xff]
      %v1537 = vld [vmem:[%s3 + $0xee0] sm:$0xff]
      %v1538 = vld [vmem:[%s3 + $0xee8] sm:$0xff]
      %v1539 = vld [vmem:[%s3 + $0xef0] sm:$0xff]
      %v1540 = vld [vmem:[%s3 + $0xef8] sm:$0xff]
      %v1541 = vld [vmem:[%s3 + $0xf00] sm:$0xff]
      %v1542 = vld [vmem:[%s3 + $0xf08] sm:$0xff]
      %v1543 = vld [vmem:[%s3 + $0xf10] sm:$0xff]
      %v1544 = vld [vmem:[%s3 + $0xf18] sm:$0xff]
      %v1545 = vld [vmem:[%s3 + $0xf20] sm:$0xff]
      %v1546 = vld [vmem:[%s3 + $0xf28] sm:$0xff]
      %v1547 = vld [vmem:[%s3 + $0xf30] sm:$0xff]
      %v1548 = vld [vmem:[%s3 + $0xf38] sm:$0xff]
      %v1549 = vld [vmem:[%s3 + $0xf40] sm:$0xff]
      %v1550 = vld [vmem:[%s3 + $0xf48] sm:$0xff]
      %v1551 = vld [vmem:[%s3 + $0xf50] sm:$0xff]
      %v1552 = vld [vmem:[%s3 + $0xf58] sm:$0xff]
      %v1553 = vld [vmem:[%s3 + $0xf60] sm:$0xff]
      %v1554 = vld [vmem:[%s3 + $0xf68] sm:$0xff]
      %v1555 = vld [vmem:[%s3 + $0xf70] sm:$0xff]
      %v1556 = vld [vmem:[%s3 + $0xf78] sm:$0xff]
      %v1557 = vld [vmem:[%s3 + $0xf80] sm:$0xff]
      %v1558 = vld [vmem:[%s3 + $0xf88] sm:$0xff]
      %v1559 = vld [vmem:[%s3 + $0xf90] sm:$0xff]
      %v1560 = vld [vmem:[%s3 + $0xf98] sm:$0xff]
      %v1561 = vld [vmem:[%s3 + $0xfa0] sm:$0xff]
      %v1562 = vld [vmem:[%s3 + $0xfa8] sm:$0xff]
      %v1563 = vld [vmem:[%s3 + $0xfb0] sm:$0xff]
      %v1564 = vld [vmem:[%s3 + $0xfb8] sm:$0xff]
      %v1565 = vld [vmem:[%s3 + $0xfc0] sm:$0xff]
      %v1566 = vld [vmem:[%s3 + $0xfc8] sm:$0xff]
      %v1567 = vld [vmem:[%s3 + $0xfd0] sm:$0xff]
      %v1568 = vld [vmem:[%s3 + $0xfd8] sm:$0xff]
      %v1569 = vld [vmem:[%s3 + $0xfe0] sm:$0xff]
      %v1570 = vld [vmem:[%s3 + $0xfe8] sm:$0xff]
      %v1571 = vld [vmem:[%s3 + $0xff0] sm:$0xff]
      %v1572 = vld [vmem:[%s3 + $0xff8] sm:$0xff]
      %v1573 = vld [vmem:[%s3 + $0x1000] sm:$0xff]
      %v1574 = vld [vmem:[%s3 + $0x1008] sm:$0xff]
      %v1575 = vld [vmem:[%s3 + $0x1010] sm:$0xff]
      %v1576 = vld [vmem:[%s3 + $0x1018] sm:$0xff]
      %v1577 = vld [vmem:[%s3 + $0x1020] sm:$0xff]
      %v1578 = vld [vmem:[%s3 + $0x1028] sm:$0xff]
      %v1579 = vld [vmem:[%s3 + $0x1030] sm:$0xff]
      %v1580 = vld [vmem:[%s3 + $0x1038] sm:$0xff]
      %v1581 = vld [vmem:[%s3 + $0x1040] sm:$0xff]
      %v1582 = vld [vmem:[%s3 + $0x1048] sm:$0xff]
      %v1583 = vld [vmem:[%s3 + $0x1050] sm:$0xff]
      %v1584 = vld [vmem:[%s3 + $0x1058] sm:$0xff]
      %v1585 = vld [vmem:[%s3 + $0x1060] sm:$0xff]
      %v1586 = vld [vmem:[%s3 + $0x1068] sm:$0xff]
      %v1587 = vld [vmem:[%s3 + $0x1070] sm:$0xff]
      %v1588 = vld [vmem:[%s3 + $0x1078] sm:$0xff]
      %v1589 = vld [vmem:[%s3 + $0x1080] sm:$0xff]
      %v1590 = vld [vmem:[%s3 + $0x1088] sm:$0xff]
      %v1591 = vld [vmem:[%s3 + $0x1090] sm:$0xff]
      %v1592 = vld [vmem:[%s3 + $0x1098] sm:$0xff]
      %v1593 = vld [vmem:[%s3 + $0x10a0] sm:$0xff]
      %v1594 = vld [vmem:[%s3 + $0x10a8] sm:$0xff]
      %v1595 = vld [vmem:[%s3 + $0x10b0] sm:$0xff]
      %v1596 = vld [vmem:[%s3 + $0x10b8] sm:$0xff]
      %v1597 = vld [vmem:[%s3 + $0x10c0] sm:$0xff]
      %v1598 = vld [vmem:[%s3 + $0x10c8] sm:$0xff]
      %v1599 = vld [vmem:[%s3 + $0x10d0] sm:$0xff]
      %v1600 = vld [vmem:[%s3 + $0x10d8] sm:$0xff]
      %v1601 = vld [vmem:[%s3 + $0x10e0] sm:$0xff]
      %v1602 = vld [vmem:[%s3 + $0x10e8] sm:$0xff]
      %v1603 = vld [vmem:[%s3 + $0x10f0] sm:$0xff]
      %v1604 = vld [vmem:[%s3 + $0x10f8] sm:$0xff]
      %v1605 = vld [vmem:[%s3 + $0x1100] sm:$0xff]
      %v1606 = vld [vmem:[%s3 + $0x1108] sm:$0xff]
      %v1607 = vld [vmem:[%s3 + $0x1110] sm:$0xff]
      %v1608 = vld [vmem:[%s3 + $0x1118] sm:$0xff]
      %v1609 = vld [vmem:[%s3 + $0x1120] sm:$0xff]
      %v1610 = vld [vmem:[%s3 + $0x1128] sm:$0xff]
      %v1611 = vld [vmem:[%s3 + $0x1130] sm:$0xff]
      %v1612 = vld [vmem:[%s3 + $0x1138] sm:$0xff]
      %v1613 = vld [vmem:[%s3 + $0x1140] sm:$0xff]
      %v1614 = vld [vmem:[%s3 + $0x1148] sm:$0xff]
      %v1615 = vld [vmem:[%s3 + $0x1150] sm:$0xff]
      %v1616 = vld [vmem:[%s3 + $0x1158] sm:$0xff]
      %v1617 = vld [vmem:[%s3 + $0x1160] sm:$0xff]
      %v1618 = vld [vmem:[%s3 + $0x1168] sm:$0xff]
      %v1619 = vld [vmem:[%s3 + $0x1170] sm:$0xff]
      %v1620 = vld [vmem:[%s3 + $0x1178] sm:$0xff]
      %v1621 = vld [vmem:[%s3 + $0x1180] sm:$0xff]
      %v1622 = vld [vmem:[%s3 + $0x1188] sm:$0xff]
      %v1623 = vld [vmem:[%s3 + $0x1190] sm:$0xff]
      %v1624 = vld [vmem:[%s3 + $0x1198] sm:$0xff]
      %v1625 = vld [vmem:[%s3 + $0x11a0] sm:$0xff]
      %v1626 = vld [vmem:[%s3 + $0x11a8] sm:$0xff]
      %v1627 = vld [vmem:[%s3 + $0x11b0] sm:$0xff]
      %v1628 = vld [vmem:[%s3 + $0x11b8] sm:$0xff]
      %v1629 = vld [vmem:[%s3 + $0x11c0] sm:$0xff]
      %v1630 = vld [vmem:[%s3 + $0x11c8] sm:$0xff]
      %v1631 = vld [vmem:[%s3 + $0x11d0] sm:$0xff]
      %v1632 = vld [vmem:[%s3 + $0x11d8] sm:$0xff]
      %v1633 = vld [vmem:[%s3 + $0x11e0] sm:$0xff]
      %v1634 = vld [vmem:[%s3 + $0x11e8] sm:$0xff]
      %v1635 = vld [vmem:[%s3 + $0x11f0] sm:$0xff]
      %v1636 = vld [vmem:[%s3 + $0x11f8] sm:$0xff]
      %v1637 = vld [vmem:[%s3 + $0x1200] sm:$0xff]
      %v1638 = vld [vmem:[%s3 + $0x1208] sm:$0xff]
      %v1639 = vld [vmem:[%s3 + $0x1210] sm:$0xff]
      %v1640 = vld [vmem:[%s3 + $0x1218] sm:$0xff]
      %v1641 = vld [vmem:[%s3 + $0x1220] sm:$0xff]
      %v1642 = vld [vmem:[%s3 + $0x1228] sm:$0xff]
      %v1643 = vld [vmem:[%s3 + $0x1230] sm:$0xff]
      %v1644 = vld [vmem:[%s3 + $0x1238] sm:$0xff]
      %v1645 = vld [vmem:[%s3 + $0x1240] sm:$0xff]
      %v1646 = vld [vmem:[%s3 + $0x1248] sm:$0xff]
      %v1647 = vld [vmem:[%s3 + $0x1250] sm:$0xff]
      %v1648 = vld [vmem:[%s3 + $0x1258] sm:$0xff]
      %v1649 = vld [vmem:[%s3 + $0x1260] sm:$0xff]
      %v1650 = vld [vmem:[%s3 + $0x1268] sm:$0xff]
      %v1651 = vld [vmem:[%s3 + $0x1270] sm:$0xff]
      %v1652 = vld [vmem:[%s3 + $0x1278] sm:$0xff]
      %v1653 = vld [vmem:[%s3 + $0x1280] sm:$0xff]
      %v1654 = vld [vmem:[%s3 + $0x1288] sm:$0xff]
      %v1655 = vld [vmem:[%s3 + $0x1290] sm:$0xff]
      %v1656 = vld [vmem:[%s3 + $0x1298] sm:$0xff]
      %v1657 = vld [vmem:[%s3 + $0x12a0] sm:$0xff]
      %v1658 = vld [vmem:[%s3 + $0x12a8] sm:$0xff]
      %v1659 = vld [vmem:[%s3 + $0x12b0] sm:$0xff]
      %v1660 = vld [vmem:[%s3 + $0x12b8] sm:$0xff]
      %v1661 = vld [vmem:[%s3 + $0x12c0] sm:$0xff]
      %v1662 = vld [vmem:[%s3 + $0x12c8] sm:$0xff]
      %v1663 = vld [vmem:[%s3 + $0x12d0] sm:$0xff]
      %v1664 = vld [vmem:[%s3 + $0x12d8] sm:$0xff]
      %v1665 = vld [vmem:[%s3 + $0x12e0] sm:$0xff]
      %v1666 = vld [vmem:[%s3 + $0x12e8] sm:$0xff]
      %v1667 = vld [vmem:[%s3 + $0x12f0] sm:$0xff]
      %v1668 = vld [vmem:[%s3 + $0x12f8] sm:$0xff]
      %v1669 = vld [vmem:[%s3 + $0x1300] sm:$0xff]
      %v1670 = vld [vmem:[%s3 + $0x1308] sm:$0xff]
      %v1671 = vld [vmem:[%s3 + $0x1310] sm:$0xff]
      %v1672 = vld [vmem:[%s3 + $0x1318] sm:$0xff]
      %v1673 = vld [vmem:[%s3 + $0x1320] sm:$0xff]
      %v1674 = vld [vmem:[%s3 + $0x1328] sm:$0xff]
      %v1675 = vld [vmem:[%s3 + $0x1330] sm:$0xff]
      %v1676 = vld [vmem:[%s3 + $0x1338] sm:$0xff]
      %v1677 = vld [vmem:[%s3 + $0x1340] sm:$0xff]
      %v1678 = vld [vmem:[%s3 + $0x1348] sm:$0xff]
      %v1679 = vld [vmem:[%s3 + $0x1350] sm:$0xff]
      %v1680 = vld [vmem:[%s3 + $0x1358] sm:$0xff]
      %v1681 = vld [vmem:[%s3 + $0x1360] sm:$0xff]
      %v1682 = vld [vmem:[%s3 + $0x1368] sm:$0xff]
      %v1683 = vld [vmem:[%s3 + $0x1370] sm:$0xff]
      %v1684 = vld [vmem:[%s3 + $0x1378] sm:$0xff]
      %v1685 = vld [vmem:[%s3 + $0x1380] sm:$0xff]
      %v1686 = vld [vmem:[%s3 + $0x1388] sm:$0xff]
      %v1687 = vld [vmem:[%s3 + $0x1390] sm:$0xff]
      %v1688 = vld [vmem:[%s3 + $0x1398] sm:$0xff]
      %v1689 = vld [vmem:[%s3 + $0x13a0] sm:$0xff]
      %v1690 = vld [vmem:[%s3 + $0x13a8] sm:$0xff]
      %v1691 = vld [vmem:[%s3 + $0x13b0] sm:$0xff]
      %v1692 = vld [vmem:[%s3 + $0x13b8] sm:$0xff]
      %v1693 = vld [vmem:[%s3 + $0x13c0] sm:$0xff]
      %v1694 = vld [vmem:[%s3 + $0x13c8] sm:$0xff]
      %v1695 = vld [vmem:[%s3 + $0x13d0] sm:$0xff]
      %v1696 = vld [vmem:[%s3 + $0x13d8] sm:$0xff]
      %v1697 = vld [vmem:[%s3 + $0x13e0] sm:$0xff]
      %v1698 = vld [vmem:[%s3 + $0x13e8] sm:$0xff]
      %v1699 = vld [vmem:[%s3 + $0x13f0] sm:$0xff]
      %v1700 = vld [vmem:[%s3 + $0x13f8] sm:$0xff]
      %v1701 = vld [vmem:[%s3 + $0x1400] sm:$0xff]
      %v1702 = vld [vmem:[%s3 + $0x1408] sm:$0xff]
      %v1703 = vld [vmem:[%s3 + $0x1410] sm:$0xff]
      %v1704 = vld [vmem:[%s3 + $0x1418] sm:$0xff]
      %v1705 = vld [vmem:[%s3 + $0x1420] sm:$0xff]
      %v1706 = vld [vmem:[%s3 + $0x1428] sm:$0xff]
      %v1707 = vld [vmem:[%s3 + $0x1430] sm:$0xff]
      %v1708 = vld [vmem:[%s3 + $0x1438] sm:$0xff]
      %v1709 = vld [vmem:[%s3 + $0x1440] sm:$0xff]
      %v1710 = vld [vmem:[%s3 + $0x1448] sm:$0xff]
      %v1711 = vld [vmem:[%s3 + $0x1450] sm:$0xff]
      %v1712 = vld [vmem:[%s3 + $0x1458] sm:$0xff]
      %v1713 = vld [vmem:[%s3 + $0x1460] sm:$0xff]
      %v1714 = vld [vmem:[%s3 + $0x1468] sm:$0xff]
      %v1715 = vld [vmem:[%s3 + $0x1470] sm:$0xff]
      %v1716 = vld [vmem:[%s3 + $0x1478] sm:$0xff]
      %v1717 = vld [vmem:[%s3 + $0x1480] sm:$0xff]
      %v1718 = vld [vmem:[%s3 + $0x1488] sm:$0xff]
      %v1719 = vld [vmem:[%s3 + $0x1490] sm:$0xff]
      %v1720 = vld [vmem:[%s3 + $0x1498] sm:$0xff]
      %v1721 = vld [vmem:[%s3 + $0x14a0] sm:$0xff]
      %v1722 = vld [vmem:[%s3 + $0x14a8] sm:$0xff]
      %v1723 = vld [vmem:[%s3 + $0x14b0] sm:$0xff]
      %v1724 = vld [vmem:[%s3 + $0x14b8] sm:$0xff]
      %v1725 = vld [vmem:[%s3 + $0x14c0] sm:$0xff]
      %v1726 = vld [vmem:[%s3 + $0x14c8] sm:$0xff]
      %v1727 = vld [vmem:[%s3 + $0x14d0] sm:$0xff]
      %v1728 = vld [vmem:[%s3 + $0x14d8] sm:$0xff]
      %v1729 = vld [vmem:[%s3 + $0x14e0] sm:$0xff]
      %v1730 = vld [vmem:[%s3 + $0x14e8] sm:$0xff]
      %v1731 = vld [vmem:[%s3 + $0x14f0] sm:$0xff]
      %v1732 = vld [vmem:[%s3 + $0x14f8] sm:$0xff]
      %v1733 = vld [vmem:[%s3 + $0x1500] sm:$0xff]
      %v1734 = vld [vmem:[%s3 + $0x1508] sm:$0xff]
      %v1735 = vld [vmem:[%s3 + $0x1510] sm:$0xff]
      %v1736 = vld [vmem:[%s3 + $0x1518] sm:$0xff]
      %v1737 = vld [vmem:[%s3 + $0x1520] sm:$0xff]
      %v1738 = vld [vmem:[%s3 + $0x1528] sm:$0xff]
      %v1739 = vld [vmem:[%s3 + $0x1530] sm:$0xff]
      %v1740 = vld [vmem:[%s3 + $0x1538] sm:$0xff]
      %v1741 = vld [vmem:[%s3 + $0x1540] sm:$0xff]
      %v1742 = vld [vmem:[%s3 + $0x1548] sm:$0xff]
      %v1743 = vld [vmem:[%s3 + $0x1550] sm:$0xff]
      %v1744 = vld [vmem:[%s3 + $0x1558] sm:$0xff]
      %v1745 = vld [vmem:[%s3 + $0x1560] sm:$0xff]
      %v1746 = vld [vmem:[%s3 + $0x1568] sm:$0xff]
      %v1747 = vld [vmem:[%s3 + $0x1570] sm:$0xff]
      %v1748 = vld [vmem:[%s3 + $0x1578] sm:$0xff]
      %v1749 = vld [vmem:[%s3 + $0x1580] sm:$0xff]
      %v1750 = vld [vmem:[%s3 + $0x1588] sm:$0xff]
      %v1751 = vld [vmem:[%s3 + $0x1590] sm:$0xff]
      %v1752 = vld [vmem:[%s3 + $0x1598] sm:$0xff]
      %v1753 = vld [vmem:[%s3 + $0x15a0] sm:$0xff]
      %v1754 = vld [vmem:[%s3 + $0x15a8] sm:$0xff]
      %v1755 = vld [vmem:[%s3 + $0x15b0] sm:$0xff]
      %v1756 = vld [vmem:[%s3 + $0x15b8] sm:$0xff]
      %v1757 = vld [vmem:[%s3 + $0x15c0] sm:$0xff]
      %v1758 = vld [vmem:[%s3 + $0x15c8] sm:$0xff]
      %v1759 = vld [vmem:[%s3 + $0x15d0] sm:$0xff]
      %v1760 = vld [vmem:[%s3 + $0x15d8] sm:$0xff]
      %v1761 = vld [vmem:[%s3 + $0x15e0] sm:$0xff]
      %v1762 = vld [vmem:[%s3 + $0x15e8] sm:$0xff]
      %v1763 = vld [vmem:[%s3 + $0x15f0] sm:$0xff]
      %v1764 = vld [vmem:[%s3 + $0x15f8] sm:$0xff]
      %v1765 = vld [vmem:[%s3 + $0x1600] sm:$0xff]
      %v1766 = vld [vmem:[%s3 + $0x1608] sm:$0xff]
      %v1767 = vld [vmem:[%s3 + $0x1610] sm:$0xff]
      %v1768 = vld [vmem:[%s3 + $0x1618] sm:$0xff]
      %v1769 = vld [vmem:[%s3 + $0x1620] sm:$0xff]
      %v1770 = vld [vmem:[%s3 + $0x1628] sm:$0xff]
      %v1771 = vld [vmem:[%s3 + $0x1630] sm:$0xff]
      %v1772 = vld [vmem:[%s3 + $0x1638] sm:$0xff]
      %v1773 = vld [vmem:[%s3 + $0x1640] sm:$0xff]
      %v1774 = vld [vmem:[%s3 + $0x1648] sm:$0xff]
      %v1775 = vld [vmem:[%s3 + $0x1650] sm:$0xff]
      %v1776 = vld [vmem:[%s3 + $0x1658] sm:$0xff]
      %v1777 = vld [vmem:[%s3 + $0x1660] sm:$0xff]
      %v1778 = vld [vmem:[%s3 + $0x1668] sm:$0xff]
      %v1779 = vld [vmem:[%s3 + $0x1670] sm:$0xff]
      %v1780 = vld [vmem:[%s3 + $0x1678] sm:$0xff]
      %v1781 = vld [vmem:[%s3 + $0x1680] sm:$0xff]
      %v1782 = vld [vmem:[%s3 + $0x1688] sm:$0xff]
      %v1783 = vld [vmem:[%s3 + $0x1690] sm:$0xff]
      %v1784 = vld [vmem:[%s3 + $0x1698] sm:$0xff]
      %v1785 = vld [vmem:[%s3 + $0x16a0] sm:$0xff]
      %v1786 = vld [vmem:[%s3 + $0x16a8] sm:$0xff]
      %v1787 = vld [vmem:[%s3 + $0x16b0] sm:$0xff]
      %v1788 = vld [vmem:[%s3 + $0x16b8] sm:$0xff]
      %v1789 = vld [vmem:[%s3 + $0x16c0] sm:$0xff]
      %v1790 = vld [vmem:[%s3 + $0x16c8] sm:$0xff]
      %v1791 = vld [vmem:[%s3 + $0x16d0] sm:$0xff]
      %v1792 = vld [vmem:[%s3 + $0x16d8] sm:$0xff]
      %v1793 = vld [vmem:[%s3 + $0x16e0] sm:$0xff]
      %v1794 = vld [vmem:[%s3 + $0x16e8] sm:$0xff]
      %v1795 = vld [vmem:[%s3 + $0x16f0] sm:$0xff]
      %v1796 = vld [vmem:[%s3 + $0x16f8] sm:$0xff]
      %v1797 = vld [vmem:[%s3 + $0x1700] sm:$0xff]
      %v1798 = vld [vmem:[%s3 + $0x1708] sm:$0xff]
      %v1799 = vld [vmem:[%s3 + $0x1710] sm:$0xff]
      %v1800 = vld [vmem:[%s3 + $0x1718] sm:$0xff]
      %v1801 = vld [vmem:[%s3 + $0x1720] sm:$0xff]
      %v1802 = vld [vmem:[%s3 + $0x1728] sm:$0xff]
      %v1803 = vld [vmem:[%s3 + $0x1730] sm:$0xff]
      %v1804 = vld [vmem:[%s3 + $0x1738] sm:$0xff]
      %v1805 = vld [vmem:[%s3 + $0x1740] sm:$0xff]
      %v1806 = vld [vmem:[%s3 + $0x1748] sm:$0xff]
      %v1807 = vld [vmem:[%s3 + $0x1750] sm:$0xff]
      %v1808 = vld [vmem:[%s3 + $0x1758] sm:$0xff]
      %v1809 = vld [vmem:[%s3 + $0x1760] sm:$0xff]
      %v1810 = vld [vmem:[%s3 + $0x1768] sm:$0xff]
      %v1811 = vld [vmem:[%s3 + $0x1770] sm:$0xff]
      %v1812 = vld [vmem:[%s3 + $0x1778] sm:$0xff]
      %v1813 = vld [vmem:[%s3 + $0x1780] sm:$0xff]
      %v1814 = vld [vmem:[%s3 + $0x1788] sm:$0xff]
      %v1815 = vld [vmem:[%s3 + $0x1790] sm:$0xff]
      %v1816 = vld [vmem:[%s3 + $0x1798] sm:$0xff]
      %v1817 = vld [vmem:[%s3 + $0x17a0] sm:$0xff]
      %v1818 = vld [vmem:[%s3 + $0x17a8] sm:$0xff]
      %v1819 = vld [vmem:[%s3 + $0x17b0] sm:$0xff]
      %v1820 = vld [vmem:[%s3 + $0x17b8] sm:$0xff]
      %v1821 = vld [vmem:[%s3 + $0x17c0] sm:$0xff]
      %v1822 = vld [vmem:[%s3 + $0x17c8] sm:$0xff]
      %v1823 = vld [vmem:[%s3 + $0x17d0] sm:$0xff]
      %v1824 = vld [vmem:[%s3 + $0x17d8] sm:$0xff]
      %v1825 = vld [vmem:[%s3 + $0x17e0] sm:$0xff]
      %v1826 = vld [vmem:[%s3 + $0x17e8] sm:$0xff]
      %v1827 = vld [vmem:[%s3 + $0x17f0] sm:$0xff]
      %v1828 = vld [vmem:[%s3 + $0x17f8] sm:$0xff]
      %v2597 = vunpack.c.l.b16 %v1061
      %v2598 = vunpack.c.h.b16 %v1061
      %v2599 = vunpack.c.l.b16 %v1062
      %v2600 = vunpack.c.h.b16 %v1062
      %v2601 = vunpack.c.l.b16 %v1063
      %v2602 = vunpack.c.h.b16 %v1063
      %v2603 = vunpack.c.l.b16 %v1064
      %v2604 = vunpack.c.h.b16 %v1064
      %v2605 = vunpack.c.l.b16 %v1065
      %v2606 = vunpack.c.h.b16 %v1065
      %v2607 = vunpack.c.l.b16 %v1066
      %v2608 = vunpack.c.h.b16 %v1066
      %v2609 = vunpack.c.l.b16 %v1067
      %v2610 = vunpack.c.h.b16 %v1067
      %v2611 = vunpack.c.l.b16 %v1068
      %v2612 = vunpack.c.h.b16 %v1068
      %v2613 = vunpack.c.l.b16 %v1069
      %v2614 = vunpack.c.h.b16 %v1069
      %v2615 = vunpack.c.l.b16 %v1070
      %v2616 = vunpack.c.h.b16 %v1070
      %v2617 = vunpack.c.l.b16 %v1071
      %v2618 = vunpack.c.h.b16 %v1071
      %v2619 = vunpack.c.l.b16 %v1072
      %v2620 = vunpack.c.h.b16 %v1072
      %v2621 = vunpack.c.l.b16 %v1073
      %v2622 = vunpack.c.h.b16 %v1073
      %v2623 = vunpack.c.l.b16 %v1074
      %v2624 = vunpack.c.h.b16 %v1074
      %v2625 = vunpack.c.l.b16 %v1075
      %v2626 = vunpack.c.h.b16 %v1075
      %v2627 = vunpack.c.l.b16 %v1076
      %v2628 = vunpack.c.h.b16 %v1076
      %v2629 = vunpack.c.l.b16 %v1077
      %v2630 = vunpack.c.h.b16 %v1077
      %v2631 = vunpack.c.l.b16 %v1078
      %v2632 = vunpack.c.h.b16 %v1078
      %v2633 = vunpack.c.l.b16 %v1079
      %v2634 = vunpack.c.h.b16 %v1079
      %v2635 = vunpack.c.l.b16 %v1080
      %v2636 = vunpack.c.h.b16 %v1080
      %v2637 = vunpack.c.l.b16 %v1081
      %v2638 = vunpack.c.h.b16 %v1081
      %v2639 = vunpack.c.l.b16 %v1082
      %v2640 = vunpack.c.h.b16 %v1082
      %v2641 = vunpack.c.l.b16 %v1083
      %v2642 = vunpack.c.h.b16 %v1083
      %v2643 = vunpack.c.l.b16 %v1084
      %v2644 = vunpack.c.h.b16 %v1084
      %v2645 = vunpack.c.l.b16 %v1085
      %v2646 = vunpack.c.h.b16 %v1085
      %v2647 = vunpack.c.l.b16 %v1086
      %v2648 = vunpack.c.h.b16 %v1086
      %v2649 = vunpack.c.l.b16 %v1087
      %v2650 = vunpack.c.h.b16 %v1087
      %v2651 = vunpack.c.l.b16 %v1088
      %v2652 = vunpack.c.h.b16 %v1088
      %v2653 = vunpack.c.l.b16 %v1089
      %v2654 = vunpack.c.h.b16 %v1089
      %v2655 = vunpack.c.l.b16 %v1090
      %v2656 = vunpack.c.h.b16 %v1090
      %v2657 = vunpack.c.l.b16 %v1091
      %v2658 = vunpack.c.h.b16 %v1091
      %v2659 = vunpack.c.l.b16 %v1092
      %v2660 = vunpack.c.h.b16 %v1092
      %v2661 = vunpack.c.l.b16 %v1093
      %v2662 = vunpack.c.h.b16 %v1093
      %v2663 = vunpack.c.l.b16 %v1094
      %v2664 = vunpack.c.h.b16 %v1094
      %v2665 = vunpack.c.l.b16 %v1095
      %v2666 = vunpack.c.h.b16 %v1095
      %v2667 = vunpack.c.l.b16 %v1096
      %v2668 = vunpack.c.h.b16 %v1096
      %v2669 = vunpack.c.l.b16 %v1097
      %v2670 = vunpack.c.h.b16 %v1097
      %v2671 = vunpack.c.l.b16 %v1098
      %v2672 = vunpack.c.h.b16 %v1098
      %v2673 = vunpack.c.l.b16 %v1099
      %v2674 = vunpack.c.h.b16 %v1099
      %v2675 = vunpack.c.l.b16 %v1100
      %v2676 = vunpack.c.h.b16 %v1100
      %v2677 = vunpack.c.l.b16 %v1101
      %v2678 = vunpack.c.h.b16 %v1101
      %v2679 = vunpack.c.l.b16 %v1102
      %v2680 = vunpack.c.h.b16 %v1102
      %v2681 = vunpack.c.l.b16 %v1103
      %v2682 = vunpack.c.h.b16 %v1103
      %v2683 = vunpack.c.l.b16 %v1104
      %v2684 = vunpack.c.h.b16 %v1104
      %v2685 = vunpack.c.l.b16 %v1105
      %v2686 = vunpack.c.h.b16 %v1105
      %v2687 = vunpack.c.l.b16 %v1106
      %v2688 = vunpack.c.h.b16 %v1106
      %v2689 = vunpack.c.l.b16 %v1107
      %v2690 = vunpack.c.h.b16 %v1107
      %v2691 = vunpack.c.l.b16 %v1108
      %v2692 = vunpack.c.h.b16 %v1108
      %v2693 = vunpack.c.l.b16 %v1109
      %v2694 = vunpack.c.h.b16 %v1109
      %v2695 = vunpack.c.l.b16 %v1110
      %v2696 = vunpack.c.h.b16 %v1110
      %v2697 = vunpack.c.l.b16 %v1111
      %v2698 = vunpack.c.h.b16 %v1111
      %v2699 = vunpack.c.l.b16 %v1112
      %v2700 = vunpack.c.h.b16 %v1112
      %v2701 = vunpack.c.l.b16 %v1113
      %v2702 = vunpack.c.h.b16 %v1113
      %v2703 = vunpack.c.l.b16 %v1114
      %v2704 = vunpack.c.h.b16 %v1114
      %v2705 = vunpack.c.l.b16 %v1115
      %v2706 = vunpack.c.h.b16 %v1115
      %v2707 = vunpack.c.l.b16 %v1116
      %v2708 = vunpack.c.h.b16 %v1116
      %v2709 = vunpack.c.l.b16 %v1117
      %v2710 = vunpack.c.h.b16 %v1117
      %v2711 = vunpack.c.l.b16 %v1118
      %v2712 = vunpack.c.h.b16 %v1118
      %v2713 = vunpack.c.l.b16 %v1119
      %v2714 = vunpack.c.h.b16 %v1119
      %v2715 = vunpack.c.l.b16 %v1120
      %v2716 = vunpack.c.h.b16 %v1120
      %v2717 = vunpack.c.l.b16 %v1121
      %v2718 = vunpack.c.h.b16 %v1121
      %v2719 = vunpack.c.l.b16 %v1122
      %v2720 = vunpack.c.h.b16 %v1122
      %v2721 = vunpack.c.l.b16 %v1123
      %v2722 = vunpack.c.h.b16 %v1123
      %v2723 = vunpack.c.l.b16 %v1124
      %v2724 = vunpack.c.h.b16 %v1124
      %v2725 = vunpack.c.l.b16 %v1125
      %v2726 = vunpack.c.h.b16 %v1125
      %v2727 = vunpack.c.l.b16 %v1126
      %v2728 = vunpack.c.h.b16 %v1126
      %v2729 = vunpack.c.l.b16 %v1127
      %v2730 = vunpack.c.h.b16 %v1127
      %v2731 = vunpack.c.l.b16 %v1128
      %v2732 = vunpack.c.h.b16 %v1128
      %v2733 = vunpack.c.l.b16 %v1129
      %v2734 = vunpack.c.h.b16 %v1129
      %v2735 = vunpack.c.l.b16 %v1130
      %v2736 = vunpack.c.h.b16 %v1130
      %v2737 = vunpack.c.l.b16 %v1131
      %v2738 = vunpack.c.h.b16 %v1131
      %v2739 = vunpack.c.l.b16 %v1132
      %v2740 = vunpack.c.h.b16 %v1132
      %v2741 = vunpack.c.l.b16 %v1133
      %v2742 = vunpack.c.h.b16 %v1133
      %v2743 = vunpack.c.l.b16 %v1134
      %v2744 = vunpack.c.h.b16 %v1134
      %v2745 = vunpack.c.l.b16 %v1135
      %v2746 = vunpack.c.h.b16 %v1135
      %v2747 = vunpack.c.l.b16 %v1136
      %v2748 = vunpack.c.h.b16 %v1136
      %v2749 = vunpack.c.l.b16 %v1137
      %v2750 = vunpack.c.h.b16 %v1137
      %v2751 = vunpack.c.l.b16 %v1138
      %v2752 = vunpack.c.h.b16 %v1138
      %v2753 = vunpack.c.l.b16 %v1139
      %v2754 = vunpack.c.h.b16 %v1139
      %v2755 = vunpack.c.l.b16 %v1140
      %v2756 = vunpack.c.h.b16 %v1140
      %v2757 = vunpack.c.l.b16 %v1141
      %v2758 = vunpack.c.h.b16 %v1141
      %v2759 = vunpack.c.l.b16 %v1142
      %v2760 = vunpack.c.h.b16 %v1142
      %v2761 = vunpack.c.l.b16 %v1143
      %v2762 = vunpack.c.h.b16 %v1143
      %v2763 = vunpack.c.l.b16 %v1144
      %v2764 = vunpack.c.h.b16 %v1144
      %v2765 = vunpack.c.l.b16 %v1145
      %v2766 = vunpack.c.h.b16 %v1145
      %v2767 = vunpack.c.l.b16 %v1146
      %v2768 = vunpack.c.h.b16 %v1146
      %v2769 = vunpack.c.l.b16 %v1147
      %v2770 = vunpack.c.h.b16 %v1147
      %v2771 = vunpack.c.l.b16 %v1148
      %v2772 = vunpack.c.h.b16 %v1148
      %v2773 = vunpack.c.l.b16 %v1149
      %v2774 = vunpack.c.h.b16 %v1149
      %v2775 = vunpack.c.l.b16 %v1150
      %v2776 = vunpack.c.h.b16 %v1150
      %v2777 = vunpack.c.l.b16 %v1151
      %v2778 = vunpack.c.h.b16 %v1151
      %v2779 = vunpack.c.l.b16 %v1152
      %v2780 = vunpack.c.h.b16 %v1152
      %v2781 = vunpack.c.l.b16 %v1153
      %v2782 = vunpack.c.h.b16 %v1153
      %v2783 = vunpack.c.l.b16 %v1154
      %v2784 = vunpack.c.h.b16 %v1154
      %v2785 = vunpack.c.l.b16 %v1155
      %v2786 = vunpack.c.h.b16 %v1155
      %v2787 = vunpack.c.l.b16 %v1156
      %v2788 = vunpack.c.h.b16 %v1156
      %v2789 = vunpack.c.l.b16 %v1157
      %v2790 = vunpack.c.h.b16 %v1157
      %v2791 = vunpack.c.l.b16 %v1158
      %v2792 = vunpack.c.h.b16 %v1158
      %v2793 = vunpack.c.l.b16 %v1159
      %v2794 = vunpack.c.h.b16 %v1159
      %v2795 = vunpack.c.l.b16 %v1160
      %v2796 = vunpack.c.h.b16 %v1160
      %v2797 = vunpack.c.l.b16 %v1161
      %v2798 = vunpack.c.h.b16 %v1161
      %v2799 = vunpack.c.l.b16 %v1162
      %v2800 = vunpack.c.h.b16 %v1162
      %v2801 = vunpack.c.l.b16 %v1163
      %v2802 = vunpack.c.h.b16 %v1163
      %v2803 = vunpack.c.l.b16 %v1164
      %v2804 = vunpack.c.h.b16 %v1164
      %v2805 = vunpack.c.l.b16 %v1165
      %v2806 = vunpack.c.h.b16 %v1165
      %v2807 = vunpack.c.l.b16 %v1166
      %v2808 = vunpack.c.h.b16 %v1166
      %v2809 = vunpack.c.l.b16 %v1167
      %v2810 = vunpack.c.h.b16 %v1167
      %v2811 = vunpack.c.l.b16 %v1168
      %v2812 = vunpack.c.h.b16 %v1168
      %v2813 = vunpack.c.l.b16 %v1169
      %v2814 = vunpack.c.h.b16 %v1169
      %v2815 = vunpack.c.l.b16 %v1170
      %v2816 = vunpack.c.h.b16 %v1170
      %v2817 = vunpack.c.l.b16 %v1171
      %v2818 = vunpack.c.h.b16 %v1171
      %v2819 = vunpack.c.l.b16 %v1172
      %v2820 = vunpack.c.h.b16 %v1172
      %v2821 = vunpack.c.l.b16 %v1173
      %v2822 = vunpack.c.h.b16 %v1173
      %v2823 = vunpack.c.l.b16 %v1174
      %v2824 = vunpack.c.h.b16 %v1174
      %v2825 = vunpack.c.l.b16 %v1175
      %v2826 = vunpack.c.h.b16 %v1175
      %v2827 = vunpack.c.l.b16 %v1176
      %v2828 = vunpack.c.h.b16 %v1176
      %v2829 = vunpack.c.l.b16 %v1177
      %v2830 = vunpack.c.h.b16 %v1177
      %v2831 = vunpack.c.l.b16 %v1178
      %v2832 = vunpack.c.h.b16 %v1178
      %v2833 = vunpack.c.l.b16 %v1179
      %v2834 = vunpack.c.h.b16 %v1179
      %v2835 = vunpack.c.l.b16 %v1180
      %v2836 = vunpack.c.h.b16 %v1180
      %v2837 = vunpack.c.l.b16 %v1181
      %v2838 = vunpack.c.h.b16 %v1181
      %v2839 = vunpack.c.l.b16 %v1182
      %v2840 = vunpack.c.h.b16 %v1182
      %v2841 = vunpack.c.l.b16 %v1183
      %v2842 = vunpack.c.h.b16 %v1183
      %v2843 = vunpack.c.l.b16 %v1184
      %v2844 = vunpack.c.h.b16 %v1184
      %v2845 = vunpack.c.l.b16 %v1185
      %v2846 = vunpack.c.h.b16 %v1185
      %v2847 = vunpack.c.l.b16 %v1186
      %v2848 = vunpack.c.h.b16 %v1186
      %v2849 = vunpack.c.l.b16 %v1187
      %v2850 = vunpack.c.h.b16 %v1187
      %v2851 = vunpack.c.l.b16 %v1188
      %v2852 = vunpack.c.h.b16 %v1188
      %v2853 = vunpack.c.l.b16 %v1189
      %v2854 = vunpack.c.h.b16 %v1189
      %v2855 = vunpack.c.l.b16 %v1190
      %v2856 = vunpack.c.h.b16 %v1190
      %v2857 = vunpack.c.l.b16 %v1191
      %v2858 = vunpack.c.h.b16 %v1191
      %v2859 = vunpack.c.l.b16 %v1192
      %v2860 = vunpack.c.h.b16 %v1192
      %v2861 = vunpack.c.l.b16 %v1193
      %v2862 = vunpack.c.h.b16 %v1193
      %v2863 = vunpack.c.l.b16 %v1194
      %v2864 = vunpack.c.h.b16 %v1194
      %v2865 = vunpack.c.l.b16 %v1195
      %v2866 = vunpack.c.h.b16 %v1195
      %v2867 = vunpack.c.l.b16 %v1196
      %v2868 = vunpack.c.h.b16 %v1196
      %v2869 = vunpack.c.l.b16 %v1197
      %v2870 = vunpack.c.h.b16 %v1197
      %v2871 = vunpack.c.l.b16 %v1198
      %v2872 = vunpack.c.h.b16 %v1198
      %v2873 = vunpack.c.l.b16 %v1199
      %v2874 = vunpack.c.h.b16 %v1199
      %v2875 = vunpack.c.l.b16 %v1200
      %v2876 = vunpack.c.h.b16 %v1200
      %v2877 = vunpack.c.l.b16 %v1201
      %v2878 = vunpack.c.h.b16 %v1201
      %v2879 = vunpack.c.l.b16 %v1202
      %v2880 = vunpack.c.h.b16 %v1202
      %v2881 = vunpack.c.l.b16 %v1203
      %v2882 = vunpack.c.h.b16 %v1203
      %v2883 = vunpack.c.l.b16 %v1204
      %v2884 = vunpack.c.h.b16 %v1204
      %v2885 = vunpack.c.l.b16 %v1205
      %v2886 = vunpack.c.h.b16 %v1205
      %v2887 = vunpack.c.l.b16 %v1206
      %v2888 = vunpack.c.h.b16 %v1206
      %v2889 = vunpack.c.l.b16 %v1207
      %v2890 = vunpack.c.h.b16 %v1207
      %v2891 = vunpack.c.l.b16 %v1208
      %v2892 = vunpack.c.h.b16 %v1208
      %v2893 = vunpack.c.l.b16 %v1209
      %v2894 = vunpack.c.h.b16 %v1209
      %v2895 = vunpack.c.l.b16 %v1210
      %v2896 = vunpack.c.h.b16 %v1210
      %v2897 = vunpack.c.l.b16 %v1211
      %v2898 = vunpack.c.h.b16 %v1211
      %v2899 = vunpack.c.l.b16 %v1212
      %v2900 = vunpack.c.h.b16 %v1212
      %v2901 = vunpack.c.l.b16 %v1213
      %v2902 = vunpack.c.h.b16 %v1213
      %v2903 = vunpack.c.l.b16 %v1214
      %v2904 = vunpack.c.h.b16 %v1214
      %v2905 = vunpack.c.l.b16 %v1215
      %v2906 = vunpack.c.h.b16 %v1215
      %v2907 = vunpack.c.l.b16 %v1216
      %v2908 = vunpack.c.h.b16 %v1216
      %v2909 = vunpack.c.l.b16 %v1217
      %v2910 = vunpack.c.h.b16 %v1217
      %v2911 = vunpack.c.l.b16 %v1218
      %v2912 = vunpack.c.h.b16 %v1218
      %v2913 = vunpack.c.l.b16 %v1219
      %v2914 = vunpack.c.h.b16 %v1219
      %v2915 = vunpack.c.l.b16 %v1220
      %v2916 = vunpack.c.h.b16 %v1220
      %v2917 = vunpack.c.l.b16 %v1221
      %v2918 = vunpack.c.h.b16 %v1221
      %v2919 = vunpack.c.l.b16 %v1222
      %v2920 = vunpack.c.h.b16 %v1222
      %v2921 = vunpack.c.l.b16 %v1223
      %v2922 = vunpack.c.h.b16 %v1223
      %v2923 = vunpack.c.l.b16 %v1224
      %v2924 = vunpack.c.h.b16 %v1224
      %v2925 = vunpack.c.l.b16 %v1225
      %v2926 = vunpack.c.h.b16 %v1225
      %v2927 = vunpack.c.l.b16 %v1226
      %v2928 = vunpack.c.h.b16 %v1226
      %v2929 = vunpack.c.l.b16 %v1227
      %v2930 = vunpack.c.h.b16 %v1227
      %v2931 = vunpack.c.l.b16 %v1228
      %v2932 = vunpack.c.h.b16 %v1228
      %v2933 = vunpack.c.l.b16 %v1229
      %v2934 = vunpack.c.h.b16 %v1229
      %v2935 = vunpack.c.l.b16 %v1230
      %v2936 = vunpack.c.h.b16 %v1230
      %v2937 = vunpack.c.l.b16 %v1231
      %v2938 = vunpack.c.h.b16 %v1231
      %v2939 = vunpack.c.l.b16 %v1232
      %v2940 = vunpack.c.h.b16 %v1232
      %v2941 = vunpack.c.l.b16 %v1233
      %v2942 = vunpack.c.h.b16 %v1233
      %v2943 = vunpack.c.l.b16 %v1234
      %v2944 = vunpack.c.h.b16 %v1234
      %v2945 = vunpack.c.l.b16 %v1235
      %v2946 = vunpack.c.h.b16 %v1235
      %v2947 = vunpack.c.l.b16 %v1236
      %v2948 = vunpack.c.h.b16 %v1236
      %v2949 = vunpack.c.l.b16 %v1237
      %v2950 = vunpack.c.h.b16 %v1237
      %v2951 = vunpack.c.l.b16 %v1238
      %v2952 = vunpack.c.h.b16 %v1238
      %v2953 = vunpack.c.l.b16 %v1239
      %v2954 = vunpack.c.h.b16 %v1239
      %v2955 = vunpack.c.l.b16 %v1240
      %v2956 = vunpack.c.h.b16 %v1240
      %v2957 = vunpack.c.l.b16 %v1241
      %v2958 = vunpack.c.h.b16 %v1241
      %v2959 = vunpack.c.l.b16 %v1242
      %v2960 = vunpack.c.h.b16 %v1242
      %v2961 = vunpack.c.l.b16 %v1243
      %v2962 = vunpack.c.h.b16 %v1243
      %v2963 = vunpack.c.l.b16 %v1244
      %v2964 = vunpack.c.h.b16 %v1244
      %v2965 = vunpack.c.l.b16 %v1245
      %v2966 = vunpack.c.h.b16 %v1245
      %v2967 = vunpack.c.l.b16 %v1246
      %v2968 = vunpack.c.h.b16 %v1246
      %v2969 = vunpack.c.l.b16 %v1247
      %v2970 = vunpack.c.h.b16 %v1247
      %v2971 = vunpack.c.l.b16 %v1248
      %v2972 = vunpack.c.h.b16 %v1248
      %v2973 = vunpack.c.l.b16 %v1249
      %v2974 = vunpack.c.h.b16 %v1249
      %v2975 = vunpack.c.l.b16 %v1250
      %v2976 = vunpack.c.h.b16 %v1250
      %v2977 = vunpack.c.l.b16 %v1251
      %v2978 = vunpack.c.h.b16 %v1251
      %v2979 = vunpack.c.l.b16 %v1252
      %v2980 = vunpack.c.h.b16 %v1252
      %v2981 = vunpack.c.l.b16 %v1253
      %v2982 = vunpack.c.h.b16 %v1253
      %v2983 = vunpack.c.l.b16 %v1254
      %v2984 = vunpack.c.h.b16 %v1254
      %v2985 = vunpack.c.l.b16 %v1255
      %v2986 = vunpack.c.h.b16 %v1255
      %v2987 = vunpack.c.l.b16 %v1256
      %v2988 = vunpack.c.h.b16 %v1256
      %v2989 = vunpack.c.l.b16 %v1257
      %v2990 = vunpack.c.h.b16 %v1257
      %v2991 = vunpack.c.l.b16 %v1258
      %v2992 = vunpack.c.h.b16 %v1258
      %v2993 = vunpack.c.l.b16 %v1259
      %v2994 = vunpack.c.h.b16 %v1259
      %v2995 = vunpack.c.l.b16 %v1260
      %v2996 = vunpack.c.h.b16 %v1260
      %v2997 = vunpack.c.l.b16 %v1261
      %v2998 = vunpack.c.h.b16 %v1261
      %v2999 = vunpack.c.l.b16 %v1262
      %v3000 = vunpack.c.h.b16 %v1262
      %v3001 = vunpack.c.l.b16 %v1263
      %v3002 = vunpack.c.h.b16 %v1263
      %v3003 = vunpack.c.l.b16 %v1264
      %v3004 = vunpack.c.h.b16 %v1264
      %v3005 = vunpack.c.l.b16 %v1265
      %v3006 = vunpack.c.h.b16 %v1265
      %v3007 = vunpack.c.l.b16 %v1266
      %v3008 = vunpack.c.h.b16 %v1266
      %v3009 = vunpack.c.l.b16 %v1267
      %v3010 = vunpack.c.h.b16 %v1267
      %v3011 = vunpack.c.l.b16 %v1268
      %v3012 = vunpack.c.h.b16 %v1268
      %v3013 = vunpack.c.l.b16 %v1269
      %v3014 = vunpack.c.h.b16 %v1269
      %v3015 = vunpack.c.l.b16 %v1270
      %v3016 = vunpack.c.h.b16 %v1270
      %v3017 = vunpack.c.l.b16 %v1271
      %v3018 = vunpack.c.h.b16 %v1271
      %v3019 = vunpack.c.l.b16 %v1272
      %v3020 = vunpack.c.h.b16 %v1272
      %v3021 = vunpack.c.l.b16 %v1273
      %v3022 = vunpack.c.h.b16 %v1273
      %v3023 = vunpack.c.l.b16 %v1274
      %v3024 = vunpack.c.h.b16 %v1274
      %v3025 = vunpack.c.l.b16 %v1275
      %v3026 = vunpack.c.h.b16 %v1275
      %v3027 = vunpack.c.l.b16 %v1276
      %v3028 = vunpack.c.h.b16 %v1276
      %v3029 = vunpack.c.l.b16 %v1277
      %v3030 = vunpack.c.h.b16 %v1277
      %v3031 = vunpack.c.l.b16 %v1278
      %v3032 = vunpack.c.h.b16 %v1278
      %v3033 = vunpack.c.l.b16 %v1279
      %v3034 = vunpack.c.h.b16 %v1279
      %v3035 = vunpack.c.l.b16 %v1280
      %v3036 = vunpack.c.h.b16 %v1280
      %v3037 = vunpack.c.l.b16 %v1281
      %v3038 = vunpack.c.h.b16 %v1281
      %v3039 = vunpack.c.l.b16 %v1282
      %v3040 = vunpack.c.h.b16 %v1282
      %v3041 = vunpack.c.l.b16 %v1283
      %v3042 = vunpack.c.h.b16 %v1283
      %v3043 = vunpack.c.l.b16 %v1284
      %v3044 = vunpack.c.h.b16 %v1284
      %v3045 = vunpack.c.l.b16 %v1285
      %v3046 = vunpack.c.h.b16 %v1285
      %v3047 = vunpack.c.l.b16 %v1286
      %v3048 = vunpack.c.h.b16 %v1286
      %v3049 = vunpack.c.l.b16 %v1287
      %v3050 = vunpack.c.h.b16 %v1287
      %v3051 = vunpack.c.l.b16 %v1288
      %v3052 = vunpack.c.h.b16 %v1288
      %v3053 = vunpack.c.l.b16 %v1289
      %v3054 = vunpack.c.h.b16 %v1289
      %v3055 = vunpack.c.l.b16 %v1290
      %v3056 = vunpack.c.h.b16 %v1290
      %v3057 = vunpack.c.l.b16 %v1291
      %v3058 = vunpack.c.h.b16 %v1291
      %v3059 = vunpack.c.l.b16 %v1292
      %v3060 = vunpack.c.h.b16 %v1292
      %v3061 = vunpack.c.l.b16 %v1293
      %v3062 = vunpack.c.h.b16 %v1293
      %v3063 = vunpack.c.l.b16 %v1294
      %v3064 = vunpack.c.h.b16 %v1294
      %v3065 = vunpack.c.l.b16 %v1295
      %v3066 = vunpack.c.h.b16 %v1295
      %v3067 = vunpack.c.l.b16 %v1296
      %v3068 = vunpack.c.h.b16 %v1296
      %v3069 = vunpack.c.l.b16 %v1297
      %v3070 = vunpack.c.h.b16 %v1297
      %v3071 = vunpack.c.l.b16 %v1298
      %v3072 = vunpack.c.h.b16 %v1298
      %v3073 = vunpack.c.l.b16 %v1299
      %v3074 = vunpack.c.h.b16 %v1299
      %v3075 = vunpack.c.l.b16 %v1300
      %v3076 = vunpack.c.h.b16 %v1300
      %v3077 = vunpack.c.l.b16 %v1301
      %v3078 = vunpack.c.h.b16 %v1301
      %v3079 = vunpack.c.l.b16 %v1302
      %v3080 = vunpack.c.h.b16 %v1302
      %v3081 = vunpack.c.l.b16 %v1303
      %v3082 = vunpack.c.h.b16 %v1303
      %v3083 = vunpack.c.l.b16 %v1304
      %v3084 = vunpack.c.h.b16 %v1304
      %v3085 = vunpack.c.l.b16 %v1305
      %v3086 = vunpack.c.h.b16 %v1305
      %v3087 = vunpack.c.l.b16 %v1306
      %v3088 = vunpack.c.h.b16 %v1306
      %v3089 = vunpack.c.l.b16 %v1307
      %v3090 = vunpack.c.h.b16 %v1307
      %v3091 = vunpack.c.l.b16 %v1308
      %v3092 = vunpack.c.h.b16 %v1308
      %v3093 = vunpack.c.l.b16 %v1309
      %v3094 = vunpack.c.h.b16 %v1309
      %v3095 = vunpack.c.l.b16 %v1310
      %v3096 = vunpack.c.h.b16 %v1310
      %v3097 = vunpack.c.l.b16 %v1311
      %v3098 = vunpack.c.h.b16 %v1311
      %v3099 = vunpack.c.l.b16 %v1312
      %v3100 = vunpack.c.h.b16 %v1312
      %v3101 = vunpack.c.l.b16 %v1313
      %v3102 = vunpack.c.h.b16 %v1313
      %v3103 = vunpack.c.l.b16 %v1314
      %v3104 = vunpack.c.h.b16 %v1314
      %v3105 = vunpack.c.l.b16 %v1315
      %v3106 = vunpack.c.h.b16 %v1315
      %v3107 = vunpack.c.l.b16 %v1316
      %v3108 = vunpack.c.h.b16 %v1316
      %v3109 = vunpack.c.l.b16 %v1317
      %v3110 = vunpack.c.h.b16 %v1317
      %v3111 = vunpack.c.l.b16 %v1318
      %v3112 = vunpack.c.h.b16 %v1318
      %v3113 = vunpack.c.l.b16 %v1319
      %v3114 = vunpack.c.h.b16 %v1319
      %v3115 = vunpack.c.l.b16 %v1320
      %v3116 = vunpack.c.h.b16 %v1320
      %v3117 = vunpack.c.l.b16 %v1321
      %v3118 = vunpack.c.h.b16 %v1321
      %v3119 = vunpack.c.l.b16 %v1322
      %v3120 = vunpack.c.h.b16 %v1322
      %v3121 = vunpack.c.l.b16 %v1323
      %v3122 = vunpack.c.h.b16 %v1323
      %v3123 = vunpack.c.l.b16 %v1324
      %v3124 = vunpack.c.h.b16 %v1324
      %v3125 = vunpack.c.l.b16 %v1325
      %v3126 = vunpack.c.h.b16 %v1325
      %v3127 = vunpack.c.l.b16 %v1326
      %v3128 = vunpack.c.h.b16 %v1326
      %v3129 = vunpack.c.l.b16 %v1327
      %v3130 = vunpack.c.h.b16 %v1327
      %v3131 = vunpack.c.l.b16 %v1328
      %v3132 = vunpack.c.h.b16 %v1328
      %v3133 = vunpack.c.l.b16 %v1329
      %v3134 = vunpack.c.h.b16 %v1329
      %v3135 = vunpack.c.l.b16 %v1330
      %v3136 = vunpack.c.h.b16 %v1330
      %v3137 = vunpack.c.l.b16 %v1331
      %v3138 = vunpack.c.h.b16 %v1331
      %v3139 = vunpack.c.l.b16 %v1332
      %v3140 = vunpack.c.h.b16 %v1332
      %v3141 = vunpack.c.l.b16 %v1333
      %v3142 = vunpack.c.h.b16 %v1333
      %v3143 = vunpack.c.l.b16 %v1334
      %v3144 = vunpack.c.h.b16 %v1334
      %v3145 = vunpack.c.l.b16 %v1335
      %v3146 = vunpack.c.h.b16 %v1335
      %v3147 = vunpack.c.l.b16 %v1336
      %v3148 = vunpack.c.h.b16 %v1336
      %v3149 = vunpack.c.l.b16 %v1337
      %v3150 = vunpack.c.h.b16 %v1337
      %v3151 = vunpack.c.l.b16 %v1338
      %v3152 = vunpack.c.h.b16 %v1338
      %v3153 = vunpack.c.l.b16 %v1339
      %v3154 = vunpack.c.h.b16 %v1339
      %v3155 = vunpack.c.l.b16 %v1340
      %v3156 = vunpack.c.h.b16 %v1340
      %v3157 = vunpack.c.l.b16 %v1341
      %v3158 = vunpack.c.h.b16 %v1341
      %v3159 = vunpack.c.l.b16 %v1342
      %v3160 = vunpack.c.h.b16 %v1342
      %v3161 = vunpack.c.l.b16 %v1343
      %v3162 = vunpack.c.h.b16 %v1343
      %v3163 = vunpack.c.l.b16 %v1344
      %v3164 = vunpack.c.h.b16 %v1344
      %v3165 = vunpack.c.l.b16 %v1345
      %v3166 = vunpack.c.h.b16 %v1345
      %v3167 = vunpack.c.l.b16 %v1346
      %v3168 = vunpack.c.h.b16 %v1346
      %v3169 = vunpack.c.l.b16 %v1347
      %v3170 = vunpack.c.h.b16 %v1347
      %v3171 = vunpack.c.l.b16 %v1348
      %v3172 = vunpack.c.h.b16 %v1348
      %v3173 = vunpack.c.l.b16 %v1349
      %v3174 = vunpack.c.h.b16 %v1349
      %v3175 = vunpack.c.l.b16 %v1350
      %v3176 = vunpack.c.h.b16 %v1350
      %v3177 = vunpack.c.l.b16 %v1351
      %v3178 = vunpack.c.h.b16 %v1351
      %v3179 = vunpack.c.l.b16 %v1352
      %v3180 = vunpack.c.h.b16 %v1352
      %v3181 = vunpack.c.l.b16 %v1353
      %v3182 = vunpack.c.h.b16 %v1353
      %v3183 = vunpack.c.l.b16 %v1354
      %v3184 = vunpack.c.h.b16 %v1354
      %v3185 = vunpack.c.l.b16 %v1355
      %v3186 = vunpack.c.h.b16 %v1355
      %v3187 = vunpack.c.l.b16 %v1356
      %v3188 = vunpack.c.h.b16 %v1356
      %v3189 = vunpack.c.l.b16 %v1357
      %v3190 = vunpack.c.h.b16 %v1357
      %v3191 = vunpack.c.l.b16 %v1358
      %v3192 = vunpack.c.h.b16 %v1358
      %v3193 = vunpack.c.l.b16 %v1359
      %v3194 = vunpack.c.h.b16 %v1359
      %v3195 = vunpack.c.l.b16 %v1360
      %v3196 = vunpack.c.h.b16 %v1360
      %v3197 = vunpack.c.l.b16 %v1361
      %v3198 = vunpack.c.h.b16 %v1361
      %v3199 = vunpack.c.l.b16 %v1362
      %v3200 = vunpack.c.h.b16 %v1362
      %v3201 = vunpack.c.l.b16 %v1363
      %v3202 = vunpack.c.h.b16 %v1363
      %v3203 = vunpack.c.l.b16 %v1364
      %v3204 = vunpack.c.h.b16 %v1364
      %v3205 = vunpack.c.l.b16 %v1365
      %v3206 = vunpack.c.h.b16 %v1365
      %v3207 = vunpack.c.l.b16 %v1366
      %v3208 = vunpack.c.h.b16 %v1366
      %v3209 = vunpack.c.l.b16 %v1367
      %v3210 = vunpack.c.h.b16 %v1367
      %v3211 = vunpack.c.l.b16 %v1368
      %v3212 = vunpack.c.h.b16 %v1368
      %v3213 = vunpack.c.l.b16 %v1369
      %v3214 = vunpack.c.h.b16 %v1369
      %v3215 = vunpack.c.l.b16 %v1370
      %v3216 = vunpack.c.h.b16 %v1370
      %v3217 = vunpack.c.l.b16 %v1371
      %v3218 = vunpack.c.h.b16 %v1371
      %v3219 = vunpack.c.l.b16 %v1372
      %v3220 = vunpack.c.h.b16 %v1372
      %v3221 = vunpack.c.l.b16 %v1373
      %v3222 = vunpack.c.h.b16 %v1373
      %v3223 = vunpack.c.l.b16 %v1374
      %v3224 = vunpack.c.h.b16 %v1374
      %v3225 = vunpack.c.l.b16 %v1375
      %v3226 = vunpack.c.h.b16 %v1375
      %v3227 = vunpack.c.l.b16 %v1376
      %v3228 = vunpack.c.h.b16 %v1376
      %v3229 = vunpack.c.l.b16 %v1377
      %v3230 = vunpack.c.h.b16 %v1377
      %v3231 = vunpack.c.l.b16 %v1378
      %v3232 = vunpack.c.h.b16 %v1378
      %v3233 = vunpack.c.l.b16 %v1379
      %v3234 = vunpack.c.h.b16 %v1379
      %v3235 = vunpack.c.l.b16 %v1380
      %v3236 = vunpack.c.h.b16 %v1380
      %v3237 = vunpack.c.l.b16 %v1381
      %v3238 = vunpack.c.h.b16 %v1381
      %v3239 = vunpack.c.l.b16 %v1382
      %v3240 = vunpack.c.h.b16 %v1382
      %v3241 = vunpack.c.l.b16 %v1383
      %v3242 = vunpack.c.h.b16 %v1383
      %v3243 = vunpack.c.l.b16 %v1384
      %v3244 = vunpack.c.h.b16 %v1384
      %v3245 = vunpack.c.l.b16 %v1385
      %v3246 = vunpack.c.h.b16 %v1385
      %v3247 = vunpack.c.l.b16 %v1386
      %v3248 = vunpack.c.h.b16 %v1386
      %v3249 = vunpack.c.l.b16 %v1387
      %v3250 = vunpack.c.h.b16 %v1387
      %v3251 = vunpack.c.l.b16 %v1388
      %v3252 = vunpack.c.h.b16 %v1388
      %v3253 = vunpack.c.l.b16 %v1389
      %v3254 = vunpack.c.h.b16 %v1389
      %v3255 = vunpack.c.l.b16 %v1390
      %v3256 = vunpack.c.h.b16 %v1390
      %v3257 = vunpack.c.l.b16 %v1391
      %v3258 = vunpack.c.h.b16 %v1391
      %v3259 = vunpack.c.l.b16 %v1392
      %v3260 = vunpack.c.h.b16 %v1392
      %v3261 = vunpack.c.l.b16 %v1393
      %v3262 = vunpack.c.h.b16 %v1393
      %v3263 = vunpack.c.l.b16 %v1394
      %v3264 = vunpack.c.h.b16 %v1394
      %v3265 = vunpack.c.l.b16 %v1395
      %v3266 = vunpack.c.h.b16 %v1395
      %v3267 = vunpack.c.l.b16 %v1396
      %v3268 = vunpack.c.h.b16 %v1396
      %v3269 = vunpack.c.l.b16 %v1397
      %v3270 = vunpack.c.h.b16 %v1397
      %v3271 = vunpack.c.l.b16 %v1398
      %v3272 = vunpack.c.h.b16 %v1398
      %v3273 = vunpack.c.l.b16 %v1399
      %v3274 = vunpack.c.h.b16 %v1399
      %v3275 = vunpack.c.l.b16 %v1400
      %v3276 = vunpack.c.h.b16 %v1400
      %v3277 = vunpack.c.l.b16 %v1401
      %v3278 = vunpack.c.h.b16 %v1401
      %v3279 = vunpack.c.l.b16 %v1402
      %v3280 = vunpack.c.h.b16 %v1402
      %v3281 = vunpack.c.l.b16 %v1403
      %v3282 = vunpack.c.h.b16 %v1403
      %v3283 = vunpack.c.l.b16 %v1404
      %v3284 = vunpack.c.h.b16 %v1404
      %v3285 = vunpack.c.l.b16 %v1405
      %v3286 = vunpack.c.h.b16 %v1405
      %v3287 = vunpack.c.l.b16 %v1406
      %v3288 = vunpack.c.h.b16 %v1406
      %v3289 = vunpack.c.l.b16 %v1407
      %v3290 = vunpack.c.h.b16 %v1407
      %v3291 = vunpack.c.l.b16 %v1408
      %v3292 = vunpack.c.h.b16 %v1408
      %v3293 = vunpack.c.l.b16 %v1409
      %v3294 = vunpack.c.h.b16 %v1409
      %v3295 = vunpack.c.l.b16 %v1410
      %v3296 = vunpack.c.h.b16 %v1410
      %v3297 = vunpack.c.l.b16 %v1411
      %v3298 = vunpack.c.h.b16 %v1411
      %v3299 = vunpack.c.l.b16 %v1412
      %v3300 = vunpack.c.h.b16 %v1412
      %v3301 = vunpack.c.l.b16 %v1413
      %v3302 = vunpack.c.h.b16 %v1413
      %v3303 = vunpack.c.l.b16 %v1414
      %v3304 = vunpack.c.h.b16 %v1414
      %v3305 = vunpack.c.l.b16 %v1415
      %v3306 = vunpack.c.h.b16 %v1415
      %v3307 = vunpack.c.l.b16 %v1416
      %v3308 = vunpack.c.h.b16 %v1416
      %v3309 = vunpack.c.l.b16 %v1417
      %v3310 = vunpack.c.h.b16 %v1417
      %v3311 = vunpack.c.l.b16 %v1418
      %v3312 = vunpack.c.h.b16 %v1418
      %v3313 = vunpack.c.l.b16 %v1419
      %v3314 = vunpack.c.h.b16 %v1419
      %v3315 = vunpack.c.l.b16 %v1420
      %v3316 = vunpack.c.h.b16 %v1420
      %v3317 = vunpack.c.l.b16 %v1421
      %v3318 = vunpack.c.h.b16 %v1421
      %v3319 = vunpack.c.l.b16 %v1422
      %v3320 = vunpack.c.h.b16 %v1422
      %v3321 = vunpack.c.l.b16 %v1423
      %v3322 = vunpack.c.h.b16 %v1423
      %v3323 = vunpack.c.l.b16 %v1424
      %v3324 = vunpack.c.h.b16 %v1424
      %v3325 = vunpack.c.l.b16 %v1425
      %v3326 = vunpack.c.h.b16 %v1425
      %v3327 = vunpack.c.l.b16 %v1426
      %v3328 = vunpack.c.h.b16 %v1426
      %v3329 = vunpack.c.l.b16 %v1427
      %v3330 = vunpack.c.h.b16 %v1427
      %v3331 = vunpack.c.l.b16 %v1428
      %v3332 = vunpack.c.h.b16 %v1428
      %v3333 = vunpack.c.l.b16 %v1429
      %v3334 = vunpack.c.h.b16 %v1429
      %v3335 = vunpack.c.l.b16 %v1430
      %v3336 = vunpack.c.h.b16 %v1430
      %v3337 = vunpack.c.l.b16 %v1431
      %v3338 = vunpack.c.h.b16 %v1431
      %v3339 = vunpack.c.l.b16 %v1432
      %v3340 = vunpack.c.h.b16 %v1432
      %v3341 = vunpack.c.l.b16 %v1433
      %v3342 = vunpack.c.h.b16 %v1433
      %v3343 = vunpack.c.l.b16 %v1434
      %v3344 = vunpack.c.h.b16 %v1434
      %v3345 = vunpack.c.l.b16 %v1435
      %v3346 = vunpack.c.h.b16 %v1435
      %v3347 = vunpack.c.l.b16 %v1436
      %v3348 = vunpack.c.h.b16 %v1436
      %v3349 = vunpack.c.l.b16 %v1437
      %v3350 = vunpack.c.h.b16 %v1437
      %v3351 = vunpack.c.l.b16 %v1438
      %v3352 = vunpack.c.h.b16 %v1438
      %v3353 = vunpack.c.l.b16 %v1439
      %v3354 = vunpack.c.h.b16 %v1439
      %v3355 = vunpack.c.l.b16 %v1440
      %v3356 = vunpack.c.h.b16 %v1440
      %v3357 = vunpack.c.l.b16 %v1441
      %v3358 = vunpack.c.h.b16 %v1441
      %v3359 = vunpack.c.l.b16 %v1442
      %v3360 = vunpack.c.h.b16 %v1442
      %v3361 = vunpack.c.l.b16 %v1443
      %v3362 = vunpack.c.h.b16 %v1443
      %v3363 = vunpack.c.l.b16 %v1444
      %v3364 = vunpack.c.h.b16 %v1444
      %v3365 = vunpack.c.l.b16 %v1445
      %v3366 = vunpack.c.h.b16 %v1445
      %v3367 = vunpack.c.l.b16 %v1446
      %v3368 = vunpack.c.h.b16 %v1446
      %v3369 = vunpack.c.l.b16 %v1447
      %v3370 = vunpack.c.h.b16 %v1447
      %v3371 = vunpack.c.l.b16 %v1448
      %v3372 = vunpack.c.h.b16 %v1448
      %v3373 = vunpack.c.l.b16 %v1449
      %v3374 = vunpack.c.h.b16 %v1449
      %v3375 = vunpack.c.l.b16 %v1450
      %v3376 = vunpack.c.h.b16 %v1450
      %v3377 = vunpack.c.l.b16 %v1451
      %v3378 = vunpack.c.h.b16 %v1451
      %v3379 = vunpack.c.l.b16 %v1452
      %v3380 = vunpack.c.h.b16 %v1452
      %v3381 = vunpack.c.l.b16 %v1453
      %v3382 = vunpack.c.h.b16 %v1453
      %v3383 = vunpack.c.l.b16 %v1454
      %v3384 = vunpack.c.h.b16 %v1454
      %v3385 = vunpack.c.l.b16 %v1455
      %v3386 = vunpack.c.h.b16 %v1455
      %v3387 = vunpack.c.l.b16 %v1456
      %v3388 = vunpack.c.h.b16 %v1456
      %v3389 = vunpack.c.l.b16 %v1457
      %v3390 = vunpack.c.h.b16 %v1457
      %v3391 = vunpack.c.l.b16 %v1458
      %v3392 = vunpack.c.h.b16 %v1458
      %v3393 = vunpack.c.l.b16 %v1459
      %v3394 = vunpack.c.h.b16 %v1459
      %v3395 = vunpack.c.l.b16 %v1460
      %v3396 = vunpack.c.h.b16 %v1460
      %v3397 = vunpack.c.l.b16 %v1461
      %v3398 = vunpack.c.h.b16 %v1461
      %v3399 = vunpack.c.l.b16 %v1462
      %v3400 = vunpack.c.h.b16 %v1462
      %v3401 = vunpack.c.l.b16 %v1463
      %v3402 = vunpack.c.h.b16 %v1463
      %v3403 = vunpack.c.l.b16 %v1464
      %v3404 = vunpack.c.h.b16 %v1464
      %v3405 = vunpack.c.l.b16 %v1465
      %v3406 = vunpack.c.h.b16 %v1465
      %v3407 = vunpack.c.l.b16 %v1466
      %v3408 = vunpack.c.h.b16 %v1466
      %v3409 = vunpack.c.l.b16 %v1467
      %v3410 = vunpack.c.h.b16 %v1467
      %v3411 = vunpack.c.l.b16 %v1468
      %v3412 = vunpack.c.h.b16 %v1468
      %v3413 = vunpack.c.l.b16 %v1469
      %v3414 = vunpack.c.h.b16 %v1469
      %v3415 = vunpack.c.l.b16 %v1470
      %v3416 = vunpack.c.h.b16 %v1470
      %v3417 = vunpack.c.l.b16 %v1471
      %v3418 = vunpack.c.h.b16 %v1471
      %v3419 = vunpack.c.l.b16 %v1472
      %v3420 = vunpack.c.h.b16 %v1472
      %v3421 = vunpack.c.l.b16 %v1473
      %v3422 = vunpack.c.h.b16 %v1473
      %v3423 = vunpack.c.l.b16 %v1474
      %v3424 = vunpack.c.h.b16 %v1474
      %v3425 = vunpack.c.l.b16 %v1475
      %v3426 = vunpack.c.h.b16 %v1475
      %v3427 = vunpack.c.l.b16 %v1476
      %v3428 = vunpack.c.h.b16 %v1476
      %v3429 = vunpack.c.l.b16 %v1477
      %v3430 = vunpack.c.h.b16 %v1477
      %v3431 = vunpack.c.l.b16 %v1478
      %v3432 = vunpack.c.h.b16 %v1478
      %v3433 = vunpack.c.l.b16 %v1479
      %v3434 = vunpack.c.h.b16 %v1479
      %v3435 = vunpack.c.l.b16 %v1480
      %v3436 = vunpack.c.h.b16 %v1480
      %v3437 = vunpack.c.l.b16 %v1481
      %v3438 = vunpack.c.h.b16 %v1481
      %v3439 = vunpack.c.l.b16 %v1482
      %v3440 = vunpack.c.h.b16 %v1482
      %v3441 = vunpack.c.l.b16 %v1483
      %v3442 = vunpack.c.h.b16 %v1483
      %v3443 = vunpack.c.l.b16 %v1484
      %v3444 = vunpack.c.h.b16 %v1484
      %v3445 = vunpack.c.l.b16 %v1485
      %v3446 = vunpack.c.h.b16 %v1485
      %v3447 = vunpack.c.l.b16 %v1486
      %v3448 = vunpack.c.h.b16 %v1486
      %v3449 = vunpack.c.l.b16 %v1487
      %v3450 = vunpack.c.h.b16 %v1487
      %v3451 = vunpack.c.l.b16 %v1488
      %v3452 = vunpack.c.h.b16 %v1488
      %v3453 = vunpack.c.l.b16 %v1489
      %v3454 = vunpack.c.h.b16 %v1489
      %v3455 = vunpack.c.l.b16 %v1490
      %v3456 = vunpack.c.h.b16 %v1490
      %v3457 = vunpack.c.l.b16 %v1491
      %v3458 = vunpack.c.h.b16 %v1491
      %v3459 = vunpack.c.l.b16 %v1492
      %v3460 = vunpack.c.h.b16 %v1492
      %v3461 = vunpack.c.l.b16 %v1493
      %v3462 = vunpack.c.h.b16 %v1493
      %v3463 = vunpack.c.l.b16 %v1494
      %v3464 = vunpack.c.h.b16 %v1494
      %v3465 = vunpack.c.l.b16 %v1495
      %v3466 = vunpack.c.h.b16 %v1495
      %v3467 = vunpack.c.l.b16 %v1496
      %v3468 = vunpack.c.h.b16 %v1496
      %v3469 = vunpack.c.l.b16 %v1497
      %v3470 = vunpack.c.h.b16 %v1497
      %v3471 = vunpack.c.l.b16 %v1498
      %v3472 = vunpack.c.h.b16 %v1498
      %v3473 = vunpack.c.l.b16 %v1499
      %v3474 = vunpack.c.h.b16 %v1499
      %v3475 = vunpack.c.l.b16 %v1500
      %v3476 = vunpack.c.h.b16 %v1500
      %v3477 = vunpack.c.l.b16 %v1501
      %v3478 = vunpack.c.h.b16 %v1501
      %v3479 = vunpack.c.l.b16 %v1502
      %v3480 = vunpack.c.h.b16 %v1502
      %v3481 = vunpack.c.l.b16 %v1503
      %v3482 = vunpack.c.h.b16 %v1503
      %v3483 = vunpack.c.l.b16 %v1504
      %v3484 = vunpack.c.h.b16 %v1504
      %v3485 = vunpack.c.l.b16 %v1505
      %v3486 = vunpack.c.h.b16 %v1505
      %v3487 = vunpack.c.l.b16 %v1506
      %v3488 = vunpack.c.h.b16 %v1506
      %v3489 = vunpack.c.l.b16 %v1507
      %v3490 = vunpack.c.h.b16 %v1507
      %v3491 = vunpack.c.l.b16 %v1508
      %v3492 = vunpack.c.h.b16 %v1508
      %v3493 = vunpack.c.l.b16 %v1509
      %v3494 = vunpack.c.h.b16 %v1509
      %v3495 = vunpack.c.l.b16 %v1510
      %v3496 = vunpack.c.h.b16 %v1510
      %v3497 = vunpack.c.l.b16 %v1511
      %v3498 = vunpack.c.h.b16 %v1511
      %v3499 = vunpack.c.l.b16 %v1512
      %v3500 = vunpack.c.h.b16 %v1512
      %v3501 = vunpack.c.l.b16 %v1513
      %v3502 = vunpack.c.h.b16 %v1513
      %v3503 = vunpack.c.l.b16 %v1514
      %v3504 = vunpack.c.h.b16 %v1514
      %v3505 = vunpack.c.l.b16 %v1515
      %v3506 = vunpack.c.h.b16 %v1515
      %v3507 = vunpack.c.l.b16 %v1516
      %v3508 = vunpack.c.h.b16 %v1516
      %v3509 = vunpack.c.l.b16 %v1517
      %v3510 = vunpack.c.h.b16 %v1517
      %v3511 = vunpack.c.l.b16 %v1518
      %v3512 = vunpack.c.h.b16 %v1518
      %v3513 = vunpack.c.l.b16 %v1519
      %v3514 = vunpack.c.h.b16 %v1519
      %v3515 = vunpack.c.l.b16 %v1520
      %v3516 = vunpack.c.h.b16 %v1520
      %v3517 = vunpack.c.l.b16 %v1521
      %v3518 = vunpack.c.h.b16 %v1521
      %v3519 = vunpack.c.l.b16 %v1522
      %v3520 = vunpack.c.h.b16 %v1522
      %v3521 = vunpack.c.l.b16 %v1523
      %v3522 = vunpack.c.h.b16 %v1523
      %v3523 = vunpack.c.l.b16 %v1524
      %v3524 = vunpack.c.h.b16 %v1524
      %v3525 = vunpack.c.l.b16 %v1525
      %v3526 = vunpack.c.h.b16 %v1525
      %v3527 = vunpack.c.l.b16 %v1526
      %v3528 = vunpack.c.h.b16 %v1526
      %v3529 = vunpack.c.l.b16 %v1527
      %v3530 = vunpack.c.h.b16 %v1527
      %v3531 = vunpack.c.l.b16 %v1528
      %v3532 = vunpack.c.h.b16 %v1528
      %v3533 = vunpack.c.l.b16 %v1529
      %v3534 = vunpack.c.h.b16 %v1529
      %v3535 = vunpack.c.l.b16 %v1530
      %v3536 = vunpack.c.h.b16 %v1530
      %v3537 = vunpack.c.l.b16 %v1531
      %v3538 = vunpack.c.h.b16 %v1531
      %v3539 = vunpack.c.l.b16 %v1532
      %v3540 = vunpack.c.h.b16 %v1532
      %v3541 = vunpack.c.l.b16 %v1533
      %v3542 = vunpack.c.h.b16 %v1533
      %v3543 = vunpack.c.l.b16 %v1534
      %v3544 = vunpack.c.h.b16 %v1534
      %v3545 = vunpack.c.l.b16 %v1535
      %v3546 = vunpack.c.h.b16 %v1535
      %v3547 = vunpack.c.l.b16 %v1536
      %v3548 = vunpack.c.h.b16 %v1536
      %v3549 = vunpack.c.l.b16 %v1537
      %v3550 = vunpack.c.h.b16 %v1537
      %v3551 = vunpack.c.l.b16 %v1538
      %v3552 = vunpack.c.h.b16 %v1538
      %v3553 = vunpack.c.l.b16 %v1539
      %v3554 = vunpack.c.h.b16 %v1539
      %v3555 = vunpack.c.l.b16 %v1540
      %v3556 = vunpack.c.h.b16 %v1540
      %v3557 = vunpack.c.l.b16 %v1541
      %v3558 = vunpack.c.h.b16 %v1541
      %v3559 = vunpack.c.l.b16 %v1542
      %v3560 = vunpack.c.h.b16 %v1542
      %v3561 = vunpack.c.l.b16 %v1543
      %v3562 = vunpack.c.h.b16 %v1543
      %v3563 = vunpack.c.l.b16 %v1544
      %v3564 = vunpack.c.h.b16 %v1544
      %v3565 = vunpack.c.l.b16 %v1545
      %v3566 = vunpack.c.h.b16 %v1545
      %v3567 = vunpack.c.l.b16 %v1546
      %v3568 = vunpack.c.h.b16 %v1546
      %v3569 = vunpack.c.l.b16 %v1547
      %v3570 = vunpack.c.h.b16 %v1547
      %v3571 = vunpack.c.l.b16 %v1548
      %v3572 = vunpack.c.h.b16 %v1548
      %v3573 = vunpack.c.l.b16 %v1549
      %v3574 = vunpack.c.h.b16 %v1549
      %v3575 = vunpack.c.l.b16 %v1550
      %v3576 = vunpack.c.h.b16 %v1550
      %v3577 = vunpack.c.l.b16 %v1551
      %v3578 = vunpack.c.h.b16 %v1551
      %v3579 = vunpack.c.l.b16 %v1552
      %v3580 = vunpack.c.h.b16 %v1552
      %v3581 = vunpack.c.l.b16 %v1553
      %v3582 = vunpack.c.h.b16 %v1553
      %v3583 = vunpack.c.l.b16 %v1554
      %v3584 = vunpack.c.h.b16 %v1554
      %v3585 = vunpack.c.l.b16 %v1555
      %v3586 = vunpack.c.h.b16 %v1555
      %v3587 = vunpack.c.l.b16 %v1556
      %v3588 = vunpack.c.h.b16 %v1556
      %v3589 = vunpack.c.l.b16 %v1557
      %v3590 = vunpack.c.h.b16 %v1557
      %v3591 = vunpack.c.l.b16 %v1558
      %v3592 = vunpack.c.h.b16 %v1558
      %v3593 = vunpack.c.l.b16 %v1559
      %v3594 = vunpack.c.h.b16 %v1559
      %v3595 = vunpack.c.l.b16 %v1560
      %v3596 = vunpack.c.h.b16 %v1560
      %v3597 = vunpack.c.l.b16 %v1561
      %v3598 = vunpack.c.h.b16 %v1561
      %v3599 = vunpack.c.l.b16 %v1562
      %v3600 = vunpack.c.h.b16 %v1562
      %v3601 = vunpack.c.l.b16 %v1563
      %v3602 = vunpack.c.h.b16 %v1563
      %v3603 = vunpack.c.l.b16 %v1564
      %v3604 = vunpack.c.h.b16 %v1564
      %v3605 = vunpack.c.l.b16 %v1565
      %v3606 = vunpack.c.h.b16 %v1565
      %v3607 = vunpack.c.l.b16 %v1566
      %v3608 = vunpack.c.h.b16 %v1566
      %v3609 = vunpack.c.l.b16 %v1567
      %v3610 = vunpack.c.h.b16 %v1567
      %v3611 = vunpack.c.l.b16 %v1568
      %v3612 = vunpack.c.h.b16 %v1568
      %v3613 = vunpack.c.l.b16 %v1569
      %v3614 = vunpack.c.h.b16 %v1569
      %v3615 = vunpack.c.l.b16 %v1570
      %v3616 = vunpack.c.h.b16 %v1570
      %v3617 = vunpack.c.l.b16 %v1571
      %v3618 = vunpack.c.h.b16 %v1571
      %v3619 = vunpack.c.l.b16 %v1572
      %v3620 = vunpack.c.h.b16 %v1572
      %v3621 = vunpack.c.l.b16 %v1573
      %v3622 = vunpack.c.h.b16 %v1573
      %v3623 = vunpack.c.l.b16 %v1574
      %v3624 = vunpack.c.h.b16 %v1574
      %v3625 = vunpack.c.l.b16 %v1575
      %v3626 = vunpack.c.h.b16 %v1575
      %v3627 = vunpack.c.l.b16 %v1576
      %v3628 = vunpack.c.h.b16 %v1576
      %v3629 = vunpack.c.l.b16 %v1577
      %v3630 = vunpack.c.h.b16 %v1577
      %v3631 = vunpack.c.l.b16 %v1578
      %v3632 = vunpack.c.h.b16 %v1578
      %v3633 = vunpack.c.l.b16 %v1579
      %v3634 = vunpack.c.h.b16 %v1579
      %v3635 = vunpack.c.l.b16 %v1580
      %v3636 = vunpack.c.h.b16 %v1580
      %v3637 = vunpack.c.l.b16 %v1581
      %v3638 = vunpack.c.h.b16 %v1581
      %v3639 = vunpack.c.l.b16 %v1582
      %v3640 = vunpack.c.h.b16 %v1582
      %v3641 = vunpack.c.l.b16 %v1583
      %v3642 = vunpack.c.h.b16 %v1583
      %v3643 = vunpack.c.l.b16 %v1584
      %v3644 = vunpack.c.h.b16 %v1584
      %v3645 = vunpack.c.l.b16 %v1585
      %v3646 = vunpack.c.h.b16 %v1585
      %v3647 = vunpack.c.l.b16 %v1586
      %v3648 = vunpack.c.h.b16 %v1586
      %v3649 = vunpack.c.l.b16 %v1587
      %v3650 = vunpack.c.h.b16 %v1587
      %v3651 = vunpack.c.l.b16 %v1588
      %v3652 = vunpack.c.h.b16 %v1588
      %v3653 = vunpack.c.l.b16 %v1589
      %v3654 = vunpack.c.h.b16 %v1589
      %v3655 = vunpack.c.l.b16 %v1590
      %v3656 = vunpack.c.h.b16 %v1590
      %v3657 = vunpack.c.l.b16 %v1591
      %v3658 = vunpack.c.h.b16 %v1591
      %v3659 = vunpack.c.l.b16 %v1592
      %v3660 = vunpack.c.h.b16 %v1592
      %v3661 = vunpack.c.l.b16 %v1593
      %v3662 = vunpack.c.h.b16 %v1593
      %v3663 = vunpack.c.l.b16 %v1594
      %v3664 = vunpack.c.h.b16 %v1594
      %v3665 = vunpack.c.l.b16 %v1595
      %v3666 = vunpack.c.h.b16 %v1595
      %v3667 = vunpack.c.l.b16 %v1596
      %v3668 = vunpack.c.h.b16 %v1596
      %v3669 = vunpack.c.l.b16 %v1597
      %v3670 = vunpack.c.h.b16 %v1597
      %v3671 = vunpack.c.l.b16 %v1598
      %v3672 = vunpack.c.h.b16 %v1598
      %v3673 = vunpack.c.l.b16 %v1599
      %v3674 = vunpack.c.h.b16 %v1599
      %v3675 = vunpack.c.l.b16 %v1600
      %v3676 = vunpack.c.h.b16 %v1600
      %v3677 = vunpack.c.l.b16 %v1601
      %v3678 = vunpack.c.h.b16 %v1601
      %v3679 = vunpack.c.l.b16 %v1602
      %v3680 = vunpack.c.h.b16 %v1602
      %v3681 = vunpack.c.l.b16 %v1603
      %v3682 = vunpack.c.h.b16 %v1603
      %v3683 = vunpack.c.l.b16 %v1604
      %v3684 = vunpack.c.h.b16 %v1604
      %v3685 = vunpack.c.l.b16 %v1605
      %v3686 = vunpack.c.h.b16 %v1605
      %v3687 = vunpack.c.l.b16 %v1606
      %v3688 = vunpack.c.h.b16 %v1606
      %v3689 = vunpack.c.l.b16 %v1607
      %v3690 = vunpack.c.h.b16 %v1607
      %v3691 = vunpack.c.l.b16 %v1608
      %v3692 = vunpack.c.h.b16 %v1608
      %v3693 = vunpack.c.l.b16 %v1609
      %v3694 = vunpack.c.h.b16 %v1609
      %v3695 = vunpack.c.l.b16 %v1610
      %v3696 = vunpack.c.h.b16 %v1610
      %v3697 = vunpack.c.l.b16 %v1611
      %v3698 = vunpack.c.h.b16 %v1611
      %v3699 = vunpack.c.l.b16 %v1612
      %v3700 = vunpack.c.h.b16 %v1612
      %v3701 = vunpack.c.l.b16 %v1613
      %v3702 = vunpack.c.h.b16 %v1613
      %v3703 = vunpack.c.l.b16 %v1614
      %v3704 = vunpack.c.h.b16 %v1614
      %v3705 = vunpack.c.l.b16 %v1615
      %v3706 = vunpack.c.h.b16 %v1615
      %v3707 = vunpack.c.l.b16 %v1616
      %v3708 = vunpack.c.h.b16 %v1616
      %v3709 = vunpack.c.l.b16 %v1617
      %v3710 = vunpack.c.h.b16 %v1617
      %v3711 = vunpack.c.l.b16 %v1618
      %v3712 = vunpack.c.h.b16 %v1618
      %v3713 = vunpack.c.l.b16 %v1619
      %v3714 = vunpack.c.h.b16 %v1619
      %v3715 = vunpack.c.l.b16 %v1620
      %v3716 = vunpack.c.h.b16 %v1620
      %v3717 = vunpack.c.l.b16 %v1621
      %v3718 = vunpack.c.h.b16 %v1621
      %v3719 = vunpack.c.l.b16 %v1622
      %v3720 = vunpack.c.h.b16 %v1622
      %v3721 = vunpack.c.l.b16 %v1623
      %v3722 = vunpack.c.h.b16 %v1623
      %v3723 = vunpack.c.l.b16 %v1624
      %v3724 = vunpack.c.h.b16 %v1624
      %v3725 = vunpack.c.l.b16 %v1625
      %v3726 = vunpack.c.h.b16 %v1625
      %v3727 = vunpack.c.l.b16 %v1626
      %v3728 = vunpack.c.h.b16 %v1626
      %v3729 = vunpack.c.l.b16 %v1627
      %v3730 = vunpack.c.h.b16 %v1627
      %v3731 = vunpack.c.l.b16 %v1628
      %v3732 = vunpack.c.h.b16 %v1628
      %v3733 = vunpack.c.l.b16 %v1629
      %v3734 = vunpack.c.h.b16 %v1629
      %v3735 = vunpack.c.l.b16 %v1630
      %v3736 = vunpack.c.h.b16 %v1630
      %v3737 = vunpack.c.l.b16 %v1631
      %v3738 = vunpack.c.h.b16 %v1631
      %v3739 = vunpack.c.l.b16 %v1632
      %v3740 = vunpack.c.h.b16 %v1632
      %v3741 = vunpack.c.l.b16 %v1633
      %v3742 = vunpack.c.h.b16 %v1633
      %v3743 = vunpack.c.l.b16 %v1634
      %v3744 = vunpack.c.h.b16 %v1634
      %v3745 = vunpack.c.l.b16 %v1635
      %v3746 = vunpack.c.h.b16 %v1635
      %v3747 = vunpack.c.l.b16 %v1636
      %v3748 = vunpack.c.h.b16 %v1636
      %v3749 = vunpack.c.l.b16 %v1637
      %v3750 = vunpack.c.h.b16 %v1637
      %v3751 = vunpack.c.l.b16 %v1638
      %v3752 = vunpack.c.h.b16 %v1638
      %v3753 = vunpack.c.l.b16 %v1639
      %v3754 = vunpack.c.h.b16 %v1639
      %v3755 = vunpack.c.l.b16 %v1640
      %v3756 = vunpack.c.h.b16 %v1640
      %v3757 = vunpack.c.l.b16 %v1641
      %v3758 = vunpack.c.h.b16 %v1641
      %v3759 = vunpack.c.l.b16 %v1642
      %v3760 = vunpack.c.h.b16 %v1642
      %v3761 = vunpack.c.l.b16 %v1643
      %v3762 = vunpack.c.h.b16 %v1643
      %v3763 = vunpack.c.l.b16 %v1644
      %v3764 = vunpack.c.h.b16 %v1644
      %v3765 = vunpack.c.l.b16 %v1645
      %v3766 = vunpack.c.h.b16 %v1645
      %v3767 = vunpack.c.l.b16 %v1646
      %v3768 = vunpack.c.h.b16 %v1646
      %v3769 = vunpack.c.l.b16 %v1647
      %v3770 = vunpack.c.h.b16 %v1647
      %v3771 = vunpack.c.l.b16 %v1648
      %v3772 = vunpack.c.h.b16 %v1648
      %v3773 = vunpack.c.l.b16 %v1649
      %v3774 = vunpack.c.h.b16 %v1649
      %v3775 = vunpack.c.l.b16 %v1650
      %v3776 = vunpack.c.h.b16 %v1650
      %v3777 = vunpack.c.l.b16 %v1651
      %v3778 = vunpack.c.h.b16 %v1651
      %v3779 = vunpack.c.l.b16 %v1652
      %v3780 = vunpack.c.h.b16 %v1652
      %v3781 = vunpack.c.l.b16 %v1653
      %v3782 = vunpack.c.h.b16 %v1653
      %v3783 = vunpack.c.l.b16 %v1654
      %v3784 = vunpack.c.h.b16 %v1654
      %v3785 = vunpack.c.l.b16 %v1655
      %v3786 = vunpack.c.h.b16 %v1655
      %v3787 = vunpack.c.l.b16 %v1656
      %v3788 = vunpack.c.h.b16 %v1656
      %v3789 = vunpack.c.l.b16 %v1657
      %v3790 = vunpack.c.h.b16 %v1657
      %v3791 = vunpack.c.l.b16 %v1658
      %v3792 = vunpack.c.h.b16 %v1658
      %v3793 = vunpack.c.l.b16 %v1659
      %v3794 = vunpack.c.h.b16 %v1659
      %v3795 = vunpack.c.l.b16 %v1660
      %v3796 = vunpack.c.h.b16 %v1660
      %v3797 = vunpack.c.l.b16 %v1661
      %v3798 = vunpack.c.h.b16 %v1661
      %v3799 = vunpack.c.l.b16 %v1662
      %v3800 = vunpack.c.h.b16 %v1662
      %v3801 = vunpack.c.l.b16 %v1663
      %v3802 = vunpack.c.h.b16 %v1663
      %v3803 = vunpack.c.l.b16 %v1664
      %v3804 = vunpack.c.h.b16 %v1664
      %v3805 = vunpack.c.l.b16 %v1665
      %v3806 = vunpack.c.h.b16 %v1665
      %v3807 = vunpack.c.l.b16 %v1666
      %v3808 = vunpack.c.h.b16 %v1666
      %v3809 = vunpack.c.l.b16 %v1667
      %v3810 = vunpack.c.h.b16 %v1667
      %v3811 = vunpack.c.l.b16 %v1668
      %v3812 = vunpack.c.h.b16 %v1668
      %v3813 = vunpack.c.l.b16 %v1669
      %v3814 = vunpack.c.h.b16 %v1669
      %v3815 = vunpack.c.l.b16 %v1670
      %v3816 = vunpack.c.h.b16 %v1670
      %v3817 = vunpack.c.l.b16 %v1671
      %v3818 = vunpack.c.h.b16 %v1671
      %v3819 = vunpack.c.l.b16 %v1672
      %v3820 = vunpack.c.h.b16 %v1672
      %v3821 = vunpack.c.l.b16 %v1673
      %v3822 = vunpack.c.h.b16 %v1673
      %v3823 = vunpack.c.l.b16 %v1674
      %v3824 = vunpack.c.h.b16 %v1674
      %v3825 = vunpack.c.l.b16 %v1675
      %v3826 = vunpack.c.h.b16 %v1675
      %v3827 = vunpack.c.l.b16 %v1676
      %v3828 = vunpack.c.h.b16 %v1676
      %v3829 = vunpack.c.l.b16 %v1677
      %v3830 = vunpack.c.h.b16 %v1677
      %v3831 = vunpack.c.l.b16 %v1678
      %v3832 = vunpack.c.h.b16 %v1678
      %v3833 = vunpack.c.l.b16 %v1679
      %v3834 = vunpack.c.h.b16 %v1679
      %v3835 = vunpack.c.l.b16 %v1680
      %v3836 = vunpack.c.h.b16 %v1680
      %v3837 = vunpack.c.l.b16 %v1681
      %v3838 = vunpack.c.h.b16 %v1681
      %v3839 = vunpack.c.l.b16 %v1682
      %v3840 = vunpack.c.h.b16 %v1682
      %v3841 = vunpack.c.l.b16 %v1683
      %v3842 = vunpack.c.h.b16 %v1683
      %v3843 = vunpack.c.l.b16 %v1684
      %v3844 = vunpack.c.h.b16 %v1684
      %v3845 = vunpack.c.l.b16 %v1685
      %v3846 = vunpack.c.h.b16 %v1685
      %v3847 = vunpack.c.l.b16 %v1686
      %v3848 = vunpack.c.h.b16 %v1686
      %v3849 = vunpack.c.l.b16 %v1687
      %v3850 = vunpack.c.h.b16 %v1687
      %v3851 = vunpack.c.l.b16 %v1688
      %v3852 = vunpack.c.h.b16 %v1688
      %v3853 = vunpack.c.l.b16 %v1689
      %v3854 = vunpack.c.h.b16 %v1689
      %v3855 = vunpack.c.l.b16 %v1690
      %v3856 = vunpack.c.h.b16 %v1690
      %v3857 = vunpack.c.l.b16 %v1691
      %v3858 = vunpack.c.h.b16 %v1691
      %v3859 = vunpack.c.l.b16 %v1692
      %v3860 = vunpack.c.h.b16 %v1692
      %v3861 = vunpack.c.l.b16 %v1693
      %v3862 = vunpack.c.h.b16 %v1693
      %v3863 = vunpack.c.l.b16 %v1694
      %v3864 = vunpack.c.h.b16 %v1694
      %v3865 = vunpack.c.l.b16 %v1695
      %v3866 = vunpack.c.h.b16 %v1695
      %v3867 = vunpack.c.l.b16 %v1696
      %v3868 = vunpack.c.h.b16 %v1696
      %v3869 = vunpack.c.l.b16 %v1697
      %v3870 = vunpack.c.h.b16 %v1697
      %v3871 = vunpack.c.l.b16 %v1698
      %v3872 = vunpack.c.h.b16 %v1698
      %v3873 = vunpack.c.l.b16 %v1699
      %v3874 = vunpack.c.h.b16 %v1699
      %v3875 = vunpack.c.l.b16 %v1700
      %v3876 = vunpack.c.h.b16 %v1700
      %v3877 = vunpack.c.l.b16 %v1701
      %v3878 = vunpack.c.h.b16 %v1701
      %v3879 = vunpack.c.l.b16 %v1702
      %v3880 = vunpack.c.h.b16 %v1702
      %v3881 = vunpack.c.l.b16 %v1703
      %v3882 = vunpack.c.h.b16 %v1703
      %v3883 = vunpack.c.l.b16 %v1704
      %v3884 = vunpack.c.h.b16 %v1704
      %v3885 = vunpack.c.l.b16 %v1705
      %v3886 = vunpack.c.h.b16 %v1705
      %v3887 = vunpack.c.l.b16 %v1706
      %v3888 = vunpack.c.h.b16 %v1706
      %v3889 = vunpack.c.l.b16 %v1707
      %v3890 = vunpack.c.h.b16 %v1707
      %v3891 = vunpack.c.l.b16 %v1708
      %v3892 = vunpack.c.h.b16 %v1708
      %v3893 = vunpack.c.l.b16 %v1709
      %v3894 = vunpack.c.h.b16 %v1709
      %v3895 = vunpack.c.l.b16 %v1710
      %v3896 = vunpack.c.h.b16 %v1710
      %v3897 = vunpack.c.l.b16 %v1711
      %v3898 = vunpack.c.h.b16 %v1711
      %v3899 = vunpack.c.l.b16 %v1712
      %v3900 = vunpack.c.h.b16 %v1712
      %v3901 = vunpack.c.l.b16 %v1713
      %v3902 = vunpack.c.h.b16 %v1713
      %v3903 = vunpack.c.l.b16 %v1714
      %v3904 = vunpack.c.h.b16 %v1714
      %v3905 = vunpack.c.l.b16 %v1715
      %v3906 = vunpack.c.h.b16 %v1715
      %v3907 = vunpack.c.l.b16 %v1716
      %v3908 = vunpack.c.h.b16 %v1716
      %v3909 = vunpack.c.l.b16 %v1717
      %v3910 = vunpack.c.h.b16 %v1717
      %v3911 = vunpack.c.l.b16 %v1718
      %v3912 = vunpack.c.h.b16 %v1718
      %v3913 = vunpack.c.l.b16 %v1719
      %v3914 = vunpack.c.h.b16 %v1719
      %v3915 = vunpack.c.l.b16 %v1720
      %v3916 = vunpack.c.h.b16 %v1720
      %v3917 = vunpack.c.l.b16 %v1721
      %v3918 = vunpack.c.h.b16 %v1721
      %v3919 = vunpack.c.l.b16 %v1722
      %v3920 = vunpack.c.h.b16 %v1722
      %v3921 = vunpack.c.l.b16 %v1723
      %v3922 = vunpack.c.h.b16 %v1723
      %v3923 = vunpack.c.l.b16 %v1724
      %v3924 = vunpack.c.h.b16 %v1724
      %v3925 = vunpack.c.l.b16 %v1725
      %v3926 = vunpack.c.h.b16 %v1725
      %v3927 = vunpack.c.l.b16 %v1726
      %v3928 = vunpack.c.h.b16 %v1726
      %v3929 = vunpack.c.l.b16 %v1727
      %v3930 = vunpack.c.h.b16 %v1727
      %v3931 = vunpack.c.l.b16 %v1728
      %v3932 = vunpack.c.h.b16 %v1728
      %v3933 = vunpack.c.l.b16 %v1729
      %v3934 = vunpack.c.h.b16 %v1729
      %v3935 = vunpack.c.l.b16 %v1730
      %v3936 = vunpack.c.h.b16 %v1730
      %v3937 = vunpack.c.l.b16 %v1731
      %v3938 = vunpack.c.h.b16 %v1731
      %v3939 = vunpack.c.l.b16 %v1732
      %v3940 = vunpack.c.h.b16 %v1732
      %v3941 = vunpack.c.l.b16 %v1733
      %v3942 = vunpack.c.h.b16 %v1733
      %v3943 = vunpack.c.l.b16 %v1734
      %v3944 = vunpack.c.h.b16 %v1734
      %v3945 = vunpack.c.l.b16 %v1735
      %v3946 = vunpack.c.h.b16 %v1735
      %v3947 = vunpack.c.l.b16 %v1736
      %v3948 = vunpack.c.h.b16 %v1736
      %v3949 = vunpack.c.l.b16 %v1737
      %v3950 = vunpack.c.h.b16 %v1737
      %v3951 = vunpack.c.l.b16 %v1738
      %v3952 = vunpack.c.h.b16 %v1738
      %v3953 = vunpack.c.l.b16 %v1739
      %v3954 = vunpack.c.h.b16 %v1739
      %v3955 = vunpack.c.l.b16 %v1740
      %v3956 = vunpack.c.h.b16 %v1740
      %v3957 = vunpack.c.l.b16 %v1741
      %v3958 = vunpack.c.h.b16 %v1741
      %v3959 = vunpack.c.l.b16 %v1742
      %v3960 = vunpack.c.h.b16 %v1742
      %v3961 = vunpack.c.l.b16 %v1743
      %v3962 = vunpack.c.h.b16 %v1743
      %v3963 = vunpack.c.l.b16 %v1744
      %v3964 = vunpack.c.h.b16 %v1744
      %v3965 = vunpack.c.l.b16 %v1745
      %v3966 = vunpack.c.h.b16 %v1745
      %v3967 = vunpack.c.l.b16 %v1746
      %v3968 = vunpack.c.h.b16 %v1746
      %v3969 = vunpack.c.l.b16 %v1747
      %v3970 = vunpack.c.h.b16 %v1747
      %v3971 = vunpack.c.l.b16 %v1748
      %v3972 = vunpack.c.h.b16 %v1748
      %v3973 = vunpack.c.l.b16 %v1749
      %v3974 = vunpack.c.h.b16 %v1749
      %v3975 = vunpack.c.l.b16 %v1750
      %v3976 = vunpack.c.h.b16 %v1750
      %v3977 = vunpack.c.l.b16 %v1751
      %v3978 = vunpack.c.h.b16 %v1751
      %v3979 = vunpack.c.l.b16 %v1752
      %v3980 = vunpack.c.h.b16 %v1752
      %v3981 = vunpack.c.l.b16 %v1753
      %v3982 = vunpack.c.h.b16 %v1753
      %v3983 = vunpack.c.l.b16 %v1754
      %v3984 = vunpack.c.h.b16 %v1754
      %v3985 = vunpack.c.l.b16 %v1755
      %v3986 = vunpack.c.h.b16 %v1755
      %v3987 = vunpack.c.l.b16 %v1756
      %v3988 = vunpack.c.h.b16 %v1756
      %v3989 = vunpack.c.l.b16 %v1757
      %v3990 = vunpack.c.h.b16 %v1757
      %v3991 = vunpack.c.l.b16 %v1758
      %v3992 = vunpack.c.h.b16 %v1758
      %v3993 = vunpack.c.l.b16 %v1759
      %v3994 = vunpack.c.h.b16 %v1759
      %v3995 = vunpack.c.l.b16 %v1760
      %v3996 = vunpack.c.h.b16 %v1760
      %v3997 = vunpack.c.l.b16 %v1761
      %v3998 = vunpack.c.h.b16 %v1761
      %v3999 = vunpack.c.l.b16 %v1762
      %v4000 = vunpack.c.h.b16 %v1762
      %v4001 = vunpack.c.l.b16 %v1763
      %v4002 = vunpack.c.h.b16 %v1763
      %v4003 = vunpack.c.l.b16 %v1764
      %v4004 = vunpack.c.h.b16 %v1764
      %v4005 = vunpack.c.l.b16 %v1765
      %v4006 = vunpack.c.h.b16 %v1765
      %v4007 = vunpack.c.l.b16 %v1766
      %v4008 = vunpack.c.h.b16 %v1766
      %v4009 = vunpack.c.l.b16 %v1767
      %v4010 = vunpack.c.h.b16 %v1767
      %v4011 = vunpack.c.l.b16 %v1768
      %v4012 = vunpack.c.h.b16 %v1768
      %v4013 = vunpack.c.l.b16 %v1769
      %v4014 = vunpack.c.h.b16 %v1769
      %v4015 = vunpack.c.l.b16 %v1770
      %v4016 = vunpack.c.h.b16 %v1770
      %v4017 = vunpack.c.l.b16 %v1771
      %v4018 = vunpack.c.h.b16 %v1771
      %v4019 = vunpack.c.l.b16 %v1772
      %v4020 = vunpack.c.h.b16 %v1772
      %v4021 = vunpack.c.l.b16 %v1773
      %v4022 = vunpack.c.h.b16 %v1773
      %v4023 = vunpack.c.l.b16 %v1774
      %v4024 = vunpack.c.h.b16 %v1774
      %v4025 = vunpack.c.l.b16 %v1775
      %v4026 = vunpack.c.h.b16 %v1775
      %v4027 = vunpack.c.l.b16 %v1776
      %v4028 = vunpack.c.h.b16 %v1776
      %v4029 = vunpack.c.l.b16 %v1777
      %v4030 = vunpack.c.h.b16 %v1777
      %v4031 = vunpack.c.l.b16 %v1778
      %v4032 = vunpack.c.h.b16 %v1778
      %v4033 = vunpack.c.l.b16 %v1779
      %v4034 = vunpack.c.h.b16 %v1779
      %v4035 = vunpack.c.l.b16 %v1780
      %v4036 = vunpack.c.h.b16 %v1780
      %v4037 = vunpack.c.l.b16 %v1781
      %v4038 = vunpack.c.h.b16 %v1781
      %v4039 = vunpack.c.l.b16 %v1782
      %v4040 = vunpack.c.h.b16 %v1782
      %v4041 = vunpack.c.l.b16 %v1783
      %v4042 = vunpack.c.h.b16 %v1783
      %v4043 = vunpack.c.l.b16 %v1784
      %v4044 = vunpack.c.h.b16 %v1784
      %v4045 = vunpack.c.l.b16 %v1785
      %v4046 = vunpack.c.h.b16 %v1785
      %v4047 = vunpack.c.l.b16 %v1786
      %v4048 = vunpack.c.h.b16 %v1786
      %v4049 = vunpack.c.l.b16 %v1787
      %v4050 = vunpack.c.h.b16 %v1787
      %v4051 = vunpack.c.l.b16 %v1788
      %v4052 = vunpack.c.h.b16 %v1788
      %v4053 = vunpack.c.l.b16 %v1789
      %v4054 = vunpack.c.h.b16 %v1789
      %v4055 = vunpack.c.l.b16 %v1790
      %v4056 = vunpack.c.h.b16 %v1790
      %v4057 = vunpack.c.l.b16 %v1791
      %v4058 = vunpack.c.h.b16 %v1791
      %v4059 = vunpack.c.l.b16 %v1792
      %v4060 = vunpack.c.h.b16 %v1792
      %v4061 = vunpack.c.l.b16 %v1793
      %v4062 = vunpack.c.h.b16 %v1793
      %v4063 = vunpack.c.l.b16 %v1794
      %v4064 = vunpack.c.h.b16 %v1794
      %v4065 = vunpack.c.l.b16 %v1795
      %v4066 = vunpack.c.h.b16 %v1795
      %v4067 = vunpack.c.l.b16 %v1796
      %v4068 = vunpack.c.h.b16 %v1796
      %v4069 = vunpack.c.l.b16 %v1797
      %v4070 = vunpack.c.h.b16 %v1797
      %v4071 = vunpack.c.l.b16 %v1798
      %v4072 = vunpack.c.h.b16 %v1798
      %v4073 = vunpack.c.l.b16 %v1799
      %v4074 = vunpack.c.h.b16 %v1799
      %v4075 = vunpack.c.l.b16 %v1800
      %v4076 = vunpack.c.h.b16 %v1800
      %v4077 = vunpack.c.l.b16 %v1801
      %v4078 = vunpack.c.h.b16 %v1801
      %v4079 = vunpack.c.l.b16 %v1802
      %v4080 = vunpack.c.h.b16 %v1802
      %v4081 = vunpack.c.l.b16 %v1803
      %v4082 = vunpack.c.h.b16 %v1803
      %v4083 = vunpack.c.l.b16 %v1804
      %v4084 = vunpack.c.h.b16 %v1804
      %v4085 = vunpack.c.l.b16 %v1805
      %v4086 = vunpack.c.h.b16 %v1805
      %v4087 = vunpack.c.l.b16 %v1806
      %v4088 = vunpack.c.h.b16 %v1806
      %v4089 = vunpack.c.l.b16 %v1807
      %v4090 = vunpack.c.h.b16 %v1807
      %v4091 = vunpack.c.l.b16 %v1808
      %v4092 = vunpack.c.h.b16 %v1808
      %v4093 = vunpack.c.l.b16 %v1809
      %v4094 = vunpack.c.h.b16 %v1809
      %v4095 = vunpack.c.l.b16 %v1810
      %v4096 = vunpack.c.h.b16 %v1810
      %v4097 = vunpack.c.l.b16 %v1811
      %v4098 = vunpack.c.h.b16 %v1811
      %v4099 = vunpack.c.l.b16 %v1812
      %v4100 = vunpack.c.h.b16 %v1812
      %v4101 = vunpack.c.l.b16 %v1813
      %v4102 = vunpack.c.h.b16 %v1813
      %v4103 = vunpack.c.l.b16 %v1814
      %v4104 = vunpack.c.h.b16 %v1814
      %v4105 = vunpack.c.l.b16 %v1815
      %v4106 = vunpack.c.h.b16 %v1815
      %v4107 = vunpack.c.l.b16 %v1816
      %v4108 = vunpack.c.h.b16 %v1816
      %v4109 = vunpack.c.l.b16 %v1817
      %v4110 = vunpack.c.h.b16 %v1817
      %v4111 = vunpack.c.l.b16 %v1818
      %v4112 = vunpack.c.h.b16 %v1818
      %v4113 = vunpack.c.l.b16 %v1819
      %v4114 = vunpack.c.h.b16 %v1819
      %v4115 = vunpack.c.l.b16 %v1820
      %v4116 = vunpack.c.h.b16 %v1820
      %v4117 = vunpack.c.l.b16 %v1821
      %v4118 = vunpack.c.h.b16 %v1821
      %v4119 = vunpack.c.l.b16 %v1822
      %v4120 = vunpack.c.h.b16 %v1822
      %v4121 = vunpack.c.l.b16 %v1823
      %v4122 = vunpack.c.h.b16 %v1823
      %v4123 = vunpack.c.l.b16 %v1824
      %v4124 = vunpack.c.h.b16 %v1824
      %v4125 = vunpack.c.l.b16 %v1825
      %v4126 = vunpack.c.h.b16 %v1825
      %v4127 = vunpack.c.l.b16 %v1826
      %v4128 = vunpack.c.h.b16 %v1826
      %v4129 = vunpack.c.l.b16 %v1827
      %v4130 = vunpack.c.h.b16 %v1827
      %v4131 = vunpack.c.l.b16 %v1828
      %v4132 = vunpack.c.h.b16 %v1828
      %v4133 = vpack.c.b16 %v2605, %v2597
      %v4134 = vpack.c.b16 %v2606, %v2598
      %v4135 = vpack.c.b16 %v2607, %v2599
      %v4136 = vpack.c.b16 %v2608, %v2600
      %v4137 = vpack.c.b16 %v2609, %v2601
      %v4138 = vpack.c.b16 %v2610, %v2602
      %v4139 = vpack.c.b16 %v2611, %v2603
      %v4140 = vpack.c.b16 %v2612, %v2604
      %v4141 = vpack.c.b16 %v2621, %v2613
      %v4142 = vpack.c.b16 %v2622, %v2614
      %v4143 = vpack.c.b16 %v2623, %v2615
      %v4144 = vpack.c.b16 %v2624, %v2616
      %v4145 = vpack.c.b16 %v2625, %v2617
      %v4146 = vpack.c.b16 %v2626, %v2618
      %v4147 = vpack.c.b16 %v2627, %v2619
      %v4148 = vpack.c.b16 %v2628, %v2620
      %v4149 = vpack.c.b16 %v2637, %v2629
      %v4150 = vpack.c.b16 %v2638, %v2630
      %v4151 = vpack.c.b16 %v2639, %v2631
      %v4152 = vpack.c.b16 %v2640, %v2632
      %v4153 = vpack.c.b16 %v2641, %v2633
      %v4154 = vpack.c.b16 %v2642, %v2634
      %v4155 = vpack.c.b16 %v2643, %v2635
      %v4156 = vpack.c.b16 %v2644, %v2636
      %v4157 = vpack.c.b16 %v2653, %v2645
      %v4158 = vpack.c.b16 %v2654, %v2646
      %v4159 = vpack.c.b16 %v2655, %v2647
      %v4160 = vpack.c.b16 %v2656, %v2648
      %v4161 = vpack.c.b16 %v2657, %v2649
      %v4162 = vpack.c.b16 %v2658, %v2650
      %v4163 = vpack.c.b16 %v2659, %v2651
      %v4164 = vpack.c.b16 %v2660, %v2652
      %v4165 = vpack.c.b16 %v2669, %v2661
      %v4166 = vpack.c.b16 %v2670, %v2662
      %v4167 = vpack.c.b16 %v2671, %v2663
      %v4168 = vpack.c.b16 %v2672, %v2664
      %v4169 = vpack.c.b16 %v2673, %v2665
      %v4170 = vpack.c.b16 %v2674, %v2666
      %v4171 = vpack.c.b16 %v2675, %v2667
      %v4172 = vpack.c.b16 %v2676, %v2668
      %v4173 = vpack.c.b16 %v2685, %v2677
      %v4174 = vpack.c.b16 %v2686, %v2678
      %v4175 = vpack.c.b16 %v2687, %v2679
      %v4176 = vpack.c.b16 %v2688, %v2680
      %v4177 = vpack.c.b16 %v2689, %v2681
      %v4178 = vpack.c.b16 %v2690, %v2682
      %v4179 = vpack.c.b16 %v2691, %v2683
      %v4180 = vpack.c.b16 %v2692, %v2684
      %v4181 = vpack.c.b16 %v2701, %v2693
      %v4182 = vpack.c.b16 %v2702, %v2694
      %v4183 = vpack.c.b16 %v2703, %v2695
      %v4184 = vpack.c.b16 %v2704, %v2696
      %v4185 = vpack.c.b16 %v2705, %v2697
      %v4186 = vpack.c.b16 %v2706, %v2698
      %v4187 = vpack.c.b16 %v2707, %v2699
      %v4188 = vpack.c.b16 %v2708, %v2700
      %v4189 = vpack.c.b16 %v2717, %v2709
      %v4190 = vpack.c.b16 %v2718, %v2710
      %v4191 = vpack.c.b16 %v2719, %v2711
      %v4192 = vpack.c.b16 %v2720, %v2712
      %v4193 = vpack.c.b16 %v2721, %v2713
      %v4194 = vpack.c.b16 %v2722, %v2714
      %v4195 = vpack.c.b16 %v2723, %v2715
      %v4196 = vpack.c.b16 %v2724, %v2716
      %v4197 = vpack.c.b16 %v2733, %v2725
      %v4198 = vpack.c.b16 %v2734, %v2726
      %v4199 = vpack.c.b16 %v2735, %v2727
      %v4200 = vpack.c.b16 %v2736, %v2728
      %v4201 = vpack.c.b16 %v2737, %v2729
      %v4202 = vpack.c.b16 %v2738, %v2730
      %v4203 = vpack.c.b16 %v2739, %v2731
      %v4204 = vpack.c.b16 %v2740, %v2732
      %v4205 = vpack.c.b16 %v2749, %v2741
      %v4206 = vpack.c.b16 %v2750, %v2742
      %v4207 = vpack.c.b16 %v2751, %v2743
      %v4208 = vpack.c.b16 %v2752, %v2744
      %v4209 = vpack.c.b16 %v2753, %v2745
      %v4210 = vpack.c.b16 %v2754, %v2746
      %v4211 = vpack.c.b16 %v2755, %v2747
      %v4212 = vpack.c.b16 %v2756, %v2748
      %v4213 = vpack.c.b16 %v2765, %v2757
      %v4214 = vpack.c.b16 %v2766, %v2758
      %v4215 = vpack.c.b16 %v2767, %v2759
      %v4216 = vpack.c.b16 %v2768, %v2760
      %v4217 = vpack.c.b16 %v2769, %v2761
      %v4218 = vpack.c.b16 %v2770, %v2762
      %v4219 = vpack.c.b16 %v2771, %v2763
      %v4220 = vpack.c.b16 %v2772, %v2764
      %v4221 = vpack.c.b16 %v2781, %v2773
      %v4222 = vpack.c.b16 %v2782, %v2774
      %v4223 = vpack.c.b16 %v2783, %v2775
      %v4224 = vpack.c.b16 %v2784, %v2776
      %v4225 = vpack.c.b16 %v2785, %v2777
      %v4226 = vpack.c.b16 %v2786, %v2778
      %v4227 = vpack.c.b16 %v2787, %v2779
      %v4228 = vpack.c.b16 %v2788, %v2780
      %v4229 = vpack.c.b16 %v2797, %v2789
      %v4230 = vpack.c.b16 %v2798, %v2790
      %v4231 = vpack.c.b16 %v2799, %v2791
      %v4232 = vpack.c.b16 %v2800, %v2792
      %v4233 = vpack.c.b16 %v2801, %v2793
      %v4234 = vpack.c.b16 %v2802, %v2794
      %v4235 = vpack.c.b16 %v2803, %v2795
      %v4236 = vpack.c.b16 %v2804, %v2796
      %v4237 = vpack.c.b16 %v2813, %v2805
      %v4238 = vpack.c.b16 %v2814, %v2806
      %v4239 = vpack.c.b16 %v2815, %v2807
      %v4240 = vpack.c.b16 %v2816, %v2808
      %v4241 = vpack.c.b16 %v2817, %v2809
      %v4242 = vpack.c.b16 %v2818, %v2810
      %v4243 = vpack.c.b16 %v2819, %v2811
      %v4244 = vpack.c.b16 %v2820, %v2812
      %v4245 = vpack.c.b16 %v2829, %v2821
      %v4246 = vpack.c.b16 %v2830, %v2822
      %v4247 = vpack.c.b16 %v2831, %v2823
      %v4248 = vpack.c.b16 %v2832, %v2824
      %v4249 = vpack.c.b16 %v2833, %v2825
      %v4250 = vpack.c.b16 %v2834, %v2826
      %v4251 = vpack.c.b16 %v2835, %v2827
      %v4252 = vpack.c.b16 %v2836, %v2828
      %v4253 = vpack.c.b16 %v2845, %v2837
      %v4254 = vpack.c.b16 %v2846, %v2838
      %v4255 = vpack.c.b16 %v2847, %v2839
      %v4256 = vpack.c.b16 %v2848, %v2840
      %v4257 = vpack.c.b16 %v2849, %v2841
      %v4258 = vpack.c.b16 %v2850, %v2842
      %v4259 = vpack.c.b16 %v2851, %v2843
      %v4260 = vpack.c.b16 %v2852, %v2844
      %v4261 = vpack.c.b16 %v2861, %v2853
      %v4262 = vpack.c.b16 %v2862, %v2854
      %v4263 = vpack.c.b16 %v2863, %v2855
      %v4264 = vpack.c.b16 %v2864, %v2856
      %v4265 = vpack.c.b16 %v2865, %v2857
      %v4266 = vpack.c.b16 %v2866, %v2858
      %v4267 = vpack.c.b16 %v2867, %v2859
      %v4268 = vpack.c.b16 %v2868, %v2860
      %v4269 = vpack.c.b16 %v2877, %v2869
      %v4270 = vpack.c.b16 %v2878, %v2870
      %v4271 = vpack.c.b16 %v2879, %v2871
      %v4272 = vpack.c.b16 %v2880, %v2872
      %v4273 = vpack.c.b16 %v2881, %v2873
      %v4274 = vpack.c.b16 %v2882, %v2874
      %v4275 = vpack.c.b16 %v2883, %v2875
      %v4276 = vpack.c.b16 %v2884, %v2876
      %v4277 = vpack.c.b16 %v2893, %v2885
      %v4278 = vpack.c.b16 %v2894, %v2886
      %v4279 = vpack.c.b16 %v2895, %v2887
      %v4280 = vpack.c.b16 %v2896, %v2888
      %v4281 = vpack.c.b16 %v2897, %v2889
      %v4282 = vpack.c.b16 %v2898, %v2890
      %v4283 = vpack.c.b16 %v2899, %v2891
      %v4284 = vpack.c.b16 %v2900, %v2892
      %v4285 = vpack.c.b16 %v2909, %v2901
      %v4286 = vpack.c.b16 %v2910, %v2902
      %v4287 = vpack.c.b16 %v2911, %v2903
      %v4288 = vpack.c.b16 %v2912, %v2904
      %v4289 = vpack.c.b16 %v2913, %v2905
      %v4290 = vpack.c.b16 %v2914, %v2906
      %v4291 = vpack.c.b16 %v2915, %v2907
      %v4292 = vpack.c.b16 %v2916, %v2908
      %v4293 = vpack.c.b16 %v2925, %v2917
      %v4294 = vpack.c.b16 %v2926, %v2918
      %v4295 = vpack.c.b16 %v2927, %v2919
      %v4296 = vpack.c.b16 %v2928, %v2920
      %v4297 = vpack.c.b16 %v2929, %v2921
      %v4298 = vpack.c.b16 %v2930, %v2922
      %v4299 = vpack.c.b16 %v2931, %v2923
      %v4300 = vpack.c.b16 %v2932, %v2924
      %v4301 = vpack.c.b16 %v2941, %v2933
      %v4302 = vpack.c.b16 %v2942, %v2934
      %v4303 = vpack.c.b16 %v2943, %v2935
      %v4304 = vpack.c.b16 %v2944, %v2936
      %v4305 = vpack.c.b16 %v2945, %v2937
      %v4306 = vpack.c.b16 %v2946, %v2938
      %v4307 = vpack.c.b16 %v2947, %v2939
      %v4308 = vpack.c.b16 %v2948, %v2940
      %v4309 = vpack.c.b16 %v2957, %v2949
      %v4310 = vpack.c.b16 %v2958, %v2950
      %v4311 = vpack.c.b16 %v2959, %v2951
      %v4312 = vpack.c.b16 %v2960, %v2952
      %v4313 = vpack.c.b16 %v2961, %v2953
      %v4314 = vpack.c.b16 %v2962, %v2954
      %v4315 = vpack.c.b16 %v2963, %v2955
      %v4316 = vpack.c.b16 %v2964, %v2956
      %v4317 = vpack.c.b16 %v2973, %v2965
      %v4318 = vpack.c.b16 %v2974, %v2966
      %v4319 = vpack.c.b16 %v2975, %v2967
      %v4320 = vpack.c.b16 %v2976, %v2968
      %v4321 = vpack.c.b16 %v2977, %v2969
      %v4322 = vpack.c.b16 %v2978, %v2970
      %v4323 = vpack.c.b16 %v2979, %v2971
      %v4324 = vpack.c.b16 %v2980, %v2972
      %v4325 = vpack.c.b16 %v2989, %v2981
      %v4326 = vpack.c.b16 %v2990, %v2982
      %v4327 = vpack.c.b16 %v2991, %v2983
      %v4328 = vpack.c.b16 %v2992, %v2984
      %v4329 = vpack.c.b16 %v2993, %v2985
      %v4330 = vpack.c.b16 %v2994, %v2986
      %v4331 = vpack.c.b16 %v2995, %v2987
      %v4332 = vpack.c.b16 %v2996, %v2988
      %v4333 = vpack.c.b16 %v3005, %v2997
      %v4334 = vpack.c.b16 %v3006, %v2998
      %v4335 = vpack.c.b16 %v3007, %v2999
      %v4336 = vpack.c.b16 %v3008, %v3000
      %v4337 = vpack.c.b16 %v3009, %v3001
      %v4338 = vpack.c.b16 %v3010, %v3002
      %v4339 = vpack.c.b16 %v3011, %v3003
      %v4340 = vpack.c.b16 %v3012, %v3004
      %v4341 = vpack.c.b16 %v3021, %v3013
      %v4342 = vpack.c.b16 %v3022, %v3014
      %v4343 = vpack.c.b16 %v3023, %v3015
      %v4344 = vpack.c.b16 %v3024, %v3016
      %v4345 = vpack.c.b16 %v3025, %v3017
      %v4346 = vpack.c.b16 %v3026, %v3018
      %v4347 = vpack.c.b16 %v3027, %v3019
      %v4348 = vpack.c.b16 %v3028, %v3020
      %v4349 = vpack.c.b16 %v3037, %v3029
      %v4350 = vpack.c.b16 %v3038, %v3030
      %v4351 = vpack.c.b16 %v3039, %v3031
      %v4352 = vpack.c.b16 %v3040, %v3032
      %v4353 = vpack.c.b16 %v3041, %v3033
      %v4354 = vpack.c.b16 %v3042, %v3034
      %v4355 = vpack.c.b16 %v3043, %v3035
      %v4356 = vpack.c.b16 %v3044, %v3036
      %v4357 = vpack.c.b16 %v3053, %v3045
      %v4358 = vpack.c.b16 %v3054, %v3046
      %v4359 = vpack.c.b16 %v3055, %v3047
      %v4360 = vpack.c.b16 %v3056, %v3048
      %v4361 = vpack.c.b16 %v3057, %v3049
      %v4362 = vpack.c.b16 %v3058, %v3050
      %v4363 = vpack.c.b16 %v3059, %v3051
      %v4364 = vpack.c.b16 %v3060, %v3052
      %v4365 = vpack.c.b16 %v3069, %v3061
      %v4366 = vpack.c.b16 %v3070, %v3062
      %v4367 = vpack.c.b16 %v3071, %v3063
      %v4368 = vpack.c.b16 %v3072, %v3064
      %v4369 = vpack.c.b16 %v3073, %v3065
      %v4370 = vpack.c.b16 %v3074, %v3066
      %v4371 = vpack.c.b16 %v3075, %v3067
      %v4372 = vpack.c.b16 %v3076, %v3068
      %v4373 = vpack.c.b16 %v3085, %v3077
      %v4374 = vpack.c.b16 %v3086, %v3078
      %v4375 = vpack.c.b16 %v3087, %v3079
      %v4376 = vpack.c.b16 %v3088, %v3080
      %v4377 = vpack.c.b16 %v3089, %v3081
      %v4378 = vpack.c.b16 %v3090, %v3082
      %v4379 = vpack.c.b16 %v3091, %v3083
      %v4380 = vpack.c.b16 %v3092, %v3084
      %v4381 = vpack.c.b16 %v3101, %v3093
      %v4382 = vpack.c.b16 %v3102, %v3094
      %v4383 = vpack.c.b16 %v3103, %v3095
      %v4384 = vpack.c.b16 %v3104, %v3096
      %v4385 = vpack.c.b16 %v3105, %v3097
      %v4386 = vpack.c.b16 %v3106, %v3098
      %v4387 = vpack.c.b16 %v3107, %v3099
      %v4388 = vpack.c.b16 %v3108, %v3100
      %v4389 = vpack.c.b16 %v3117, %v3109
      %v4390 = vpack.c.b16 %v3118, %v3110
      %v4391 = vpack.c.b16 %v3119, %v3111
      %v4392 = vpack.c.b16 %v3120, %v3112
      %v4393 = vpack.c.b16 %v3121, %v3113
      %v4394 = vpack.c.b16 %v3122, %v3114
      %v4395 = vpack.c.b16 %v3123, %v3115
      %v4396 = vpack.c.b16 %v3124, %v3116
      %v4397 = vpack.c.b16 %v3133, %v3125
      %v4398 = vpack.c.b16 %v3134, %v3126
      %v4399 = vpack.c.b16 %v3135, %v3127
      %v4400 = vpack.c.b16 %v3136, %v3128
      %v4401 = vpack.c.b16 %v3137, %v3129
      %v4402 = vpack.c.b16 %v3138, %v3130
      %v4403 = vpack.c.b16 %v3139, %v3131
      %v4404 = vpack.c.b16 %v3140, %v3132
      %v4405 = vpack.c.b16 %v3149, %v3141
      %v4406 = vpack.c.b16 %v3150, %v3142
      %v4407 = vpack.c.b16 %v3151, %v3143
      %v4408 = vpack.c.b16 %v3152, %v3144
      %v4409 = vpack.c.b16 %v3153, %v3145
      %v4410 = vpack.c.b16 %v3154, %v3146
      %v4411 = vpack.c.b16 %v3155, %v3147
      %v4412 = vpack.c.b16 %v3156, %v3148
      %v4413 = vpack.c.b16 %v3165, %v3157
      %v4414 = vpack.c.b16 %v3166, %v3158
      %v4415 = vpack.c.b16 %v3167, %v3159
      %v4416 = vpack.c.b16 %v3168, %v3160
      %v4417 = vpack.c.b16 %v3169, %v3161
      %v4418 = vpack.c.b16 %v3170, %v3162
      %v4419 = vpack.c.b16 %v3171, %v3163
      %v4420 = vpack.c.b16 %v3172, %v3164
      %v4421 = vpack.c.b16 %v3181, %v3173
      %v4422 = vpack.c.b16 %v3182, %v3174
      %v4423 = vpack.c.b16 %v3183, %v3175
      %v4424 = vpack.c.b16 %v3184, %v3176
      %v4425 = vpack.c.b16 %v3185, %v3177
      %v4426 = vpack.c.b16 %v3186, %v3178
      %v4427 = vpack.c.b16 %v3187, %v3179
      %v4428 = vpack.c.b16 %v3188, %v3180
      %v4429 = vpack.c.b16 %v3197, %v3189
      %v4430 = vpack.c.b16 %v3198, %v3190
      %v4431 = vpack.c.b16 %v3199, %v3191
      %v4432 = vpack.c.b16 %v3200, %v3192
      %v4433 = vpack.c.b16 %v3201, %v3193
      %v4434 = vpack.c.b16 %v3202, %v3194
      %v4435 = vpack.c.b16 %v3203, %v3195
      %v4436 = vpack.c.b16 %v3204, %v3196
      %v4437 = vpack.c.b16 %v3213, %v3205
      %v4438 = vpack.c.b16 %v3214, %v3206
      %v4439 = vpack.c.b16 %v3215, %v3207
      %v4440 = vpack.c.b16 %v3216, %v3208
      %v4441 = vpack.c.b16 %v3217, %v3209
      %v4442 = vpack.c.b16 %v3218, %v3210
      %v4443 = vpack.c.b16 %v3219, %v3211
      %v4444 = vpack.c.b16 %v3220, %v3212
      %v4445 = vpack.c.b16 %v3229, %v3221
      %v4446 = vpack.c.b16 %v3230, %v3222
      %v4447 = vpack.c.b16 %v3231, %v3223
      %v4448 = vpack.c.b16 %v3232, %v3224
      %v4449 = vpack.c.b16 %v3233, %v3225
      %v4450 = vpack.c.b16 %v3234, %v3226
      %v4451 = vpack.c.b16 %v3235, %v3227
      %v4452 = vpack.c.b16 %v3236, %v3228
      %v4453 = vpack.c.b16 %v3245, %v3237
      %v4454 = vpack.c.b16 %v3246, %v3238
      %v4455 = vpack.c.b16 %v3247, %v3239
      %v4456 = vpack.c.b16 %v3248, %v3240
      %v4457 = vpack.c.b16 %v3249, %v3241
      %v4458 = vpack.c.b16 %v3250, %v3242
      %v4459 = vpack.c.b16 %v3251, %v3243
      %v4460 = vpack.c.b16 %v3252, %v3244
      %v4461 = vpack.c.b16 %v3261, %v3253
      %v4462 = vpack.c.b16 %v3262, %v3254
      %v4463 = vpack.c.b16 %v3263, %v3255
      %v4464 = vpack.c.b16 %v3264, %v3256
      %v4465 = vpack.c.b16 %v3265, %v3257
      %v4466 = vpack.c.b16 %v3266, %v3258
      %v4467 = vpack.c.b16 %v3267, %v3259
      %v4468 = vpack.c.b16 %v3268, %v3260
      %v4469 = vpack.c.b16 %v3277, %v3269
      %v4470 = vpack.c.b16 %v3278, %v3270
      %v4471 = vpack.c.b16 %v3279, %v3271
      %v4472 = vpack.c.b16 %v3280, %v3272
      %v4473 = vpack.c.b16 %v3281, %v3273
      %v4474 = vpack.c.b16 %v3282, %v3274
      %v4475 = vpack.c.b16 %v3283, %v3275
      %v4476 = vpack.c.b16 %v3284, %v3276
      %v4477 = vpack.c.b16 %v3293, %v3285
      %v4478 = vpack.c.b16 %v3294, %v3286
      %v4479 = vpack.c.b16 %v3295, %v3287
      %v4480 = vpack.c.b16 %v3296, %v3288
      %v4481 = vpack.c.b16 %v3297, %v3289
      %v4482 = vpack.c.b16 %v3298, %v3290
      %v4483 = vpack.c.b16 %v3299, %v3291
      %v4484 = vpack.c.b16 %v3300, %v3292
      %v4485 = vpack.c.b16 %v3309, %v3301
      %v4486 = vpack.c.b16 %v3310, %v3302
      %v4487 = vpack.c.b16 %v3311, %v3303
      %v4488 = vpack.c.b16 %v3312, %v3304
      %v4489 = vpack.c.b16 %v3313, %v3305
      %v4490 = vpack.c.b16 %v3314, %v3306
      %v4491 = vpack.c.b16 %v3315, %v3307
      %v4492 = vpack.c.b16 %v3316, %v3308
      %v4493 = vpack.c.b16 %v3325, %v3317
      %v4494 = vpack.c.b16 %v3326, %v3318
      %v4495 = vpack.c.b16 %v3327, %v3319
      %v4496 = vpack.c.b16 %v3328, %v3320
      %v4497 = vpack.c.b16 %v3329, %v3321
      %v4498 = vpack.c.b16 %v3330, %v3322
      %v4499 = vpack.c.b16 %v3331, %v3323
      %v4500 = vpack.c.b16 %v3332, %v3324
      %v4501 = vpack.c.b16 %v3341, %v3333
      %v4502 = vpack.c.b16 %v3342, %v3334
      %v4503 = vpack.c.b16 %v3343, %v3335
      %v4504 = vpack.c.b16 %v3344, %v3336
      %v4505 = vpack.c.b16 %v3345, %v3337
      %v4506 = vpack.c.b16 %v3346, %v3338
      %v4507 = vpack.c.b16 %v3347, %v3339
      %v4508 = vpack.c.b16 %v3348, %v3340
      %v4509 = vpack.c.b16 %v3357, %v3349
      %v4510 = vpack.c.b16 %v3358, %v3350
      %v4511 = vpack.c.b16 %v3359, %v3351
      %v4512 = vpack.c.b16 %v3360, %v3352
      %v4513 = vpack.c.b16 %v3361, %v3353
      %v4514 = vpack.c.b16 %v3362, %v3354
      %v4515 = vpack.c.b16 %v3363, %v3355
      %v4516 = vpack.c.b16 %v3364, %v3356
      %v4517 = vpack.c.b16 %v3373, %v3365
      %v4518 = vpack.c.b16 %v3374, %v3366
      %v4519 = vpack.c.b16 %v3375, %v3367
      %v4520 = vpack.c.b16 %v3376, %v3368
      %v4521 = vpack.c.b16 %v3377, %v3369
      %v4522 = vpack.c.b16 %v3378, %v3370
      %v4523 = vpack.c.b16 %v3379, %v3371
      %v4524 = vpack.c.b16 %v3380, %v3372
      %v4525 = vpack.c.b16 %v3389, %v3381
      %v4526 = vpack.c.b16 %v3390, %v3382
      %v4527 = vpack.c.b16 %v3391, %v3383
      %v4528 = vpack.c.b16 %v3392, %v3384
      %v4529 = vpack.c.b16 %v3393, %v3385
      %v4530 = vpack.c.b16 %v3394, %v3386
      %v4531 = vpack.c.b16 %v3395, %v3387
      %v4532 = vpack.c.b16 %v3396, %v3388
      %v4533 = vpack.c.b16 %v3405, %v3397
      %v4534 = vpack.c.b16 %v3406, %v3398
      %v4535 = vpack.c.b16 %v3407, %v3399
      %v4536 = vpack.c.b16 %v3408, %v3400
      %v4537 = vpack.c.b16 %v3409, %v3401
      %v4538 = vpack.c.b16 %v3410, %v3402
      %v4539 = vpack.c.b16 %v3411, %v3403
      %v4540 = vpack.c.b16 %v3412, %v3404
      %v4541 = vpack.c.b16 %v3421, %v3413
      %v4542 = vpack.c.b16 %v3422, %v3414
      %v4543 = vpack.c.b16 %v3423, %v3415
      %v4544 = vpack.c.b16 %v3424, %v3416
      %v4545 = vpack.c.b16 %v3425, %v3417
      %v4546 = vpack.c.b16 %v3426, %v3418
      %v4547 = vpack.c.b16 %v3427, %v3419
      %v4548 = vpack.c.b16 %v3428, %v3420
      %v4549 = vpack.c.b16 %v3437, %v3429
      %v4550 = vpack.c.b16 %v3438, %v3430
      %v4551 = vpack.c.b16 %v3439, %v3431
      %v4552 = vpack.c.b16 %v3440, %v3432
      %v4553 = vpack.c.b16 %v3441, %v3433
      %v4554 = vpack.c.b16 %v3442, %v3434
      %v4555 = vpack.c.b16 %v3443, %v3435
      %v4556 = vpack.c.b16 %v3444, %v3436
      %v4557 = vpack.c.b16 %v3453, %v3445
      %v4558 = vpack.c.b16 %v3454, %v3446
      %v4559 = vpack.c.b16 %v3455, %v3447
      %v4560 = vpack.c.b16 %v3456, %v3448
      %v4561 = vpack.c.b16 %v3457, %v3449
      %v4562 = vpack.c.b16 %v3458, %v3450
      %v4563 = vpack.c.b16 %v3459, %v3451
      %v4564 = vpack.c.b16 %v3460, %v3452
      %v4565 = vpack.c.b16 %v3469, %v3461
      %v4566 = vpack.c.b16 %v3470, %v3462
      %v4567 = vpack.c.b16 %v3471, %v3463
      %v4568 = vpack.c.b16 %v3472, %v3464
      %v4569 = vpack.c.b16 %v3473, %v3465
      %v4570 = vpack.c.b16 %v3474, %v3466
      %v4571 = vpack.c.b16 %v3475, %v3467
      %v4572 = vpack.c.b16 %v3476, %v3468
      %v4573 = vpack.c.b16 %v3485, %v3477
      %v4574 = vpack.c.b16 %v3486, %v3478
      %v4575 = vpack.c.b16 %v3487, %v3479
      %v4576 = vpack.c.b16 %v3488, %v3480
      %v4577 = vpack.c.b16 %v3489, %v3481
      %v4578 = vpack.c.b16 %v3490, %v3482
      %v4579 = vpack.c.b16 %v3491, %v3483
      %v4580 = vpack.c.b16 %v3492, %v3484
      %v4581 = vpack.c.b16 %v3501, %v3493
      %v4582 = vpack.c.b16 %v3502, %v3494
      %v4583 = vpack.c.b16 %v3503, %v3495
      %v4584 = vpack.c.b16 %v3504, %v3496
      %v4585 = vpack.c.b16 %v3505, %v3497
      %v4586 = vpack.c.b16 %v3506, %v3498
      %v4587 = vpack.c.b16 %v3507, %v3499
      %v4588 = vpack.c.b16 %v3508, %v3500
      %v4589 = vpack.c.b16 %v3517, %v3509
      %v4590 = vpack.c.b16 %v3518, %v3510
      %v4591 = vpack.c.b16 %v3519, %v3511
      %v4592 = vpack.c.b16 %v3520, %v3512
      %v4593 = vpack.c.b16 %v3521, %v3513
      %v4594 = vpack.c.b16 %v3522, %v3514
      %v4595 = vpack.c.b16 %v3523, %v3515
      %v4596 = vpack.c.b16 %v3524, %v3516
      %v4597 = vpack.c.b16 %v3533, %v3525
      %v4598 = vpack.c.b16 %v3534, %v3526
      %v4599 = vpack.c.b16 %v3535, %v3527
      %v4600 = vpack.c.b16 %v3536, %v3528
      %v4601 = vpack.c.b16 %v3537, %v3529
      %v4602 = vpack.c.b16 %v3538, %v3530
      %v4603 = vpack.c.b16 %v3539, %v3531
      %v4604 = vpack.c.b16 %v3540, %v3532
      %v4605 = vpack.c.b16 %v3549, %v3541
      %v4606 = vpack.c.b16 %v3550, %v3542
      %v4607 = vpack.c.b16 %v3551, %v3543
      %v4608 = vpack.c.b16 %v3552, %v3544
      %v4609 = vpack.c.b16 %v3553, %v3545
      %v4610 = vpack.c.b16 %v3554, %v3546
      %v4611 = vpack.c.b16 %v3555, %v3547
      %v4612 = vpack.c.b16 %v3556, %v3548
      %v4613 = vpack.c.b16 %v3565, %v3557
      %v4614 = vpack.c.b16 %v3566, %v3558
      %v4615 = vpack.c.b16 %v3567, %v3559
      %v4616 = vpack.c.b16 %v3568, %v3560
      %v4617 = vpack.c.b16 %v3569, %v3561
      %v4618 = vpack.c.b16 %v3570, %v3562
      %v4619 = vpack.c.b16 %v3571, %v3563
      %v4620 = vpack.c.b16 %v3572, %v3564
      %v4621 = vpack.c.b16 %v3581, %v3573
      %v4622 = vpack.c.b16 %v3582, %v3574
      %v4623 = vpack.c.b16 %v3583, %v3575
      %v4624 = vpack.c.b16 %v3584, %v3576
      %v4625 = vpack.c.b16 %v3585, %v3577
      %v4626 = vpack.c.b16 %v3586, %v3578
      %v4627 = vpack.c.b16 %v3587, %v3579
      %v4628 = vpack.c.b16 %v3588, %v3580
      %v4629 = vpack.c.b16 %v3597, %v3589
      %v4630 = vpack.c.b16 %v3598, %v3590
      %v4631 = vpack.c.b16 %v3599, %v3591
      %v4632 = vpack.c.b16 %v3600, %v3592
      %v4633 = vpack.c.b16 %v3601, %v3593
      %v4634 = vpack.c.b16 %v3602, %v3594
      %v4635 = vpack.c.b16 %v3603, %v3595
      %v4636 = vpack.c.b16 %v3604, %v3596
      %v4637 = vpack.c.b16 %v3613, %v3605
      %v4638 = vpack.c.b16 %v3614, %v3606
      %v4639 = vpack.c.b16 %v3615, %v3607
      %v4640 = vpack.c.b16 %v3616, %v3608
      %v4641 = vpack.c.b16 %v3617, %v3609
      %v4642 = vpack.c.b16 %v3618, %v3610
      %v4643 = vpack.c.b16 %v3619, %v3611
      %v4644 = vpack.c.b16 %v3620, %v3612
      %v4645 = vpack.c.b16 %v3629, %v3621
      %v4646 = vpack.c.b16 %v3630, %v3622
      %v4647 = vpack.c.b16 %v3631, %v3623
      %v4648 = vpack.c.b16 %v3632, %v3624
      %v4649 = vpack.c.b16 %v3633, %v3625
      %v4650 = vpack.c.b16 %v3634, %v3626
      %v4651 = vpack.c.b16 %v3635, %v3627
      %v4652 = vpack.c.b16 %v3636, %v3628
      %v4653 = vpack.c.b16 %v3645, %v3637
      %v4654 = vpack.c.b16 %v3646, %v3638
      %v4655 = vpack.c.b16 %v3647, %v3639
      %v4656 = vpack.c.b16 %v3648, %v3640
      %v4657 = vpack.c.b16 %v3649, %v3641
      %v4658 = vpack.c.b16 %v3650, %v3642
      %v4659 = vpack.c.b16 %v3651, %v3643
      %v4660 = vpack.c.b16 %v3652, %v3644
      %v4661 = vpack.c.b16 %v3661, %v3653
      %v4662 = vpack.c.b16 %v3662, %v3654
      %v4663 = vpack.c.b16 %v3663, %v3655
      %v4664 = vpack.c.b16 %v3664, %v3656
      %v4665 = vpack.c.b16 %v3665, %v3657
      %v4666 = vpack.c.b16 %v3666, %v3658
      %v4667 = vpack.c.b16 %v3667, %v3659
      %v4668 = vpack.c.b16 %v3668, %v3660
      %v4669 = vpack.c.b16 %v3677, %v3669
      %v4670 = vpack.c.b16 %v3678, %v3670
      %v4671 = vpack.c.b16 %v3679, %v3671
      %v4672 = vpack.c.b16 %v3680, %v3672
      %v4673 = vpack.c.b16 %v3681, %v3673
      %v4674 = vpack.c.b16 %v3682, %v3674
      %v4675 = vpack.c.b16 %v3683, %v3675
      %v4676 = vpack.c.b16 %v3684, %v3676
      %v4677 = vpack.c.b16 %v3693, %v3685
      %v4678 = vpack.c.b16 %v3694, %v3686
      %v4679 = vpack.c.b16 %v3695, %v3687
      %v4680 = vpack.c.b16 %v3696, %v3688
      %v4681 = vpack.c.b16 %v3697, %v3689
      %v4682 = vpack.c.b16 %v3698, %v3690
      %v4683 = vpack.c.b16 %v3699, %v3691
      %v4684 = vpack.c.b16 %v3700, %v3692
      %v4685 = vpack.c.b16 %v3709, %v3701
      %v4686 = vpack.c.b16 %v3710, %v3702
      %v4687 = vpack.c.b16 %v3711, %v3703
      %v4688 = vpack.c.b16 %v3712, %v3704
      %v4689 = vpack.c.b16 %v3713, %v3705
      %v4690 = vpack.c.b16 %v3714, %v3706
      %v4691 = vpack.c.b16 %v3715, %v3707
      %v4692 = vpack.c.b16 %v3716, %v3708
      %v4693 = vpack.c.b16 %v3725, %v3717
      %v4694 = vpack.c.b16 %v3726, %v3718
      %v4695 = vpack.c.b16 %v3727, %v3719
      %v4696 = vpack.c.b16 %v3728, %v3720
      %v4697 = vpack.c.b16 %v3729, %v3721
      %v4698 = vpack.c.b16 %v3730, %v3722
      %v4699 = vpack.c.b16 %v3731, %v3723
      %v4700 = vpack.c.b16 %v3732, %v3724
      %v4701 = vpack.c.b16 %v3741, %v3733
      %v4702 = vpack.c.b16 %v3742, %v3734
      %v4703 = vpack.c.b16 %v3743, %v3735
      %v4704 = vpack.c.b16 %v3744, %v3736
      %v4705 = vpack.c.b16 %v3745, %v3737
      %v4706 = vpack.c.b16 %v3746, %v3738
      %v4707 = vpack.c.b16 %v3747, %v3739
      %v4708 = vpack.c.b16 %v3748, %v3740
      %v4709 = vpack.c.b16 %v3757, %v3749
      %v4710 = vpack.c.b16 %v3758, %v3750
      %v4711 = vpack.c.b16 %v3759, %v3751
      %v4712 = vpack.c.b16 %v3760, %v3752
      %v4713 = vpack.c.b16 %v3761, %v3753
      %v4714 = vpack.c.b16 %v3762, %v3754
      %v4715 = vpack.c.b16 %v3763, %v3755
      %v4716 = vpack.c.b16 %v3764, %v3756
      %v4717 = vpack.c.b16 %v3773, %v3765
      %v4718 = vpack.c.b16 %v3774, %v3766
      %v4719 = vpack.c.b16 %v3775, %v3767
      %v4720 = vpack.c.b16 %v3776, %v3768
      %v4721 = vpack.c.b16 %v3777, %v3769
      %v4722 = vpack.c.b16 %v3778, %v3770
      %v4723 = vpack.c.b16 %v3779, %v3771
      %v4724 = vpack.c.b16 %v3780, %v3772
      %v4725 = vpack.c.b16 %v3789, %v3781
      %v4726 = vpack.c.b16 %v3790, %v3782
      %v4727 = vpack.c.b16 %v3791, %v3783
      %v4728 = vpack.c.b16 %v3792, %v3784
      %v4729 = vpack.c.b16 %v3793, %v3785
      %v4730 = vpack.c.b16 %v3794, %v3786
      %v4731 = vpack.c.b16 %v3795, %v3787
      %v4732 = vpack.c.b16 %v3796, %v3788
      %v4733 = vpack.c.b16 %v3805, %v3797
      %v4734 = vpack.c.b16 %v3806, %v3798
      %v4735 = vpack.c.b16 %v3807, %v3799
      %v4736 = vpack.c.b16 %v3808, %v3800
      %v4737 = vpack.c.b16 %v3809, %v3801
      %v4738 = vpack.c.b16 %v3810, %v3802
      %v4739 = vpack.c.b16 %v3811, %v3803
      %v4740 = vpack.c.b16 %v3812, %v3804
      %v4741 = vpack.c.b16 %v3821, %v3813
      %v4742 = vpack.c.b16 %v3822, %v3814
      %v4743 = vpack.c.b16 %v3823, %v3815
      %v4744 = vpack.c.b16 %v3824, %v3816
      %v4745 = vpack.c.b16 %v3825, %v3817
      %v4746 = vpack.c.b16 %v3826, %v3818
      %v4747 = vpack.c.b16 %v3827, %v3819
      %v4748 = vpack.c.b16 %v3828, %v3820
      %v4749 = vpack.c.b16 %v3837, %v3829
      %v4750 = vpack.c.b16 %v3838, %v3830
      %v4751 = vpack.c.b16 %v3839, %v3831
      %v4752 = vpack.c.b16 %v3840, %v3832
      %v4753 = vpack.c.b16 %v3841, %v3833
      %v4754 = vpack.c.b16 %v3842, %v3834
      %v4755 = vpack.c.b16 %v3843, %v3835
      %v4756 = vpack.c.b16 %v3844, %v3836
      %v4757 = vpack.c.b16 %v3853, %v3845
      %v4758 = vpack.c.b16 %v3854, %v3846
      %v4759 = vpack.c.b16 %v3855, %v3847
      %v4760 = vpack.c.b16 %v3856, %v3848
      %v4761 = vpack.c.b16 %v3857, %v3849
      %v4762 = vpack.c.b16 %v3858, %v3850
      %v4763 = vpack.c.b16 %v3859, %v3851
      %v4764 = vpack.c.b16 %v3860, %v3852
      %v4765 = vpack.c.b16 %v3869, %v3861
      %v4766 = vpack.c.b16 %v3870, %v3862
      %v4767 = vpack.c.b16 %v3871, %v3863
      %v4768 = vpack.c.b16 %v3872, %v3864
      %v4769 = vpack.c.b16 %v3873, %v3865
      %v4770 = vpack.c.b16 %v3874, %v3866
      %v4771 = vpack.c.b16 %v3875, %v3867
      %v4772 = vpack.c.b16 %v3876, %v3868
      %v4773 = vpack.c.b16 %v3885, %v3877
      %v4774 = vpack.c.b16 %v3886, %v3878
      %v4775 = vpack.c.b16 %v3887, %v3879
      %v4776 = vpack.c.b16 %v3888, %v3880
      %v4777 = vpack.c.b16 %v3889, %v3881
      %v4778 = vpack.c.b16 %v3890, %v3882
      %v4779 = vpack.c.b16 %v3891, %v3883
      %v4780 = vpack.c.b16 %v3892, %v3884
      %v4781 = vpack.c.b16 %v3901, %v3893
      %v4782 = vpack.c.b16 %v3902, %v3894
      %v4783 = vpack.c.b16 %v3903, %v3895
      %v4784 = vpack.c.b16 %v3904, %v3896
      %v4785 = vpack.c.b16 %v3905, %v3897
      %v4786 = vpack.c.b16 %v3906, %v3898
      %v4787 = vpack.c.b16 %v3907, %v3899
      %v4788 = vpack.c.b16 %v3908, %v3900
      %v4789 = vpack.c.b16 %v3917, %v3909
      %v4790 = vpack.c.b16 %v3918, %v3910
      %v4791 = vpack.c.b16 %v3919, %v3911
      %v4792 = vpack.c.b16 %v3920, %v3912
      %v4793 = vpack.c.b16 %v3921, %v3913
      %v4794 = vpack.c.b16 %v3922, %v3914
      %v4795 = vpack.c.b16 %v3923, %v3915
      %v4796 = vpack.c.b16 %v3924, %v3916
      %v4797 = vpack.c.b16 %v3933, %v3925
      %v4798 = vpack.c.b16 %v3934, %v3926
      %v4799 = vpack.c.b16 %v3935, %v3927
      %v4800 = vpack.c.b16 %v3936, %v3928
      %v4801 = vpack.c.b16 %v3937, %v3929
      %v4802 = vpack.c.b16 %v3938, %v3930
      %v4803 = vpack.c.b16 %v3939, %v3931
      %v4804 = vpack.c.b16 %v3940, %v3932
      %v4805 = vpack.c.b16 %v3949, %v3941
      %v4806 = vpack.c.b16 %v3950, %v3942
      %v4807 = vpack.c.b16 %v3951, %v3943
      %v4808 = vpack.c.b16 %v3952, %v3944
      %v4809 = vpack.c.b16 %v3953, %v3945
      %v4810 = vpack.c.b16 %v3954, %v3946
      %v4811 = vpack.c.b16 %v3955, %v3947
      %v4812 = vpack.c.b16 %v3956, %v3948
      %v4813 = vpack.c.b16 %v3965, %v3957
      %v4814 = vpack.c.b16 %v3966, %v3958
      %v4815 = vpack.c.b16 %v3967, %v3959
      %v4816 = vpack.c.b16 %v3968, %v3960
      %v4817 = vpack.c.b16 %v3969, %v3961
      %v4818 = vpack.c.b16 %v3970, %v3962
      %v4819 = vpack.c.b16 %v3971, %v3963
      %v4820 = vpack.c.b16 %v3972, %v3964
      %v4821 = vpack.c.b16 %v3981, %v3973
      %v4822 = vpack.c.b16 %v3982, %v3974
      %v4823 = vpack.c.b16 %v3983, %v3975
      %v4824 = vpack.c.b16 %v3984, %v3976
      %v4825 = vpack.c.b16 %v3985, %v3977
      %v4826 = vpack.c.b16 %v3986, %v3978
      %v4827 = vpack.c.b16 %v3987, %v3979
      %v4828 = vpack.c.b16 %v3988, %v3980
      %v4829 = vpack.c.b16 %v3997, %v3989
      %v4830 = vpack.c.b16 %v3998, %v3990
      %v4831 = vpack.c.b16 %v3999, %v3991
      %v4832 = vpack.c.b16 %v4000, %v3992
      %v4833 = vpack.c.b16 %v4001, %v3993
      %v4834 = vpack.c.b16 %v4002, %v3994
      %v4835 = vpack.c.b16 %v4003, %v3995
      %v4836 = vpack.c.b16 %v4004, %v3996
      %v4837 = vpack.c.b16 %v4013, %v4005
      %v4838 = vpack.c.b16 %v4014, %v4006
      %v4839 = vpack.c.b16 %v4015, %v4007
      %v4840 = vpack.c.b16 %v4016, %v4008
      %v4841 = vpack.c.b16 %v4017, %v4009
      %v4842 = vpack.c.b16 %v4018, %v4010
      %v4843 = vpack.c.b16 %v4019, %v4011
      %v4844 = vpack.c.b16 %v4020, %v4012
      %v4845 = vpack.c.b16 %v4029, %v4021
      %v4846 = vpack.c.b16 %v4030, %v4022
      %v4847 = vpack.c.b16 %v4031, %v4023
      %v4848 = vpack.c.b16 %v4032, %v4024
      %v4849 = vpack.c.b16 %v4033, %v4025
      %v4850 = vpack.c.b16 %v4034, %v4026
      %v4851 = vpack.c.b16 %v4035, %v4027
      %v4852 = vpack.c.b16 %v4036, %v4028
      %v4853 = vpack.c.b16 %v4045, %v4037
      %v4854 = vpack.c.b16 %v4046, %v4038
      %v4855 = vpack.c.b16 %v4047, %v4039
      %v4856 = vpack.c.b16 %v4048, %v4040
      %v4857 = vpack.c.b16 %v4049, %v4041
      %v4858 = vpack.c.b16 %v4050, %v4042
      %v4859 = vpack.c.b16 %v4051, %v4043
      %v4860 = vpack.c.b16 %v4052, %v4044
      %v4861 = vpack.c.b16 %v4061, %v4053
      %v4862 = vpack.c.b16 %v4062, %v4054
      %v4863 = vpack.c.b16 %v4063, %v4055
      %v4864 = vpack.c.b16 %v4064, %v4056
      %v4865 = vpack.c.b16 %v4065, %v4057
      %v4866 = vpack.c.b16 %v4066, %v4058
      %v4867 = vpack.c.b16 %v4067, %v4059
      %v4868 = vpack.c.b16 %v4068, %v4060
      %v4869 = vpack.c.b16 %v4077, %v4069
      %v4870 = vpack.c.b16 %v4078, %v4070
      %v4871 = vpack.c.b16 %v4079, %v4071
      %v4872 = vpack.c.b16 %v4080, %v4072
      %v4873 = vpack.c.b16 %v4081, %v4073
      %v4874 = vpack.c.b16 %v4082, %v4074
      %v4875 = vpack.c.b16 %v4083, %v4075
      %v4876 = vpack.c.b16 %v4084, %v4076
      %v4877 = vpack.c.b16 %v4093, %v4085
      %v4878 = vpack.c.b16 %v4094, %v4086
      %v4879 = vpack.c.b16 %v4095, %v4087
      %v4880 = vpack.c.b16 %v4096, %v4088
      %v4881 = vpack.c.b16 %v4097, %v4089
      %v4882 = vpack.c.b16 %v4098, %v4090
      %v4883 = vpack.c.b16 %v4099, %v4091
      %v4884 = vpack.c.b16 %v4100, %v4092
      %v4885 = vpack.c.b16 %v4109, %v4101
      %v4886 = vpack.c.b16 %v4110, %v4102
      %v4887 = vpack.c.b16 %v4111, %v4103
      %v4888 = vpack.c.b16 %v4112, %v4104
      %v4889 = vpack.c.b16 %v4113, %v4105
      %v4890 = vpack.c.b16 %v4114, %v4106
      %v4891 = vpack.c.b16 %v4115, %v4107
      %v4892 = vpack.c.b16 %v4116, %v4108
      %v4893 = vpack.c.b16 %v4125, %v4117
      %v4894 = vpack.c.b16 %v4126, %v4118
      %v4895 = vpack.c.b16 %v4127, %v4119
      %v4896 = vpack.c.b16 %v4128, %v4120
      %v4897 = vpack.c.b16 %v4129, %v4121
      %v4898 = vpack.c.b16 %v4130, %v4122
      %v4899 = vpack.c.b16 %v4131, %v4123
      %v4900 = vpack.c.b16 %v4132, %v4124
      %5669 = vmatpush.bf16.msra.mxu0 %v4189
      %5670 = vmatpush.bf16.msra.mxu0 %v4181
      %5671 = vmatpush.bf16.msra.mxu0 %v4173
      %5672 = vmatpush.bf16.msra.mxu0 %v4165
      %5673 = vmatpush.bf16.msra.mxu0 %v4157
      %5674 = vmatpush.bf16.msra.mxu0 %v4149
      %5675 = vmatpush.bf16.msra.mxu0 %v4141
      %5676 = vmatpush.bf16.msra.mxu0 %v4133
      %5677 = vmatmul.bf16.gmra.mxu0 %v1049
      %v5678 = vpop.f32.mrf.mxu0
      %v5679 = vadd.f32 0.0, %v5678
      %v5680 = vpop.f32.mrf.mxu0
      %5681 = vdwg.mxu0
      %5682 = vmatpush.bf16.msra.mxu0 %v4253
      %5683 = vmatpush.bf16.msra.mxu0 %v4245
      %5684 = vmatpush.bf16.msra.mxu0 %v4237
      %5685 = vmatpush.bf16.msra.mxu0 %v4229
      %5686 = vmatpush.bf16.msra.mxu0 %v4221
      %5687 = vmatpush.bf16.msra.mxu0 %v4213
      %5688 = vmatpush.bf16.msra.mxu0 %v4205
      %5689 = vmatpush.bf16.msra.mxu0 %v4197
      %5690 = vmatmul.bf16.gmra.mxu0 %v1050
      %v5691 = vpop.f32.mrf.mxu0
      %v5692 = vadd.f32 %v5679, %v5691
      %v5693 = vpop.f32.mrf.mxu0
      %5694 = vdwg.mxu0
      %5695 = vmatpush.bf16.msra.mxu0 %v4317
      %5696 = vmatpush.bf16.msra.mxu0 %v4309
      %5697 = vmatpush.bf16.msra.mxu0 %v4301
      %5698 = vmatpush.bf16.msra.mxu0 %v4293
      %5699 = vmatpush.bf16.msra.mxu0 %v4285
      %5700 = vmatpush.bf16.msra.mxu0 %v4277
      %5701 = vmatpush.bf16.msra.mxu0 %v4269
      %5702 = vmatpush.bf16.msra.mxu0 %v4261
      %5703 = vmatmul.bf16.gmra.mxu0 %v1051
      %v5704 = vpop.f32.mrf.mxu0
      %v5705 = vadd.f32 %v5692, %v5704
      %v5706 = vpop.f32.mrf.mxu0
      %5707 = vdwg.mxu0
      %5708 = vmatpush.bf16.msra.mxu0 %v4381
      %5709 = vmatpush.bf16.msra.mxu0 %v4373
      %5710 = vmatpush.bf16.msra.mxu0 %v4365
      %5711 = vmatpush.bf16.msra.mxu0 %v4357
      %5712 = vmatpush.bf16.msra.mxu0 %v4349
      %5713 = vmatpush.bf16.msra.mxu0 %v4341
      %5714 = vmatpush.bf16.msra.mxu0 %v4333
      %5715 = vmatpush.bf16.msra.mxu0 %v4325
      %5716 = vmatmul.bf16.gmra.mxu0 %v1052
      %v5717 = vpop.f32.mrf.mxu0
      %v5718 = vadd.f32 %v5705, %v5717
      %v5719 = vpop.f32.mrf.mxu0
      %5720 = vdwg.mxu0
      %5721 = vmatpush.bf16.msra.mxu0 %v4445
      %5722 = vmatpush.bf16.msra.mxu0 %v4437
      %5723 = vmatpush.bf16.msra.mxu0 %v4429
      %5724 = vmatpush.bf16.msra.mxu0 %v4421
      %5725 = vmatpush.bf16.msra.mxu0 %v4413
      %5726 = vmatpush.bf16.msra.mxu0 %v4405
      %5727 = vmatpush.bf16.msra.mxu0 %v4397
      %5728 = vmatpush.bf16.msra.mxu0 %v4389
      %5729 = vmatmul.bf16.gmra.mxu0 %v1053
      %v5730 = vpop.f32.mrf.mxu0
      %v5731 = vadd.f32 %v5718, %v5730
      %v5732 = vpop.f32.mrf.mxu0
      %5733 = vdwg.mxu0
      %5734 = vmatpush.bf16.msra.mxu0 %v4509
      %5735 = vmatpush.bf16.msra.mxu0 %v4501
      %5736 = vmatpush.bf16.msra.mxu0 %v4493
      %5737 = vmatpush.bf16.msra.mxu0 %v4485
      %5738 = vmatpush.bf16.msra.mxu0 %v4477
      %5739 = vmatpush.bf16.msra.mxu0 %v4469
      %5740 = vmatpush.bf16.msra.mxu0 %v4461
      %5741 = vmatpush.bf16.msra.mxu0 %v4453
      %5742 = vmatmul.bf16.gmra.mxu0 %v1054
      %v5743 = vpop.f32.mrf.mxu0
      %v5744 = vadd.f32 %v5731, %v5743
      %v5745 = vpop.f32.mrf.mxu0
      %5746 = vdwg.mxu0
      %5747 = vmatpush.bf16.msra.mxu0 %v4573
      %5748 = vmatpush.bf16.msra.mxu0 %v4565
      %5749 = vmatpush.bf16.msra.mxu0 %v4557
      %5750 = vmatpush.bf16.msra.mxu0 %v4549
      %5751 = vmatpush.bf16.msra.mxu0 %v4541
      %5752 = vmatpush.bf16.msra.mxu0 %v4533
      %5753 = vmatpush.bf16.msra.mxu0 %v4525
      %5754 = vmatpush.bf16.msra.mxu0 %v4517
      %5755 = vmatmul.bf16.gmra.mxu0 %v1055
      %v5756 = vpop.f32.mrf.mxu0
      %v5757 = vadd.f32 %v5744, %v5756
      %v5758 = vpop.f32.mrf.mxu0
      %5759 = vdwg.mxu0
      %5760 = vmatpush.bf16.msra.mxu0 %v4637
      %5761 = vmatpush.bf16.msra.mxu0 %v4629
      %5762 = vmatpush.bf16.msra.mxu0 %v4621
      %5763 = vmatpush.bf16.msra.mxu0 %v4613
      %5764 = vmatpush.bf16.msra.mxu0 %v4605
      %5765 = vmatpush.bf16.msra.mxu0 %v4597
      %5766 = vmatpush.bf16.msra.mxu0 %v4589
      %5767 = vmatpush.bf16.msra.mxu0 %v4581
      %5768 = vmatmul.bf16.gmra.mxu0 %v1056
      %v5769 = vpop.f32.mrf.mxu0
      %v5770 = vadd.f32 %v5757, %v5769
      %v5771 = vpop.f32.mrf.mxu0
      %5772 = vdwg.mxu0
      %5773 = vmatpush.bf16.msra.mxu0 %v4701
      %5774 = vmatpush.bf16.msra.mxu0 %v4693
      %5775 = vmatpush.bf16.msra.mxu0 %v4685
      %5776 = vmatpush.bf16.msra.mxu0 %v4677
      %5777 = vmatpush.bf16.msra.mxu0 %v4669
      %5778 = vmatpush.bf16.msra.mxu0 %v4661
      %5779 = vmatpush.bf16.msra.mxu0 %v4653
      %5780 = vmatpush.bf16.msra.mxu0 %v4645
      %5781 = vmatmul.bf16.gmra.mxu0 %v1057
      %v5782 = vpop.f32.mrf.mxu0
      %v5783 = vadd.f32 %v5770, %v5782
      %v5784 = vpop.f32.mrf.mxu0
      %5785 = vdwg.mxu0
      %5786 = vmatpush.bf16.msra.mxu0 %v4765
      %5787 = vmatpush.bf16.msra.mxu0 %v4757
      %5788 = vmatpush.bf16.msra.mxu0 %v4749
      %5789 = vmatpush.bf16.msra.mxu0 %v4741
      %5790 = vmatpush.bf16.msra.mxu0 %v4733
      %5791 = vmatpush.bf16.msra.mxu0 %v4725
      %5792 = vmatpush.bf16.msra.mxu0 %v4717
      %5793 = vmatpush.bf16.msra.mxu0 %v4709
      %5794 = vmatmul.bf16.gmra.mxu0 %v1058
      %v5795 = vpop.f32.mrf.mxu0
      %v5796 = vadd.f32 %v5783, %v5795
      %v5797 = vpop.f32.mrf.mxu0
      %5798 = vdwg.mxu0
      %5799 = vmatpush.bf16.msra.mxu0 %v4829
      %5800 = vmatpush.bf16.msra.mxu0 %v4821
      %5801 = vmatpush.bf16.msra.mxu0 %v4813
      %5802 = vmatpush.bf16.msra.mxu0 %v4805
      %5803 = vmatpush.bf16.msra.mxu0 %v4797
      %5804 = vmatpush.bf16.msra.mxu0 %v4789
      %5805 = vmatpush.bf16.msra.mxu0 %v4781
      %5806 = vmatpush.bf16.msra.mxu0 %v4773
      %5807 = vmatmul.bf16.gmra.mxu0 %v1059
      %v5808 = vpop.f32.mrf.mxu0
      %v5809 = vadd.f32 %v5796, %v5808
      %v5810 = vpop.f32.mrf.mxu0
      %5811 = vdwg.mxu0
      %5812 = vmatpush.bf16.msra.mxu0 %v4893
      %5813 = vmatpush.bf16.msra.mxu0 %v4885
      %5814 = vmatpush.bf16.msra.mxu0 %v4877
      %5815 = vmatpush.bf16.msra.mxu0 %v4869
      %5816 = vmatpush.bf16.msra.mxu0 %v4861
      %5817 = vmatpush.bf16.msra.mxu0 %v4853
      %5818 = vmatpush.bf16.msra.mxu0 %v4845
      %5819 = vmatpush.bf16.msra.mxu0 %v4837
      %5820 = vmatmul.bf16.gmra.mxu0 %v1060
      %v5821 = vpop.f32.mrf.mxu0
      %v5822 = vadd.f32 %v5809, %v5821
      %v5823 = vpop.f32.mrf.mxu0
      %5824 = vdwg.mxu0
      %5825 = vmatpush.bf16.msra.mxu0 %v4190
      %5826 = vmatpush.bf16.msra.mxu0 %v4182
      %5827 = vmatpush.bf16.msra.mxu0 %v4174
      %5828 = vmatpush.bf16.msra.mxu0 %v4166
      %5829 = vmatpush.bf16.msra.mxu0 %v4158
      %5830 = vmatpush.bf16.msra.mxu0 %v4150
      %5831 = vmatpush.bf16.msra.mxu0 %v4142
      %5832 = vmatpush.bf16.msra.mxu0 %v4134
      %5833 = vmatmul.bf16.gmra.mxu0 %v1049
      %v5834 = vpop.f32.mrf.mxu0
      %v5835 = vadd.f32 0.0, %v5834
      %v5836 = vpop.f32.mrf.mxu0
      %5837 = vdwg.mxu0
      %5838 = vmatpush.bf16.msra.mxu0 %v4254
      %5839 = vmatpush.bf16.msra.mxu0 %v4246
      %5840 = vmatpush.bf16.msra.mxu0 %v4238
      %5841 = vmatpush.bf16.msra.mxu0 %v4230
      %5842 = vmatpush.bf16.msra.mxu0 %v4222
      %5843 = vmatpush.bf16.msra.mxu0 %v4214
      %5844 = vmatpush.bf16.msra.mxu0 %v4206
      %5845 = vmatpush.bf16.msra.mxu0 %v4198
      %5846 = vmatmul.bf16.gmra.mxu0 %v1050
      %v5847 = vpop.f32.mrf.mxu0
      %v5848 = vadd.f32 %v5835, %v5847
      %v5849 = vpop.f32.mrf.mxu0
      %5850 = vdwg.mxu0
      %5851 = vmatpush.bf16.msra.mxu0 %v4318
      %5852 = vmatpush.bf16.msra.mxu0 %v4310
      %5853 = vmatpush.bf16.msra.mxu0 %v4302
      %5854 = vmatpush.bf16.msra.mxu0 %v4294
      %5855 = vmatpush.bf16.msra.mxu0 %v4286
      %5856 = vmatpush.bf16.msra.mxu0 %v4278
      %5857 = vmatpush.bf16.msra.mxu0 %v4270
      %5858 = vmatpush.bf16.msra.mxu0 %v4262
      %5859 = vmatmul.bf16.gmra.mxu0 %v1051
      %v5860 = vpop.f32.mrf.mxu0
      %v5861 = vadd.f32 %v5848, %v5860
      %v5862 = vpop.f32.mrf.mxu0
      %5863 = vdwg.mxu0
      %5864 = vmatpush.bf16.msra.mxu0 %v4382
      %5865 = vmatpush.bf16.msra.mxu0 %v4374
      %5866 = vmatpush.bf16.msra.mxu0 %v4366
      %5867 = vmatpush.bf16.msra.mxu0 %v4358
      %5868 = vmatpush.bf16.msra.mxu0 %v4350
      %5869 = vmatpush.bf16.msra.mxu0 %v4342
      %5870 = vmatpush.bf16.msra.mxu0 %v4334
      %5871 = vmatpush.bf16.msra.mxu0 %v4326
      %5872 = vmatmul.bf16.gmra.mxu0 %v1052
      %v5873 = vpop.f32.mrf.mxu0
      %v5874 = vadd.f32 %v5861, %v5873
      %v5875 = vpop.f32.mrf.mxu0
      %5876 = vdwg.mxu0
      %5877 = vmatpush.bf16.msra.mxu0 %v4446
      %5878 = vmatpush.bf16.msra.mxu0 %v4438
      %5879 = vmatpush.bf16.msra.mxu0 %v4430
      %5880 = vmatpush.bf16.msra.mxu0 %v4422
      %5881 = vmatpush.bf16.msra.mxu0 %v4414
      %5882 = vmatpush.bf16.msra.mxu0 %v4406
      %5883 = vmatpush.bf16.msra.mxu0 %v4398
      %5884 = vmatpush.bf16.msra.mxu0 %v4390
      %5885 = vmatmul.bf16.gmra.mxu0 %v1053
      %v5886 = vpop.f32.mrf.mxu0
      %v5887 = vadd.f32 %v5874, %v5886
      %v5888 = vpop.f32.mrf.mxu0
      %5889 = vdwg.mxu0
      %5890 = vmatpush.bf16.msra.mxu0 %v4510
      %5891 = vmatpush.bf16.msra.mxu0 %v4502
      %5892 = vmatpush.bf16.msra.mxu0 %v4494
      %5893 = vmatpush.bf16.msra.mxu0 %v4486
      %5894 = vmatpush.bf16.msra.mxu0 %v4478
      %5895 = vmatpush.bf16.msra.mxu0 %v4470
      %5896 = vmatpush.bf16.msra.mxu0 %v4462
      %5897 = vmatpush.bf16.msra.mxu0 %v4454
      %5898 = vmatmul.bf16.gmra.mxu0 %v1054
      %v5899 = vpop.f32.mrf.mxu0
      %v5900 = vadd.f32 %v5887, %v5899
      %v5901 = vpop.f32.mrf.mxu0
      %5902 = vdwg.mxu0
      %5903 = vmatpush.bf16.msra.mxu0 %v4574
      %5904 = vmatpush.bf16.msra.mxu0 %v4566
      %5905 = vmatpush.bf16.msra.mxu0 %v4558
      %5906 = vmatpush.bf16.msra.mxu0 %v4550
      %5907 = vmatpush.bf16.msra.mxu0 %v4542
      %5908 = vmatpush.bf16.msra.mxu0 %v4534
      %5909 = vmatpush.bf16.msra.mxu0 %v4526
      %5910 = vmatpush.bf16.msra.mxu0 %v4518
      %5911 = vmatmul.bf16.gmra.mxu0 %v1055
      %v5912 = vpop.f32.mrf.mxu0
      %v5913 = vadd.f32 %v5900, %v5912
      %v5914 = vpop.f32.mrf.mxu0
      %5915 = vdwg.mxu0
      %5916 = vmatpush.bf16.msra.mxu0 %v4638
      %5917 = vmatpush.bf16.msra.mxu0 %v4630
      %5918 = vmatpush.bf16.msra.mxu0 %v4622
      %5919 = vmatpush.bf16.msra.mxu0 %v4614
      %5920 = vmatpush.bf16.msra.mxu0 %v4606
      %5921 = vmatpush.bf16.msra.mxu0 %v4598
      %5922 = vmatpush.bf16.msra.mxu0 %v4590
      %5923 = vmatpush.bf16.msra.mxu0 %v4582
      %5924 = vmatmul.bf16.gmra.mxu0 %v1056
      %v5925 = vpop.f32.mrf.mxu0
      %v5926 = vadd.f32 %v5913, %v5925
      %v5927 = vpop.f32.mrf.mxu0
      %5928 = vdwg.mxu0
      %5929 = vmatpush.bf16.msra.mxu0 %v4702
      %5930 = vmatpush.bf16.msra.mxu0 %v4694
      %5931 = vmatpush.bf16.msra.mxu0 %v4686
      %5932 = vmatpush.bf16.msra.mxu0 %v4678
      %5933 = vmatpush.bf16.msra.mxu0 %v4670
      %5934 = vmatpush.bf16.msra.mxu0 %v4662
      %5935 = vmatpush.bf16.msra.mxu0 %v4654
      %5936 = vmatpush.bf16.msra.mxu0 %v4646
      %5937 = vmatmul.bf16.gmra.mxu0 %v1057
      %v5938 = vpop.f32.mrf.mxu0
      %v5939 = vadd.f32 %v5926, %v5938
      %v5940 = vpop.f32.mrf.mxu0
      %5941 = vdwg.mxu0
      %5942 = vmatpush.bf16.msra.mxu0 %v4766
      %5943 = vmatpush.bf16.msra.mxu0 %v4758
      %5944 = vmatpush.bf16.msra.mxu0 %v4750
      %5945 = vmatpush.bf16.msra.mxu0 %v4742
      %5946 = vmatpush.bf16.msra.mxu0 %v4734
      %5947 = vmatpush.bf16.msra.mxu0 %v4726
      %5948 = vmatpush.bf16.msra.mxu0 %v4718
      %5949 = vmatpush.bf16.msra.mxu0 %v4710
      %5950 = vmatmul.bf16.gmra.mxu0 %v1058
      %v5951 = vpop.f32.mrf.mxu0
      %v5952 = vadd.f32 %v5939, %v5951
      %v5953 = vpop.f32.mrf.mxu0
      %5954 = vdwg.mxu0
      %5955 = vmatpush.bf16.msra.mxu0 %v4830
      %5956 = vmatpush.bf16.msra.mxu0 %v4822
      %5957 = vmatpush.bf16.msra.mxu0 %v4814
      %5958 = vmatpush.bf16.msra.mxu0 %v4806
      %5959 = vmatpush.bf16.msra.mxu0 %v4798
      %5960 = vmatpush.bf16.msra.mxu0 %v4790
      %5961 = vmatpush.bf16.msra.mxu0 %v4782
      %5962 = vmatpush.bf16.msra.mxu0 %v4774
      %5963 = vmatmul.bf16.gmra.mxu0 %v1059
      %v5964 = vpop.f32.mrf.mxu0
      %v5965 = vadd.f32 %v5952, %v5964
      %v5966 = vpop.f32.mrf.mxu0
      %5967 = vdwg.mxu0
      %5968 = vmatpush.bf16.msra.mxu0 %v4894
      %5969 = vmatpush.bf16.msra.mxu0 %v4886
      %5970 = vmatpush.bf16.msra.mxu0 %v4878
      %5971 = vmatpush.bf16.msra.mxu0 %v4870
      %5972 = vmatpush.bf16.msra.mxu0 %v4862
      %5973 = vmatpush.bf16.msra.mxu0 %v4854
      %5974 = vmatpush.bf16.msra.mxu0 %v4846
      %5975 = vmatpush.bf16.msra.mxu0 %v4838
      %5976 = vmatmul.bf16.gmra.mxu0 %v1060
      %v5977 = vpop.f32.mrf.mxu0
      %v5978 = vadd.f32 %v5965, %v5977
      %v5979 = vpop.f32.mrf.mxu0
      %5980 = vdwg.mxu0
      %5981 = vmatpush.bf16.msra.mxu0 %v4191
      %5982 = vmatpush.bf16.msra.mxu0 %v4183
      %5983 = vmatpush.bf16.msra.mxu0 %v4175
      %5984 = vmatpush.bf16.msra.mxu0 %v4167
      %5985 = vmatpush.bf16.msra.mxu0 %v4159
      %5986 = vmatpush.bf16.msra.mxu0 %v4151
      %5987 = vmatpush.bf16.msra.mxu0 %v4143
      %5988 = vmatpush.bf16.msra.mxu0 %v4135
      %5989 = vmatmul.bf16.gmra.mxu0 %v1049
      %v5990 = vpop.f32.mrf.mxu0
      %v5991 = vadd.f32 0.0, %v5990
      %v5992 = vpop.f32.mrf.mxu0
      %5993 = vdwg.mxu0
      %5994 = vmatpush.bf16.msra.mxu0 %v4255
      %5995 = vmatpush.bf16.msra.mxu0 %v4247
      %5996 = vmatpush.bf16.msra.mxu0 %v4239
      %5997 = vmatpush.bf16.msra.mxu0 %v4231
      %5998 = vmatpush.bf16.msra.mxu0 %v4223
      %5999 = vmatpush.bf16.msra.mxu0 %v4215
      %6000 = vmatpush.bf16.msra.mxu0 %v4207
      %6001 = vmatpush.bf16.msra.mxu0 %v4199
      %6002 = vmatmul.bf16.gmra.mxu0 %v1050
      %v6003 = vpop.f32.mrf.mxu0
      %v6004 = vadd.f32 %v5991, %v6003
      %v6005 = vpop.f32.mrf.mxu0
      %6006 = vdwg.mxu0
      %6007 = vmatpush.bf16.msra.mxu0 %v4319
      %6008 = vmatpush.bf16.msra.mxu0 %v4311
      %6009 = vmatpush.bf16.msra.mxu0 %v4303
      %6010 = vmatpush.bf16.msra.mxu0 %v4295
      %6011 = vmatpush.bf16.msra.mxu0 %v4287
      %6012 = vmatpush.bf16.msra.mxu0 %v4279
      %6013 = vmatpush.bf16.msra.mxu0 %v4271
      %6014 = vmatpush.bf16.msra.mxu0 %v4263
      %6015 = vmatmul.bf16.gmra.mxu0 %v1051
      %v6016 = vpop.f32.mrf.mxu0
      %v6017 = vadd.f32 %v6004, %v6016
      %v6018 = vpop.f32.mrf.mxu0
      %6019 = vdwg.mxu0
      %6020 = vmatpush.bf16.msra.mxu0 %v4383
      %6021 = vmatpush.bf16.msra.mxu0 %v4375
      %6022 = vmatpush.bf16.msra.mxu0 %v4367
      %6023 = vmatpush.bf16.msra.mxu0 %v4359
      %6024 = vmatpush.bf16.msra.mxu0 %v4351
      %6025 = vmatpush.bf16.msra.mxu0 %v4343
      %6026 = vmatpush.bf16.msra.mxu0 %v4335
      %6027 = vmatpush.bf16.msra.mxu0 %v4327
      %6028 = vmatmul.bf16.gmra.mxu0 %v1052
      %v6029 = vpop.f32.mrf.mxu0
      %v6030 = vadd.f32 %v6017, %v6029
      %v6031 = vpop.f32.mrf.mxu0
      %6032 = vdwg.mxu0
      %6033 = vmatpush.bf16.msra.mxu0 %v4447
      %6034 = vmatpush.bf16.msra.mxu0 %v4439
      %6035 = vmatpush.bf16.msra.mxu0 %v4431
      %6036 = vmatpush.bf16.msra.mxu0 %v4423
      %6037 = vmatpush.bf16.msra.mxu0 %v4415
      %6038 = vmatpush.bf16.msra.mxu0 %v4407
      %6039 = vmatpush.bf16.msra.mxu0 %v4399
      %6040 = vmatpush.bf16.msra.mxu0 %v4391
      %6041 = vmatmul.bf16.gmra.mxu0 %v1053
      %v6042 = vpop.f32.mrf.mxu0
      %v6043 = vadd.f32 %v6030, %v6042
      %v6044 = vpop.f32.mrf.mxu0
      %6045 = vdwg.mxu0
      %6046 = vmatpush.bf16.msra.mxu0 %v4511
      %6047 = vmatpush.bf16.msra.mxu0 %v4503
      %6048 = vmatpush.bf16.msra.mxu0 %v4495
      %6049 = vmatpush.bf16.msra.mxu0 %v4487
      %6050 = vmatpush.bf16.msra.mxu0 %v4479
      %6051 = vmatpush.bf16.msra.mxu0 %v4471
      %6052 = vmatpush.bf16.msra.mxu0 %v4463
      %6053 = vmatpush.bf16.msra.mxu0 %v4455
      %6054 = vmatmul.bf16.gmra.mxu0 %v1054
      %v6055 = vpop.f32.mrf.mxu0
      %v6056 = vadd.f32 %v6043, %v6055
      %v6057 = vpop.f32.mrf.mxu0
      %6058 = vdwg.mxu0
      %6059 = vmatpush.bf16.msra.mxu0 %v4575
      %6060 = vmatpush.bf16.msra.mxu0 %v4567
      %6061 = vmatpush.bf16.msra.mxu0 %v4559
      %6062 = vmatpush.bf16.msra.mxu0 %v4551
      %6063 = vmatpush.bf16.msra.mxu0 %v4543
      %6064 = vmatpush.bf16.msra.mxu0 %v4535
      %6065 = vmatpush.bf16.msra.mxu0 %v4527
      %6066 = vmatpush.bf16.msra.mxu0 %v4519
      %6067 = vmatmul.bf16.gmra.mxu0 %v1055
      %v6068 = vpop.f32.mrf.mxu0
      %v6069 = vadd.f32 %v6056, %v6068
      %v6070 = vpop.f32.mrf.mxu0
      %6071 = vdwg.mxu0
      %6072 = vmatpush.bf16.msra.mxu0 %v4639
      %6073 = vmatpush.bf16.msra.mxu0 %v4631
      %6074 = vmatpush.bf16.msra.mxu0 %v4623
      %6075 = vmatpush.bf16.msra.mxu0 %v4615
      %6076 = vmatpush.bf16.msra.mxu0 %v4607
      %6077 = vmatpush.bf16.msra.mxu0 %v4599
      %6078 = vmatpush.bf16.msra.mxu0 %v4591
      %6079 = vmatpush.bf16.msra.mxu0 %v4583
      %6080 = vmatmul.bf16.gmra.mxu0 %v1056
      %v6081 = vpop.f32.mrf.mxu0
      %v6082 = vadd.f32 %v6069, %v6081
      %v6083 = vpop.f32.mrf.mxu0
      %6084 = vdwg.mxu0
      %6085 = vmatpush.bf16.msra.mxu0 %v4703
      %6086 = vmatpush.bf16.msra.mxu0 %v4695
      %6087 = vmatpush.bf16.msra.mxu0 %v4687
      %6088 = vmatpush.bf16.msra.mxu0 %v4679
      %6089 = vmatpush.bf16.msra.mxu0 %v4671
      %6090 = vmatpush.bf16.msra.mxu0 %v4663
      %6091 = vmatpush.bf16.msra.mxu0 %v4655
      %6092 = vmatpush.bf16.msra.mxu0 %v4647
      %6093 = vmatmul.bf16.gmra.mxu0 %v1057
      %v6094 = vpop.f32.mrf.mxu0
      %v6095 = vadd.f32 %v6082, %v6094
      %v6096 = vpop.f32.mrf.mxu0
      %6097 = vdwg.mxu0
      %6098 = vmatpush.bf16.msra.mxu0 %v4767
      %6099 = vmatpush.bf16.msra.mxu0 %v4759
      %6100 = vmatpush.bf16.msra.mxu0 %v4751
      %6101 = vmatpush.bf16.msra.mxu0 %v4743
      %6102 = vmatpush.bf16.msra.mxu0 %v4735
      %6103 = vmatpush.bf16.msra.mxu0 %v4727
      %6104 = vmatpush.bf16.msra.mxu0 %v4719
      %6105 = vmatpush.bf16.msra.mxu0 %v4711
      %6106 = vmatmul.bf16.gmra.mxu0 %v1058
      %v6107 = vpop.f32.mrf.mxu0
      %v6108 = vadd.f32 %v6095, %v6107
      %v6109 = vpop.f32.mrf.mxu0
      %6110 = vdwg.mxu0
      %6111 = vmatpush.bf16.msra.mxu0 %v4831
      %6112 = vmatpush.bf16.msra.mxu0 %v4823
      %6113 = vmatpush.bf16.msra.mxu0 %v4815
      %6114 = vmatpush.bf16.msra.mxu0 %v4807
      %6115 = vmatpush.bf16.msra.mxu0 %v4799
      %6116 = vmatpush.bf16.msra.mxu0 %v4791
      %6117 = vmatpush.bf16.msra.mxu0 %v4783
      %6118 = vmatpush.bf16.msra.mxu0 %v4775
      %6119 = vmatmul.bf16.gmra.mxu0 %v1059
      %v6120 = vpop.f32.mrf.mxu0
      %v6121 = vadd.f32 %v6108, %v6120
      %v6122 = vpop.f32.mrf.mxu0
      %6123 = vdwg.mxu0
      %6124 = vmatpush.bf16.msra.mxu0 %v4895
      %6125 = vmatpush.bf16.msra.mxu0 %v4887
      %6126 = vmatpush.bf16.msra.mxu0 %v4879
      %6127 = vmatpush.bf16.msra.mxu0 %v4871
      %6128 = vmatpush.bf16.msra.mxu0 %v4863
      %6129 = vmatpush.bf16.msra.mxu0 %v4855
      %6130 = vmatpush.bf16.msra.mxu0 %v4847
      %6131 = vmatpush.bf16.msra.mxu0 %v4839
      %6132 = vmatmul.bf16.gmra.mxu0 %v1060
      %v6133 = vpop.f32.mrf.mxu0
      %v6134 = vadd.f32 %v6121, %v6133
      %v6135 = vpop.f32.mrf.mxu0
      %6136 = vdwg.mxu0
      %6137 = vmatpush.bf16.msra.mxu0 %v4192
      %6138 = vmatpush.bf16.msra.mxu0 %v4184
      %6139 = vmatpush.bf16.msra.mxu0 %v4176
      %6140 = vmatpush.bf16.msra.mxu0 %v4168
      %6141 = vmatpush.bf16.msra.mxu0 %v4160
      %6142 = vmatpush.bf16.msra.mxu0 %v4152
      %6143 = vmatpush.bf16.msra.mxu0 %v4144
      %6144 = vmatpush.bf16.msra.mxu0 %v4136
      %6145 = vmatmul.bf16.gmra.mxu0 %v1049
      %v6146 = vpop.f32.mrf.mxu0
      %v6147 = vadd.f32 0.0, %v6146
      %v6148 = vpop.f32.mrf.mxu0
      %6149 = vdwg.mxu0
      %6150 = vmatpush.bf16.msra.mxu0 %v4256
      %6151 = vmatpush.bf16.msra.mxu0 %v4248
      %6152 = vmatpush.bf16.msra.mxu0 %v4240
      %6153 = vmatpush.bf16.msra.mxu0 %v4232
      %6154 = vmatpush.bf16.msra.mxu0 %v4224
      %6155 = vmatpush.bf16.msra.mxu0 %v4216
      %6156 = vmatpush.bf16.msra.mxu0 %v4208
      %6157 = vmatpush.bf16.msra.mxu0 %v4200
      %6158 = vmatmul.bf16.gmra.mxu0 %v1050
      %v6159 = vpop.f32.mrf.mxu0
      %v6160 = vadd.f32 %v6147, %v6159
      %v6161 = vpop.f32.mrf.mxu0
      %6162 = vdwg.mxu0
      %6163 = vmatpush.bf16.msra.mxu0 %v4320
      %6164 = vmatpush.bf16.msra.mxu0 %v4312
      %6165 = vmatpush.bf16.msra.mxu0 %v4304
      %6166 = vmatpush.bf16.msra.mxu0 %v4296
      %6167 = vmatpush.bf16.msra.mxu0 %v4288
      %6168 = vmatpush.bf16.msra.mxu0 %v4280
      %6169 = vmatpush.bf16.msra.mxu0 %v4272
      %6170 = vmatpush.bf16.msra.mxu0 %v4264
      %6171 = vmatmul.bf16.gmra.mxu0 %v1051
      %v6172 = vpop.f32.mrf.mxu0
      %v6173 = vadd.f32 %v6160, %v6172
      %v6174 = vpop.f32.mrf.mxu0
      %6175 = vdwg.mxu0
      %6176 = vmatpush.bf16.msra.mxu0 %v4384
      %6177 = vmatpush.bf16.msra.mxu0 %v4376
      %6178 = vmatpush.bf16.msra.mxu0 %v4368
      %6179 = vmatpush.bf16.msra.mxu0 %v4360
      %6180 = vmatpush.bf16.msra.mxu0 %v4352
      %6181 = vmatpush.bf16.msra.mxu0 %v4344
      %6182 = vmatpush.bf16.msra.mxu0 %v4336
      %6183 = vmatpush.bf16.msra.mxu0 %v4328
      %6184 = vmatmul.bf16.gmra.mxu0 %v1052
      %v6185 = vpop.f32.mrf.mxu0
      %v6186 = vadd.f32 %v6173, %v6185
      %v6187 = vpop.f32.mrf.mxu0
      %6188 = vdwg.mxu0
      %6189 = vmatpush.bf16.msra.mxu0 %v4448
      %6190 = vmatpush.bf16.msra.mxu0 %v4440
      %6191 = vmatpush.bf16.msra.mxu0 %v4432
      %6192 = vmatpush.bf16.msra.mxu0 %v4424
      %6193 = vmatpush.bf16.msra.mxu0 %v4416
      %6194 = vmatpush.bf16.msra.mxu0 %v4408
      %6195 = vmatpush.bf16.msra.mxu0 %v4400
      %6196 = vmatpush.bf16.msra.mxu0 %v4392
      %6197 = vmatmul.bf16.gmra.mxu0 %v1053
      %v6198 = vpop.f32.mrf.mxu0
      %v6199 = vadd.f32 %v6186, %v6198
      %v6200 = vpop.f32.mrf.mxu0
      %6201 = vdwg.mxu0
      %6202 = vmatpush.bf16.msra.mxu0 %v4512
      %6203 = vmatpush.bf16.msra.mxu0 %v4504
      %6204 = vmatpush.bf16.msra.mxu0 %v4496
      %6205 = vmatpush.bf16.msra.mxu0 %v4488
      %6206 = vmatpush.bf16.msra.mxu0 %v4480
      %6207 = vmatpush.bf16.msra.mxu0 %v4472
      %6208 = vmatpush.bf16.msra.mxu0 %v4464
      %6209 = vmatpush.bf16.msra.mxu0 %v4456
      %6210 = vmatmul.bf16.gmra.mxu0 %v1054
      %v6211 = vpop.f32.mrf.mxu0
      %v6212 = vadd.f32 %v6199, %v6211
      %v6213 = vpop.f32.mrf.mxu0
      %6214 = vdwg.mxu0
      %6215 = vmatpush.bf16.msra.mxu0 %v4576
      %6216 = vmatpush.bf16.msra.mxu0 %v4568
      %6217 = vmatpush.bf16.msra.mxu0 %v4560
      %6218 = vmatpush.bf16.msra.mxu0 %v4552
      %6219 = vmatpush.bf16.msra.mxu0 %v4544
      %6220 = vmatpush.bf16.msra.mxu0 %v4536
      %6221 = vmatpush.bf16.msra.mxu0 %v4528
      %6222 = vmatpush.bf16.msra.mxu0 %v4520
      %6223 = vmatmul.bf16.gmra.mxu0 %v1055
      %v6224 = vpop.f32.mrf.mxu0
      %v6225 = vadd.f32 %v6212, %v6224
      %v6226 = vpop.f32.mrf.mxu0
      %6227 = vdwg.mxu0
      %6228 = vmatpush.bf16.msra.mxu0 %v4640
      %6229 = vmatpush.bf16.msra.mxu0 %v4632
      %6230 = vmatpush.bf16.msra.mxu0 %v4624
      %6231 = vmatpush.bf16.msra.mxu0 %v4616
      %6232 = vmatpush.bf16.msra.mxu0 %v4608
      %6233 = vmatpush.bf16.msra.mxu0 %v4600
      %6234 = vmatpush.bf16.msra.mxu0 %v4592
      %6235 = vmatpush.bf16.msra.mxu0 %v4584
      %6236 = vmatmul.bf16.gmra.mxu0 %v1056
      %v6237 = vpop.f32.mrf.mxu0
      %v6238 = vadd.f32 %v6225, %v6237
      %v6239 = vpop.f32.mrf.mxu0
      %6240 = vdwg.mxu0
      %6241 = vmatpush.bf16.msra.mxu0 %v4704
      %6242 = vmatpush.bf16.msra.mxu0 %v4696
      %6243 = vmatpush.bf16.msra.mxu0 %v4688
      %6244 = vmatpush.bf16.msra.mxu0 %v4680
      %6245 = vmatpush.bf16.msra.mxu0 %v4672
      %6246 = vmatpush.bf16.msra.mxu0 %v4664
      %6247 = vmatpush.bf16.msra.mxu0 %v4656
      %6248 = vmatpush.bf16.msra.mxu0 %v4648
      %6249 = vmatmul.bf16.gmra.mxu0 %v1057
      %v6250 = vpop.f32.mrf.mxu0
      %v6251 = vadd.f32 %v6238, %v6250
      %v6252 = vpop.f32.mrf.mxu0
      %6253 = vdwg.mxu0
      %6254 = vmatpush.bf16.msra.mxu0 %v4768
      %6255 = vmatpush.bf16.msra.mxu0 %v4760
      %6256 = vmatpush.bf16.msra.mxu0 %v4752
      %6257 = vmatpush.bf16.msra.mxu0 %v4744
      %6258 = vmatpush.bf16.msra.mxu0 %v4736
      %6259 = vmatpush.bf16.msra.mxu0 %v4728
      %6260 = vmatpush.bf16.msra.mxu0 %v4720
      %6261 = vmatpush.bf16.msra.mxu0 %v4712
      %6262 = vmatmul.bf16.gmra.mxu0 %v1058
      %v6263 = vpop.f32.mrf.mxu0
      %v6264 = vadd.f32 %v6251, %v6263
      %v6265 = vpop.f32.mrf.mxu0
      %6266 = vdwg.mxu0
      %6267 = vmatpush.bf16.msra.mxu0 %v4832
      %6268 = vmatpush.bf16.msra.mxu0 %v4824
      %6269 = vmatpush.bf16.msra.mxu0 %v4816
      %6270 = vmatpush.bf16.msra.mxu0 %v4808
      %6271 = vmatpush.bf16.msra.mxu0 %v4800
      %6272 = vmatpush.bf16.msra.mxu0 %v4792
      %6273 = vmatpush.bf16.msra.mxu0 %v4784
      %6274 = vmatpush.bf16.msra.mxu0 %v4776
      %6275 = vmatmul.bf16.gmra.mxu0 %v1059
      %v6276 = vpop.f32.mrf.mxu0
      %v6277 = vadd.f32 %v6264, %v6276
      %v6278 = vpop.f32.mrf.mxu0
      %6279 = vdwg.mxu0
      %6280 = vmatpush.bf16.msra.mxu0 %v4896
      %6281 = vmatpush.bf16.msra.mxu0 %v4888
      %6282 = vmatpush.bf16.msra.mxu0 %v4880
      %6283 = vmatpush.bf16.msra.mxu0 %v4872
      %6284 = vmatpush.bf16.msra.mxu0 %v4864
      %6285 = vmatpush.bf16.msra.mxu0 %v4856
      %6286 = vmatpush.bf16.msra.mxu0 %v4848
      %6287 = vmatpush.bf16.msra.mxu0 %v4840
      %6288 = vmatmul.bf16.gmra.mxu0 %v1060
      %v6289 = vpop.f32.mrf.mxu0
      %v6290 = vadd.f32 %v6277, %v6289
      %v6291 = vpop.f32.mrf.mxu0
      %6292 = vdwg.mxu0
      %6293 = vmatpush.bf16.msra.mxu0 %v4193
      %6294 = vmatpush.bf16.msra.mxu0 %v4185
      %6295 = vmatpush.bf16.msra.mxu0 %v4177
      %6296 = vmatpush.bf16.msra.mxu0 %v4169
      %6297 = vmatpush.bf16.msra.mxu0 %v4161
      %6298 = vmatpush.bf16.msra.mxu0 %v4153
      %6299 = vmatpush.bf16.msra.mxu0 %v4145
      %6300 = vmatpush.bf16.msra.mxu0 %v4137
      %6301 = vmatmul.bf16.gmra.mxu0 %v1049
      %v6302 = vpop.f32.mrf.mxu0
      %v6303 = vadd.f32 0.0, %v6302
      %v6304 = vpop.f32.mrf.mxu0
      %6305 = vdwg.mxu0
      %6306 = vmatpush.bf16.msra.mxu0 %v4257
      %6307 = vmatpush.bf16.msra.mxu0 %v4249
      %6308 = vmatpush.bf16.msra.mxu0 %v4241
      %6309 = vmatpush.bf16.msra.mxu0 %v4233
      %6310 = vmatpush.bf16.msra.mxu0 %v4225
      %6311 = vmatpush.bf16.msra.mxu0 %v4217
      %6312 = vmatpush.bf16.msra.mxu0 %v4209
      %6313 = vmatpush.bf16.msra.mxu0 %v4201
      %6314 = vmatmul.bf16.gmra.mxu0 %v1050
      %v6315 = vpop.f32.mrf.mxu0
      %v6316 = vadd.f32 %v6303, %v6315
      %v6317 = vpop.f32.mrf.mxu0
      %6318 = vdwg.mxu0
      %6319 = vmatpush.bf16.msra.mxu0 %v4321
      %6320 = vmatpush.bf16.msra.mxu0 %v4313
      %6321 = vmatpush.bf16.msra.mxu0 %v4305
      %6322 = vmatpush.bf16.msra.mxu0 %v4297
      %6323 = vmatpush.bf16.msra.mxu0 %v4289
      %6324 = vmatpush.bf16.msra.mxu0 %v4281
      %6325 = vmatpush.bf16.msra.mxu0 %v4273
      %6326 = vmatpush.bf16.msra.mxu0 %v4265
      %6327 = vmatmul.bf16.gmra.mxu0 %v1051
      %v6328 = vpop.f32.mrf.mxu0
      %v6329 = vadd.f32 %v6316, %v6328
      %v6330 = vpop.f32.mrf.mxu0
      %6331 = vdwg.mxu0
      %6332 = vmatpush.bf16.msra.mxu0 %v4385
      %6333 = vmatpush.bf16.msra.mxu0 %v4377
      %6334 = vmatpush.bf16.msra.mxu0 %v4369
      %6335 = vmatpush.bf16.msra.mxu0 %v4361
      %6336 = vmatpush.bf16.msra.mxu0 %v4353
      %6337 = vmatpush.bf16.msra.mxu0 %v4345
      %6338 = vmatpush.bf16.msra.mxu0 %v4337
      %6339 = vmatpush.bf16.msra.mxu0 %v4329
      %6340 = vmatmul.bf16.gmra.mxu0 %v1052
      %v6341 = vpop.f32.mrf.mxu0
      %v6342 = vadd.f32 %v6329, %v6341
      %v6343 = vpop.f32.mrf.mxu0
      %6344 = vdwg.mxu0
      %6345 = vmatpush.bf16.msra.mxu0 %v4449
      %6346 = vmatpush.bf16.msra.mxu0 %v4441
      %6347 = vmatpush.bf16.msra.mxu0 %v4433
      %6348 = vmatpush.bf16.msra.mxu0 %v4425
      %6349 = vmatpush.bf16.msra.mxu0 %v4417
      %6350 = vmatpush.bf16.msra.mxu0 %v4409
      %6351 = vmatpush.bf16.msra.mxu0 %v4401
      %6352 = vmatpush.bf16.msra.mxu0 %v4393
      %6353 = vmatmul.bf16.gmra.mxu0 %v1053
      %v6354 = vpop.f32.mrf.mxu0
      %v6355 = vadd.f32 %v6342, %v6354
      %v6356 = vpop.f32.mrf.mxu0
      %6357 = vdwg.mxu0
      %6358 = vmatpush.bf16.msra.mxu0 %v4513
      %6359 = vmatpush.bf16.msra.mxu0 %v4505
      %6360 = vmatpush.bf16.msra.mxu0 %v4497
      %6361 = vmatpush.bf16.msra.mxu0 %v4489
      %6362 = vmatpush.bf16.msra.mxu0 %v4481
      %6363 = vmatpush.bf16.msra.mxu0 %v4473
      %6364 = vmatpush.bf16.msra.mxu0 %v4465
      %6365 = vmatpush.bf16.msra.mxu0 %v4457
      %6366 = vmatmul.bf16.gmra.mxu0 %v1054
      %v6367 = vpop.f32.mrf.mxu0
      %v6368 = vadd.f32 %v6355, %v6367
      %v6369 = vpop.f32.mrf.mxu0
      %6370 = vdwg.mxu0
      %6371 = vmatpush.bf16.msra.mxu0 %v4577
      %6372 = vmatpush.bf16.msra.mxu0 %v4569
      %6373 = vmatpush.bf16.msra.mxu0 %v4561
      %6374 = vmatpush.bf16.msra.mxu0 %v4553
      %6375 = vmatpush.bf16.msra.mxu0 %v4545
      %6376 = vmatpush.bf16.msra.mxu0 %v4537
      %6377 = vmatpush.bf16.msra.mxu0 %v4529
      %6378 = vmatpush.bf16.msra.mxu0 %v4521
      %6379 = vmatmul.bf16.gmra.mxu0 %v1055
      %v6380 = vpop.f32.mrf.mxu0
      %v6381 = vadd.f32 %v6368, %v6380
      %v6382 = vpop.f32.mrf.mxu0
      %6383 = vdwg.mxu0
      %6384 = vmatpush.bf16.msra.mxu0 %v4641
      %6385 = vmatpush.bf16.msra.mxu0 %v4633
      %6386 = vmatpush.bf16.msra.mxu0 %v4625
      %6387 = vmatpush.bf16.msra.mxu0 %v4617
      %6388 = vmatpush.bf16.msra.mxu0 %v4609
      %6389 = vmatpush.bf16.msra.mxu0 %v4601
      %6390 = vmatpush.bf16.msra.mxu0 %v4593
      %6391 = vmatpush.bf16.msra.mxu0 %v4585
      %6392 = vmatmul.bf16.gmra.mxu0 %v1056
      %v6393 = vpop.f32.mrf.mxu0
      %v6394 = vadd.f32 %v6381, %v6393
      %v6395 = vpop.f32.mrf.mxu0
      %6396 = vdwg.mxu0
      %6397 = vmatpush.bf16.msra.mxu0 %v4705
      %6398 = vmatpush.bf16.msra.mxu0 %v4697
      %6399 = vmatpush.bf16.msra.mxu0 %v4689
      %6400 = vmatpush.bf16.msra.mxu0 %v4681
      %6401 = vmatpush.bf16.msra.mxu0 %v4673
      %6402 = vmatpush.bf16.msra.mxu0 %v4665
      %6403 = vmatpush.bf16.msra.mxu0 %v4657
      %6404 = vmatpush.bf16.msra.mxu0 %v4649
      %6405 = vmatmul.bf16.gmra.mxu0 %v1057
      %v6406 = vpop.f32.mrf.mxu0
      %v6407 = vadd.f32 %v6394, %v6406
      %v6408 = vpop.f32.mrf.mxu0
      %6409 = vdwg.mxu0
      %6410 = vmatpush.bf16.msra.mxu0 %v4769
      %6411 = vmatpush.bf16.msra.mxu0 %v4761
      %6412 = vmatpush.bf16.msra.mxu0 %v4753
      %6413 = vmatpush.bf16.msra.mxu0 %v4745
      %6414 = vmatpush.bf16.msra.mxu0 %v4737
      %6415 = vmatpush.bf16.msra.mxu0 %v4729
      %6416 = vmatpush.bf16.msra.mxu0 %v4721
      %6417 = vmatpush.bf16.msra.mxu0 %v4713
      %6418 = vmatmul.bf16.gmra.mxu0 %v1058
      %v6419 = vpop.f32.mrf.mxu0
      %v6420 = vadd.f32 %v6407, %v6419
      %v6421 = vpop.f32.mrf.mxu0
      %6422 = vdwg.mxu0
      %6423 = vmatpush.bf16.msra.mxu0 %v4833
      %6424 = vmatpush.bf16.msra.mxu0 %v4825
      %6425 = vmatpush.bf16.msra.mxu0 %v4817
      %6426 = vmatpush.bf16.msra.mxu0 %v4809
      %6427 = vmatpush.bf16.msra.mxu0 %v4801
      %6428 = vmatpush.bf16.msra.mxu0 %v4793
      %6429 = vmatpush.bf16.msra.mxu0 %v4785
      %6430 = vmatpush.bf16.msra.mxu0 %v4777
      %6431 = vmatmul.bf16.gmra.mxu0 %v1059
      %v6432 = vpop.f32.mrf.mxu0
      %v6433 = vadd.f32 %v6420, %v6432
      %v6434 = vpop.f32.mrf.mxu0
      %6435 = vdwg.mxu0
      %6436 = vmatpush.bf16.msra.mxu0 %v4897
      %6437 = vmatpush.bf16.msra.mxu0 %v4889
      %6438 = vmatpush.bf16.msra.mxu0 %v4881
      %6439 = vmatpush.bf16.msra.mxu0 %v4873
      %6440 = vmatpush.bf16.msra.mxu0 %v4865
      %6441 = vmatpush.bf16.msra.mxu0 %v4857
      %6442 = vmatpush.bf16.msra.mxu0 %v4849
      %6443 = vmatpush.bf16.msra.mxu0 %v4841
      %6444 = vmatmul.bf16.gmra.mxu0 %v1060
      %v6445 = vpop.f32.mrf.mxu0
      %v6446 = vadd.f32 %v6433, %v6445
      %v6447 = vpop.f32.mrf.mxu0
      %6448 = vdwg.mxu0
      %6449 = vmatpush.bf16.msra.mxu0 %v4194
      %6450 = vmatpush.bf16.msra.mxu0 %v4186
      %6451 = vmatpush.bf16.msra.mxu0 %v4178
      %6452 = vmatpush.bf16.msra.mxu0 %v4170
      %6453 = vmatpush.bf16.msra.mxu0 %v4162
      %6454 = vmatpush.bf16.msra.mxu0 %v4154
      %6455 = vmatpush.bf16.msra.mxu0 %v4146
      %6456 = vmatpush.bf16.msra.mxu0 %v4138
      %6457 = vmatmul.bf16.gmra.mxu0 %v1049
      %v6458 = vpop.f32.mrf.mxu0
      %v6459 = vadd.f32 0.0, %v6458
      %v6460 = vpop.f32.mrf.mxu0
      %6461 = vdwg.mxu0
      %6462 = vmatpush.bf16.msra.mxu0 %v4258
      %6463 = vmatpush.bf16.msra.mxu0 %v4250
      %6464 = vmatpush.bf16.msra.mxu0 %v4242
      %6465 = vmatpush.bf16.msra.mxu0 %v4234
      %6466 = vmatpush.bf16.msra.mxu0 %v4226
      %6467 = vmatpush.bf16.msra.mxu0 %v4218
      %6468 = vmatpush.bf16.msra.mxu0 %v4210
      %6469 = vmatpush.bf16.msra.mxu0 %v4202
      %6470 = vmatmul.bf16.gmra.mxu0 %v1050
      %v6471 = vpop.f32.mrf.mxu0
      %v6472 = vadd.f32 %v6459, %v6471
      %v6473 = vpop.f32.mrf.mxu0
      %6474 = vdwg.mxu0
      %6475 = vmatpush.bf16.msra.mxu0 %v4322
      %6476 = vmatpush.bf16.msra.mxu0 %v4314
      %6477 = vmatpush.bf16.msra.mxu0 %v4306
      %6478 = vmatpush.bf16.msra.mxu0 %v4298
      %6479 = vmatpush.bf16.msra.mxu0 %v4290
      %6480 = vmatpush.bf16.msra.mxu0 %v4282
      %6481 = vmatpush.bf16.msra.mxu0 %v4274
      %6482 = vmatpush.bf16.msra.mxu0 %v4266
      %6483 = vmatmul.bf16.gmra.mxu0 %v1051
      %v6484 = vpop.f32.mrf.mxu0
      %v6485 = vadd.f32 %v6472, %v6484
      %v6486 = vpop.f32.mrf.mxu0
      %6487 = vdwg.mxu0
      %6488 = vmatpush.bf16.msra.mxu0 %v4386
      %6489 = vmatpush.bf16.msra.mxu0 %v4378
      %6490 = vmatpush.bf16.msra.mxu0 %v4370
      %6491 = vmatpush.bf16.msra.mxu0 %v4362
      %6492 = vmatpush.bf16.msra.mxu0 %v4354
      %6493 = vmatpush.bf16.msra.mxu0 %v4346
      %6494 = vmatpush.bf16.msra.mxu0 %v4338
      %6495 = vmatpush.bf16.msra.mxu0 %v4330
      %6496 = vmatmul.bf16.gmra.mxu0 %v1052
      %v6497 = vpop.f32.mrf.mxu0
      %v6498 = vadd.f32 %v6485, %v6497
      %v6499 = vpop.f32.mrf.mxu0
      %6500 = vdwg.mxu0
      %6501 = vmatpush.bf16.msra.mxu0 %v4450
      %6502 = vmatpush.bf16.msra.mxu0 %v4442
      %6503 = vmatpush.bf16.msra.mxu0 %v4434
      %6504 = vmatpush.bf16.msra.mxu0 %v4426
      %6505 = vmatpush.bf16.msra.mxu0 %v4418
      %6506 = vmatpush.bf16.msra.mxu0 %v4410
      %6507 = vmatpush.bf16.msra.mxu0 %v4402
      %6508 = vmatpush.bf16.msra.mxu0 %v4394
      %6509 = vmatmul.bf16.gmra.mxu0 %v1053
      %v6510 = vpop.f32.mrf.mxu0
      %v6511 = vadd.f32 %v6498, %v6510
      %v6512 = vpop.f32.mrf.mxu0
      %6513 = vdwg.mxu0
      %6514 = vmatpush.bf16.msra.mxu0 %v4514
      %6515 = vmatpush.bf16.msra.mxu0 %v4506
      %6516 = vmatpush.bf16.msra.mxu0 %v4498
      %6517 = vmatpush.bf16.msra.mxu0 %v4490
      %6518 = vmatpush.bf16.msra.mxu0 %v4482
      %6519 = vmatpush.bf16.msra.mxu0 %v4474
      %6520 = vmatpush.bf16.msra.mxu0 %v4466
      %6521 = vmatpush.bf16.msra.mxu0 %v4458
      %6522 = vmatmul.bf16.gmra.mxu0 %v1054
      %v6523 = vpop.f32.mrf.mxu0
      %v6524 = vadd.f32 %v6511, %v6523
      %v6525 = vpop.f32.mrf.mxu0
      %6526 = vdwg.mxu0
      %6527 = vmatpush.bf16.msra.mxu0 %v4578
      %6528 = vmatpush.bf16.msra.mxu0 %v4570
      %6529 = vmatpush.bf16.msra.mxu0 %v4562
      %6530 = vmatpush.bf16.msra.mxu0 %v4554
      %6531 = vmatpush.bf16.msra.mxu0 %v4546
      %6532 = vmatpush.bf16.msra.mxu0 %v4538
      %6533 = vmatpush.bf16.msra.mxu0 %v4530
      %6534 = vmatpush.bf16.msra.mxu0 %v4522
      %6535 = vmatmul.bf16.gmra.mxu0 %v1055
      %v6536 = vpop.f32.mrf.mxu0
      %v6537 = vadd.f32 %v6524, %v6536
      %v6538 = vpop.f32.mrf.mxu0
      %6539 = vdwg.mxu0
      %6540 = vmatpush.bf16.msra.mxu0 %v4642
      %6541 = vmatpush.bf16.msra.mxu0 %v4634
      %6542 = vmatpush.bf16.msra.mxu0 %v4626
      %6543 = vmatpush.bf16.msra.mxu0 %v4618
      %6544 = vmatpush.bf16.msra.mxu0 %v4610
      %6545 = vmatpush.bf16.msra.mxu0 %v4602
      %6546 = vmatpush.bf16.msra.mxu0 %v4594
      %6547 = vmatpush.bf16.msra.mxu0 %v4586
      %6548 = vmatmul.bf16.gmra.mxu0 %v1056
      %v6549 = vpop.f32.mrf.mxu0
      %v6550 = vadd.f32 %v6537, %v6549
      %v6551 = vpop.f32.mrf.mxu0
      %6552 = vdwg.mxu0
      %6553 = vmatpush.bf16.msra.mxu0 %v4706
      %6554 = vmatpush.bf16.msra.mxu0 %v4698
      %6555 = vmatpush.bf16.msra.mxu0 %v4690
      %6556 = vmatpush.bf16.msra.mxu0 %v4682
      %6557 = vmatpush.bf16.msra.mxu0 %v4674
      %6558 = vmatpush.bf16.msra.mxu0 %v4666
      %6559 = vmatpush.bf16.msra.mxu0 %v4658
      %6560 = vmatpush.bf16.msra.mxu0 %v4650
      %6561 = vmatmul.bf16.gmra.mxu0 %v1057
      %v6562 = vpop.f32.mrf.mxu0
      %v6563 = vadd.f32 %v6550, %v6562
      %v6564 = vpop.f32.mrf.mxu0
      %6565 = vdwg.mxu0
      %6566 = vmatpush.bf16.msra.mxu0 %v4770
      %6567 = vmatpush.bf16.msra.mxu0 %v4762
      %6568 = vmatpush.bf16.msra.mxu0 %v4754
      %6569 = vmatpush.bf16.msra.mxu0 %v4746
      %6570 = vmatpush.bf16.msra.mxu0 %v4738
      %6571 = vmatpush.bf16.msra.mxu0 %v4730
      %6572 = vmatpush.bf16.msra.mxu0 %v4722
      %6573 = vmatpush.bf16.msra.mxu0 %v4714
      %6574 = vmatmul.bf16.gmra.mxu0 %v1058
      %v6575 = vpop.f32.mrf.mxu0
      %v6576 = vadd.f32 %v6563, %v6575
      %v6577 = vpop.f32.mrf.mxu0
      %6578 = vdwg.mxu0
      %6579 = vmatpush.bf16.msra.mxu0 %v4834
      %6580 = vmatpush.bf16.msra.mxu0 %v4826
      %6581 = vmatpush.bf16.msra.mxu0 %v4818
      %6582 = vmatpush.bf16.msra.mxu0 %v4810
      %6583 = vmatpush.bf16.msra.mxu0 %v4802
      %6584 = vmatpush.bf16.msra.mxu0 %v4794
      %6585 = vmatpush.bf16.msra.mxu0 %v4786
      %6586 = vmatpush.bf16.msra.mxu0 %v4778
      %6587 = vmatmul.bf16.gmra.mxu0 %v1059
      %v6588 = vpop.f32.mrf.mxu0
      %v6589 = vadd.f32 %v6576, %v6588
      %v6590 = vpop.f32.mrf.mxu0
      %6591 = vdwg.mxu0
      %6592 = vmatpush.bf16.msra.mxu0 %v4898
      %6593 = vmatpush.bf16.msra.mxu0 %v4890
      %6594 = vmatpush.bf16.msra.mxu0 %v4882
      %6595 = vmatpush.bf16.msra.mxu0 %v4874
      %6596 = vmatpush.bf16.msra.mxu0 %v4866
      %6597 = vmatpush.bf16.msra.mxu0 %v4858
      %6598 = vmatpush.bf16.msra.mxu0 %v4850
      %6599 = vmatpush.bf16.msra.mxu0 %v4842
      %6600 = vmatmul.bf16.gmra.mxu0 %v1060
      %v6601 = vpop.f32.mrf.mxu0
      %v6602 = vadd.f32 %v6589, %v6601
      %v6603 = vpop.f32.mrf.mxu0
      %6604 = vdwg.mxu0
      %6605 = vmatpush.bf16.msra.mxu0 %v4195
      %6606 = vmatpush.bf16.msra.mxu0 %v4187
      %6607 = vmatpush.bf16.msra.mxu0 %v4179
      %6608 = vmatpush.bf16.msra.mxu0 %v4171
      %6609 = vmatpush.bf16.msra.mxu0 %v4163
      %6610 = vmatpush.bf16.msra.mxu0 %v4155
      %6611 = vmatpush.bf16.msra.mxu0 %v4147
      %6612 = vmatpush.bf16.msra.mxu0 %v4139
      %6613 = vmatmul.bf16.gmra.mxu0 %v1049
      %v6614 = vpop.f32.mrf.mxu0
      %v6615 = vadd.f32 0.0, %v6614
      %v6616 = vpop.f32.mrf.mxu0
      %6617 = vdwg.mxu0
      %6618 = vmatpush.bf16.msra.mxu0 %v4259
      %6619 = vmatpush.bf16.msra.mxu0 %v4251
      %6620 = vmatpush.bf16.msra.mxu0 %v4243
      %6621 = vmatpush.bf16.msra.mxu0 %v4235
      %6622 = vmatpush.bf16.msra.mxu0 %v4227
      %6623 = vmatpush.bf16.msra.mxu0 %v4219
      %6624 = vmatpush.bf16.msra.mxu0 %v4211
      %6625 = vmatpush.bf16.msra.mxu0 %v4203
      %6626 = vmatmul.bf16.gmra.mxu0 %v1050
      %v6627 = vpop.f32.mrf.mxu0
      %v6628 = vadd.f32 %v6615, %v6627
      %v6629 = vpop.f32.mrf.mxu0
      %6630 = vdwg.mxu0
      %6631 = vmatpush.bf16.msra.mxu0 %v4323
      %6632 = vmatpush.bf16.msra.mxu0 %v4315
      %6633 = vmatpush.bf16.msra.mxu0 %v4307
      %6634 = vmatpush.bf16.msra.mxu0 %v4299
      %6635 = vmatpush.bf16.msra.mxu0 %v4291
      %6636 = vmatpush.bf16.msra.mxu0 %v4283
      %6637 = vmatpush.bf16.msra.mxu0 %v4275
      %6638 = vmatpush.bf16.msra.mxu0 %v4267
      %6639 = vmatmul.bf16.gmra.mxu0 %v1051
      %v6640 = vpop.f32.mrf.mxu0
      %v6641 = vadd.f32 %v6628, %v6640
      %v6642 = vpop.f32.mrf.mxu0
      %6643 = vdwg.mxu0
      %6644 = vmatpush.bf16.msra.mxu0 %v4387
      %6645 = vmatpush.bf16.msra.mxu0 %v4379
      %6646 = vmatpush.bf16.msra.mxu0 %v4371
      %6647 = vmatpush.bf16.msra.mxu0 %v4363
      %6648 = vmatpush.bf16.msra.mxu0 %v4355
      %6649 = vmatpush.bf16.msra.mxu0 %v4347
      %6650 = vmatpush.bf16.msra.mxu0 %v4339
      %6651 = vmatpush.bf16.msra.mxu0 %v4331
      %6652 = vmatmul.bf16.gmra.mxu0 %v1052
      %v6653 = vpop.f32.mrf.mxu0
      %v6654 = vadd.f32 %v6641, %v6653
      %v6655 = vpop.f32.mrf.mxu0
      %6656 = vdwg.mxu0
      %6657 = vmatpush.bf16.msra.mxu0 %v4451
      %6658 = vmatpush.bf16.msra.mxu0 %v4443
      %6659 = vmatpush.bf16.msra.mxu0 %v4435
      %6660 = vmatpush.bf16.msra.mxu0 %v4427
      %6661 = vmatpush.bf16.msra.mxu0 %v4419
      %6662 = vmatpush.bf16.msra.mxu0 %v4411
      %6663 = vmatpush.bf16.msra.mxu0 %v4403
      %6664 = vmatpush.bf16.msra.mxu0 %v4395
      %6665 = vmatmul.bf16.gmra.mxu0 %v1053
      %v6666 = vpop.f32.mrf.mxu0
      %v6667 = vadd.f32 %v6654, %v6666
      %v6668 = vpop.f32.mrf.mxu0
      %6669 = vdwg.mxu0
      %6670 = vmatpush.bf16.msra.mxu0 %v4515
      %6671 = vmatpush.bf16.msra.mxu0 %v4507
      %6672 = vmatpush.bf16.msra.mxu0 %v4499
      %6673 = vmatpush.bf16.msra.mxu0 %v4491
      %6674 = vmatpush.bf16.msra.mxu0 %v4483
      %6675 = vmatpush.bf16.msra.mxu0 %v4475
      %6676 = vmatpush.bf16.msra.mxu0 %v4467
      %6677 = vmatpush.bf16.msra.mxu0 %v4459
      %6678 = vmatmul.bf16.gmra.mxu0 %v1054
      %v6679 = vpop.f32.mrf.mxu0
      %v6680 = vadd.f32 %v6667, %v6679
      %v6681 = vpop.f32.mrf.mxu0
      %6682 = vdwg.mxu0
      %6683 = vmatpush.bf16.msra.mxu0 %v4579
      %6684 = vmatpush.bf16.msra.mxu0 %v4571
      %6685 = vmatpush.bf16.msra.mxu0 %v4563
      %6686 = vmatpush.bf16.msra.mxu0 %v4555
      %6687 = vmatpush.bf16.msra.mxu0 %v4547
      %6688 = vmatpush.bf16.msra.mxu0 %v4539
      %6689 = vmatpush.bf16.msra.mxu0 %v4531
      %6690 = vmatpush.bf16.msra.mxu0 %v4523
      %6691 = vmatmul.bf16.gmra.mxu0 %v1055
      %v6692 = vpop.f32.mrf.mxu0
      %v6693 = vadd.f32 %v6680, %v6692
      %v6694 = vpop.f32.mrf.mxu0
      %6695 = vdwg.mxu0
      %6696 = vmatpush.bf16.msra.mxu0 %v4643
      %6697 = vmatpush.bf16.msra.mxu0 %v4635
      %6698 = vmatpush.bf16.msra.mxu0 %v4627
      %6699 = vmatpush.bf16.msra.mxu0 %v4619
      %6700 = vmatpush.bf16.msra.mxu0 %v4611
      %6701 = vmatpush.bf16.msra.mxu0 %v4603
      %6702 = vmatpush.bf16.msra.mxu0 %v4595
      %6703 = vmatpush.bf16.msra.mxu0 %v4587
      %6704 = vmatmul.bf16.gmra.mxu0 %v1056
      %v6705 = vpop.f32.mrf.mxu0
      %v6706 = vadd.f32 %v6693, %v6705
      %v6707 = vpop.f32.mrf.mxu0
      %6708 = vdwg.mxu0
      %6709 = vmatpush.bf16.msra.mxu0 %v4707
      %6710 = vmatpush.bf16.msra.mxu0 %v4699
      %6711 = vmatpush.bf16.msra.mxu0 %v4691
      %6712 = vmatpush.bf16.msra.mxu0 %v4683
      %6713 = vmatpush.bf16.msra.mxu0 %v4675
      %6714 = vmatpush.bf16.msra.mxu0 %v4667
      %6715 = vmatpush.bf16.msra.mxu0 %v4659
      %6716 = vmatpush.bf16.msra.mxu0 %v4651
      %6717 = vmatmul.bf16.gmra.mxu0 %v1057
      %v6718 = vpop.f32.mrf.mxu0
      %v6719 = vadd.f32 %v6706, %v6718
      %v6720 = vpop.f32.mrf.mxu0
      %6721 = vdwg.mxu0
      %6722 = vmatpush.bf16.msra.mxu0 %v4771
      %6723 = vmatpush.bf16.msra.mxu0 %v4763
      %6724 = vmatpush.bf16.msra.mxu0 %v4755
      %6725 = vmatpush.bf16.msra.mxu0 %v4747
      %6726 = vmatpush.bf16.msra.mxu0 %v4739
      %6727 = vmatpush.bf16.msra.mxu0 %v4731
      %6728 = vmatpush.bf16.msra.mxu0 %v4723
      %6729 = vmatpush.bf16.msra.mxu0 %v4715
      %6730 = vmatmul.bf16.gmra.mxu0 %v1058
      %v6731 = vpop.f32.mrf.mxu0
      %v6732 = vadd.f32 %v6719, %v6731
      %v6733 = vpop.f32.mrf.mxu0
      %6734 = vdwg.mxu0
      %6735 = vmatpush.bf16.msra.mxu0 %v4835
      %6736 = vmatpush.bf16.msra.mxu0 %v4827
      %6737 = vmatpush.bf16.msra.mxu0 %v4819
      %6738 = vmatpush.bf16.msra.mxu0 %v4811
      %6739 = vmatpush.bf16.msra.mxu0 %v4803
      %6740 = vmatpush.bf16.msra.mxu0 %v4795
      %6741 = vmatpush.bf16.msra.mxu0 %v4787
      %6742 = vmatpush.bf16.msra.mxu0 %v4779
      %6743 = vmatmul.bf16.gmra.mxu0 %v1059
      %v6744 = vpop.f32.mrf.mxu0
      %v6745 = vadd.f32 %v6732, %v6744
      %v6746 = vpop.f32.mrf.mxu0
      %6747 = vdwg.mxu0
      %6748 = vmatpush.bf16.msra.mxu0 %v4899
      %6749 = vmatpush.bf16.msra.mxu0 %v4891
      %6750 = vmatpush.bf16.msra.mxu0 %v4883
      %6751 = vmatpush.bf16.msra.mxu0 %v4875
      %6752 = vmatpush.bf16.msra.mxu0 %v4867
      %6753 = vmatpush.bf16.msra.mxu0 %v4859
      %6754 = vmatpush.bf16.msra.mxu0 %v4851
      %6755 = vmatpush.bf16.msra.mxu0 %v4843
      %6756 = vmatmul.bf16.gmra.mxu0 %v1060
      %v6757 = vpop.f32.mrf.mxu0
      %v6758 = vadd.f32 %v6745, %v6757
      %v6759 = vpop.f32.mrf.mxu0
      %6760 = vdwg.mxu0
      %6761 = vmatpush.bf16.msra.mxu0 %v4196
      %6762 = vmatpush.bf16.msra.mxu0 %v4188
      %6763 = vmatpush.bf16.msra.mxu0 %v4180
      %6764 = vmatpush.bf16.msra.mxu0 %v4172
      %6765 = vmatpush.bf16.msra.mxu0 %v4164
      %6766 = vmatpush.bf16.msra.mxu0 %v4156
      %6767 = vmatpush.bf16.msra.mxu0 %v4148
      %6768 = vmatpush.bf16.msra.mxu0 %v4140
      %6769 = vmatmul.bf16.gmra.mxu0 %v1049
      %v6770 = vpop.f32.mrf.mxu0
      %v6771 = vadd.f32 0.0, %v6770
      %v6772 = vpop.f32.mrf.mxu0
      %6773 = vdwg.mxu0
      %6774 = vmatpush.bf16.msra.mxu0 %v4260
      %6775 = vmatpush.bf16.msra.mxu0 %v4252
      %6776 = vmatpush.bf16.msra.mxu0 %v4244
      %6777 = vmatpush.bf16.msra.mxu0 %v4236
      %6778 = vmatpush.bf16.msra.mxu0 %v4228
      %6779 = vmatpush.bf16.msra.mxu0 %v4220
      %6780 = vmatpush.bf16.msra.mxu0 %v4212
      %6781 = vmatpush.bf16.msra.mxu0 %v4204
      %6782 = vmatmul.bf16.gmra.mxu0 %v1050
      %v6783 = vpop.f32.mrf.mxu0
      %v6784 = vadd.f32 %v6771, %v6783
      %v6785 = vpop.f32.mrf.mxu0
      %6786 = vdwg.mxu0
      %6787 = vmatpush.bf16.msra.mxu0 %v4324
      %6788 = vmatpush.bf16.msra.mxu0 %v4316
      %6789 = vmatpush.bf16.msra.mxu0 %v4308
      %6790 = vmatpush.bf16.msra.mxu0 %v4300
      %6791 = vmatpush.bf16.msra.mxu0 %v4292
      %6792 = vmatpush.bf16.msra.mxu0 %v4284
      %6793 = vmatpush.bf16.msra.mxu0 %v4276
      %6794 = vmatpush.bf16.msra.mxu0 %v4268
      %6795 = vmatmul.bf16.gmra.mxu0 %v1051
      %v6796 = vpop.f32.mrf.mxu0
      %v6797 = vadd.f32 %v6784, %v6796
      %v6798 = vpop.f32.mrf.mxu0
      %6799 = vdwg.mxu0
      %6800 = vmatpush.bf16.msra.mxu0 %v4388
      %6801 = vmatpush.bf16.msra.mxu0 %v4380
      %6802 = vmatpush.bf16.msra.mxu0 %v4372
      %6803 = vmatpush.bf16.msra.mxu0 %v4364
      %6804 = vmatpush.bf16.msra.mxu0 %v4356
      %6805 = vmatpush.bf16.msra.mxu0 %v4348
      %6806 = vmatpush.bf16.msra.mxu0 %v4340
      %6807 = vmatpush.bf16.msra.mxu0 %v4332
      %6808 = vmatmul.bf16.gmra.mxu0 %v1052
      %v6809 = vpop.f32.mrf.mxu0
      %v6810 = vadd.f32 %v6797, %v6809
      %v6811 = vpop.f32.mrf.mxu0
      %6812 = vdwg.mxu0
      %6813 = vmatpush.bf16.msra.mxu0 %v4452
      %6814 = vmatpush.bf16.msra.mxu0 %v4444
      %6815 = vmatpush.bf16.msra.mxu0 %v4436
      %6816 = vmatpush.bf16.msra.mxu0 %v4428
      %6817 = vmatpush.bf16.msra.mxu0 %v4420
      %6818 = vmatpush.bf16.msra.mxu0 %v4412
      %6819 = vmatpush.bf16.msra.mxu0 %v4404
      %6820 = vmatpush.bf16.msra.mxu0 %v4396
      %6821 = vmatmul.bf16.gmra.mxu0 %v1053
      %v6822 = vpop.f32.mrf.mxu0
      %v6823 = vadd.f32 %v6810, %v6822
      %v6824 = vpop.f32.mrf.mxu0
      %6825 = vdwg.mxu0
      %6826 = vmatpush.bf16.msra.mxu0 %v4516
      %6827 = vmatpush.bf16.msra.mxu0 %v4508
      %6828 = vmatpush.bf16.msra.mxu0 %v4500
      %6829 = vmatpush.bf16.msra.mxu0 %v4492
      %6830 = vmatpush.bf16.msra.mxu0 %v4484
      %6831 = vmatpush.bf16.msra.mxu0 %v4476
      %6832 = vmatpush.bf16.msra.mxu0 %v4468
      %6833 = vmatpush.bf16.msra.mxu0 %v4460
      %6834 = vmatmul.bf16.gmra.mxu0 %v1054
      %v6835 = vpop.f32.mrf.mxu0
      %v6836 = vadd.f32 %v6823, %v6835
      %v6837 = vpop.f32.mrf.mxu0
      %6838 = vdwg.mxu0
      %6839 = vmatpush.bf16.msra.mxu0 %v4580
      %6840 = vmatpush.bf16.msra.mxu0 %v4572
      %6841 = vmatpush.bf16.msra.mxu0 %v4564
      %6842 = vmatpush.bf16.msra.mxu0 %v4556
      %6843 = vmatpush.bf16.msra.mxu0 %v4548
      %6844 = vmatpush.bf16.msra.mxu0 %v4540
      %6845 = vmatpush.bf16.msra.mxu0 %v4532
      %6846 = vmatpush.bf16.msra.mxu0 %v4524
      %6847 = vmatmul.bf16.gmra.mxu0 %v1055
      %v6848 = vpop.f32.mrf.mxu0
      %v6849 = vadd.f32 %v6836, %v6848
      %v6850 = vpop.f32.mrf.mxu0
      %6851 = vdwg.mxu0
      %6852 = vmatpush.bf16.msra.mxu0 %v4644
      %6853 = vmatpush.bf16.msra.mxu0 %v4636
      %6854 = vmatpush.bf16.msra.mxu0 %v4628
      %6855 = vmatpush.bf16.msra.mxu0 %v4620
      %6856 = vmatpush.bf16.msra.mxu0 %v4612
      %6857 = vmatpush.bf16.msra.mxu0 %v4604
      %6858 = vmatpush.bf16.msra.mxu0 %v4596
      %6859 = vmatpush.bf16.msra.mxu0 %v4588
      %6860 = vmatmul.bf16.gmra.mxu0 %v1056
      %v6861 = vpop.f32.mrf.mxu0
      %v6862 = vadd.f32 %v6849, %v6861
      %v6863 = vpop.f32.mrf.mxu0
      %6864 = vdwg.mxu0
      %6865 = vmatpush.bf16.msra.mxu0 %v4708
      %6866 = vmatpush.bf16.msra.mxu0 %v4700
      %6867 = vmatpush.bf16.msra.mxu0 %v4692
      %6868 = vmatpush.bf16.msra.mxu0 %v4684
      %6869 = vmatpush.bf16.msra.mxu0 %v4676
      %6870 = vmatpush.bf16.msra.mxu0 %v4668
      %6871 = vmatpush.bf16.msra.mxu0 %v4660
      %6872 = vmatpush.bf16.msra.mxu0 %v4652
      %6873 = vmatmul.bf16.gmra.mxu0 %v1057
      %v6874 = vpop.f32.mrf.mxu0
      %v6875 = vadd.f32 %v6862, %v6874
      %v6876 = vpop.f32.mrf.mxu0
      %6877 = vdwg.mxu0
      %6878 = vmatpush.bf16.msra.mxu0 %v4772
      %6879 = vmatpush.bf16.msra.mxu0 %v4764
      %6880 = vmatpush.bf16.msra.mxu0 %v4756
      %6881 = vmatpush.bf16.msra.mxu0 %v4748
      %6882 = vmatpush.bf16.msra.mxu0 %v4740
      %6883 = vmatpush.bf16.msra.mxu0 %v4732
      %6884 = vmatpush.bf16.msra.mxu0 %v4724
      %6885 = vmatpush.bf16.msra.mxu0 %v4716
      %6886 = vmatmul.bf16.gmra.mxu0 %v1058
      %v6887 = vpop.f32.mrf.mxu0
      %v6888 = vadd.f32 %v6875, %v6887
      %v6889 = vpop.f32.mrf.mxu0
      %6890 = vdwg.mxu0
      %6891 = vmatpush.bf16.msra.mxu0 %v4836
      %6892 = vmatpush.bf16.msra.mxu0 %v4828
      %6893 = vmatpush.bf16.msra.mxu0 %v4820
      %6894 = vmatpush.bf16.msra.mxu0 %v4812
      %6895 = vmatpush.bf16.msra.mxu0 %v4804
      %6896 = vmatpush.bf16.msra.mxu0 %v4796
      %6897 = vmatpush.bf16.msra.mxu0 %v4788
      %6898 = vmatpush.bf16.msra.mxu0 %v4780
      %6899 = vmatmul.bf16.gmra.mxu0 %v1059
      %v6900 = vpop.f32.mrf.mxu0
      %v6901 = vadd.f32 %v6888, %v6900
      %v6902 = vpop.f32.mrf.mxu0
      %6903 = vdwg.mxu0
      %6904 = vmatpush.bf16.msra.mxu0 %v4900
      %6905 = vmatpush.bf16.msra.mxu0 %v4892
      %6906 = vmatpush.bf16.msra.mxu0 %v4884
      %6907 = vmatpush.bf16.msra.mxu0 %v4876
      %6908 = vmatpush.bf16.msra.mxu0 %v4868
      %6909 = vmatpush.bf16.msra.mxu0 %v4860
      %6910 = vmatpush.bf16.msra.mxu0 %v4852
      %6911 = vmatpush.bf16.msra.mxu0 %v4844
      %6912 = vmatmul.bf16.gmra.mxu0 %v1060
      %v6913 = vpop.f32.mrf.mxu0
      %v6914 = vadd.f32 %v6901, %v6913
      %v6915 = vpop.f32.mrf.mxu0
      %6916 = vdwg.mxu0
      %v6917 = vmax.f32 %v5822, %v6134
      %v6918 = vmax.f32 %v5978, %v6290
      %v6919 = vmax.f32 %v6446, %v6758
      %v6920 = vmax.f32 %v6602, %v6914
      %v6921 = vmax.f32 %v6917, %v6919
      %v6922 = vmax.f32 %v6918, %v6920
      %v6923 = vld [vmem:[%s4] sm:$0x3]
      %v6925 = vperm.slane %v6923, 0
      %v6926 = vperm.slane %v6923, 1
      %v6929 = vadd.f32 %v6921, %v6925
      %v6930 = vadd.f32 %v6922, %v6926
      %v6931 = vmul.f32 %v6929, 0.5
      %v6932 = vmul.f32 %v6930, 0.5
      %v6933 = vtanh.pop %v6931
      %v6934 = vtanh.pop %v6932
      %v6935 = vmul.f32 %v6933, 0.5
      %v6936 = vmul.f32 %v6934, 0.5
      %v6937 = vadd.f32 %v6935, 0.5
      %v6938 = vadd.f32 %v6936, 0.5
      %v6939 = vpack.c.bf16 %v6937, %v6937
      %v6940 = vpack.c.bf16 %v6938, %v6938
      %v6941 = vld [vmem:[%s5] sm:$0xf]
      %v6942 = vld [vmem:[%s5 + $0x4] sm:$0xf]
      %v6943 = vld [vmem:[%s5 + $0x8] sm:$0xf]
      %v6944 = vld [vmem:[%s5 + $0xc] sm:$0xf]
      %v6945 = vld [vmem:[%s5 + $0x10] sm:$0xf]
      %v6946 = vld [vmem:[%s5 + $0x14] sm:$0xf]
      %v6947 = vld [vmem:[%s5 + $0x18] sm:$0xf]
      %v6948 = vld [vmem:[%s5 + $0x1c] sm:$0xf]
      %v6949 = vld [vmem:[%s5 + $0x20] sm:$0xf]
      %v6950 = vld [vmem:[%s5 + $0x24] sm:$0xf]
      %v6951 = vld [vmem:[%s5 + $0x28] sm:$0xf]
      %v6952 = vld [vmem:[%s5 + $0x2c] sm:$0xf]
      %v6953 = vld [vmem:[%s5 + $0x30] sm:$0xf]
      %v6954 = vld [vmem:[%s5 + $0x34] sm:$0xf]
      %v6955 = vld [vmem:[%s5 + $0x38] sm:$0xf]
      %v6956 = vld [vmem:[%s5 + $0x3c] sm:$0xf]
      %v6957 = vld [vmem:[%s5 + $0x40] sm:$0xf]
      %v6958 = vld [vmem:[%s5 + $0x44] sm:$0xf]
      %v6959 = vld [vmem:[%s5 + $0x48] sm:$0xf]
      %v6960 = vld [vmem:[%s5 + $0x4c] sm:$0xf]
      %v6961 = vld [vmem:[%s5 + $0x50] sm:$0xf]
      %v6962 = vld [vmem:[%s5 + $0x54] sm:$0xf]
      %v6963 = vld [vmem:[%s5 + $0x58] sm:$0xf]
      %v6964 = vld [vmem:[%s5 + $0x5c] sm:$0xf]
      %v6965 = vld [vmem:[%s5 + $0x60] sm:$0xf]
      %v6966 = vld [vmem:[%s5 + $0x64] sm:$0xf]
      %v6967 = vld [vmem:[%s5 + $0x68] sm:$0xf]
      %v6968 = vld [vmem:[%s5 + $0x6c] sm:$0xf]
      %v6969 = vld [vmem:[%s5 + $0x70] sm:$0xf]
      %v6970 = vld [vmem:[%s5 + $0x74] sm:$0xf]
      %v6971 = vld [vmem:[%s5 + $0x78] sm:$0xf]
      %v6972 = vld [vmem:[%s5 + $0x7c] sm:$0xf]
      %v6973 = vld [vmem:[%s6] sm:$0x1]
      %v6975 = vperm.slane %v6973, 0
      %v7009 = vunpack.c.l.b16 %v6941
      %v7010 = vunpack.c.l.b16 %v6942
      %v7011 = vunpack.c.l.b16 %v6943
      %v7012 = vunpack.c.l.b16 %v6944
      %v7013 = vunpack.c.l.b16 %v6945
      %v7014 = vunpack.c.l.b16 %v6946
      %v7015 = vunpack.c.l.b16 %v6947
      %v7016 = vunpack.c.l.b16 %v6948
      %v7017 = vunpack.c.l.b16 %v6949
      %v7018 = vunpack.c.l.b16 %v6950
      %v7019 = vunpack.c.l.b16 %v6951
      %v7020 = vunpack.c.l.b16 %v6952
      %v7021 = vunpack.c.l.b16 %v6953
      %v7022 = vunpack.c.l.b16 %v6954
      %v7023 = vunpack.c.l.b16 %v6955
      %v7024 = vunpack.c.l.b16 %v6956
      %v7025 = vunpack.c.l.b16 %v6957
      %v7026 = vunpack.c.l.b16 %v6958
      %v7027 = vunpack.c.l.b16 %v6959
      %v7028 = vunpack.c.l.b16 %v6960
      %v7029 = vunpack.c.l.b16 %v6961
      %v7030 = vunpack.c.l.b16 %v6962
      %v7031 = vunpack.c.l.b16 %v6963
      %v7032 = vunpack.c.l.b16 %v6964
      %v7033 = vunpack.c.l.b16 %v6965
      %v7034 = vunpack.c.l.b16 %v6966
      %v7035 = vunpack.c.l.b16 %v6967
      %v7036 = vunpack.c.l.b16 %v6968
      %v7037 = vunpack.c.l.b16 %v6969
      %v7038 = vunpack.c.l.b16 %v6970
      %v7039 = vunpack.c.l.b16 %v6971
      %v7040 = vunpack.c.l.b16 %v6972
      %v7041 = vpack.c.b16 %v7010, %v7009
      %v7042 = vpack.c.b16 %v7012, %v7011
      %v7043 = vpack.c.b16 %v7014, %v7013
      %v7044 = vpack.c.b16 %v7016, %v7015
      %v7045 = vpack.c.b16 %v7018, %v7017
      %v7046 = vpack.c.b16 %v7020, %v7019
      %v7047 = vpack.c.b16 %v7022, %v7021
      %v7048 = vpack.c.b16 %v7024, %v7023
      %v7049 = vpack.c.b16 %v7026, %v7025
      %v7050 = vpack.c.b16 %v7028, %v7027
      %v7051 = vpack.c.b16 %v7030, %v7029
      %v7052 = vpack.c.b16 %v7032, %v7031
      %v7053 = vpack.c.b16 %v7034, %v7033
      %v7054 = vpack.c.b16 %v7036, %v7035
      %v7055 = vpack.c.b16 %v7038, %v7037
      %v7056 = vpack.c.b16 %v7040, %v7039
      %7073 = vmatpush.bf16.msra.mxu0 %v7048
      %7074 = vmatpush.bf16.msra.mxu0 %v7047
      %7075 = vmatpush.bf16.msra.mxu0 %v7046
      %7076 = vmatpush.bf16.msra.mxu0 %v7045
      %7077 = vmatpush.bf16.msra.mxu0 %v7044
      %7078 = vmatpush.bf16.msra.mxu0 %v7043
      %7079 = vmatpush.bf16.msra.mxu0 %v7042
      %7080 = vmatpush.bf16.msra.mxu0 %v7041
      %7081 = vmatmul.bf16.gmra.mxu0 %v6939
      %v7082 = vpop.f32.mrf.mxu0
      %v7083 = vadd.f32 %v6975, %v7082
      %v7084 = vpop.f32.mrf.mxu0
      %7085 = vdwg.mxu0
      %7086 = vmatpush.bf16.msra.mxu0 %v7056
      %7087 = vmatpush.bf16.msra.mxu0 %v7055
      %7088 = vmatpush.bf16.msra.mxu0 %v7054
      %7089 = vmatpush.bf16.msra.mxu0 %v7053
      %7090 = vmatpush.bf16.msra.mxu0 %v7052
      %7091 = vmatpush.bf16.msra.mxu0 %v7051
      %7092 = vmatpush.bf16.msra.mxu0 %v7050
      %7093 = vmatpush.bf16.msra.mxu0 %v7049
      %7094 = vmatmul.bf16.gmra.mxu0 %v6940
      %v7095 = vpop.f32.mrf.mxu0
      %v7096 = vadd.f32 %v7083, %v7095
      %v7097 = vpop.f32.mrf.mxu0
      %7098 = vdwg.mxu0
      %v7099 = vmul.f32 %v7096, 0.5
      %v7100 = vtanh.pop %v7099
      %v7101 = vmul.f32 %v7100, 0.5
      %v7102 = vadd.f32 %v7101, 0.5
      %v7103 = vpack.c.bf16 %v7102, %v7102
      %v7104 = vld [vmem:[%s7] sm:$0xf]
      %v7105 = vld [vmem:[%s7 + $0x4] sm:$0xf]
      %v7106 = vld [vmem:[%s7 + $0x8] sm:$0xf]
      %v7107 = vld [vmem:[%s7 + $0xc] sm:$0xf]
      %v7108 = vld [vmem:[%s7 + $0x10] sm:$0xf]
      %v7109 = vld [vmem:[%s7 + $0x14] sm:$0xf]
      %v7110 = vld [vmem:[%s7 + $0x18] sm:$0xf]
      %v7111 = vld [vmem:[%s7 + $0x1c] sm:$0xf]
      %v7112 = vld [vmem:[%s7 + $0x20] sm:$0xf]
      %v7113 = vld [vmem:[%s7 + $0x24] sm:$0xf]
      %v7114 = vld [vmem:[%s7 + $0x28] sm:$0xf]
      %v7115 = vld [vmem:[%s7 + $0x2c] sm:$0xf]
      %v7116 = vld [vmem:[%s7 + $0x30] sm:$0xf]
      %v7117 = vld [vmem:[%s7 + $0x34] sm:$0xf]
      %v7118 = vld [vmem:[%s7 + $0x38] sm:$0xf]
      %v7119 = vld [vmem:[%s7 + $0x3c] sm:$0xf]
      %v7120 = vld [vmem:[%s8] sm:$0x1]
      %v7122 = vperm.slane %v7120, 0
      %v7140 = vunpack.c.l.b16 %v7104
      %v7141 = vunpack.c.l.b16 %v7105
      %v7142 = vunpack.c.l.b16 %v7106
      %v7143 = vunpack.c.l.b16 %v7107
      %v7144 = vunpack.c.l.b16 %v7108
      %v7145 = vunpack.c.l.b16 %v7109
      %v7146 = vunpack.c.l.b16 %v7110
      %v7147 = vunpack.c.l.b16 %v7111
      %v7148 = vunpack.c.l.b16 %v7112
      %v7149 = vunpack.c.l.b16 %v7113
      %v7150 = vunpack.c.l.b16 %v7114
      %v7151 = vunpack.c.l.b16 %v7115
      %v7152 = vunpack.c.l.b16 %v7116
      %v7153 = vunpack.c.l.b16 %v7117
      %v7154 = vunpack.c.l.b16 %v7118
      %v7155 = vunpack.c.l.b16 %v7119
      %v7156 = vpack.c.b16 %v7141, %v7140
      %v7157 = vpack.c.b16 %v7143, %v7142
      %v7158 = vpack.c.b16 %v7145, %v7144
      %v7159 = vpack.c.b16 %v7147, %v7146
      %v7160 = vpack.c.b16 %v7149, %v7148
      %v7161 = vpack.c.b16 %v7151, %v7150
      %v7162 = vpack.c.b16 %v7153, %v7152
      %v7163 = vpack.c.b16 %v7155, %v7154
      %7172 = vmatpush.bf16.msra.mxu0 %v7163
      %7173 = vmatpush.bf16.msra.mxu0 %v7162
      %7174 = vmatpush.bf16.msra.mxu0 %v7161
      %7175 = vmatpush.bf16.msra.mxu0 %v7160
      %7176 = vmatpush.bf16.msra.mxu0 %v7159
      %7177 = vmatpush.bf16.msra.mxu0 %v7158
      %7178 = vmatpush.bf16.msra.mxu0 %v7157
      %7179 = vmatpush.bf16.msra.mxu0 %v7156
      %7180 = vmatmul.bf16.gmra.mxu0 %v7103
      %v7181 = vpop.f32.mrf.mxu0
      %v7182 = vadd.f32 %v7122, %v7181
      %v7183 = vpop.f32.mrf.mxu0
      %7184 = vdwg.mxu0
      %v7185 = vmul.f32 %v7182, 0.5
      %v7186 = vtanh.pop %v7185
      %v7187 = vmul.f32 %v7186, 0.5
      %v7188 = vadd.f32 %v7187, 0.5
      %v7189 = vpack.c.bf16 %v7188, %v7188
      %v7190 = vld [vmem:[%s9] sm:$0xf]
      %v7191 = vld [vmem:[%s9 + $0x4] sm:$0xf]
      %v7192 = vld [vmem:[%s9 + $0x8] sm:$0xf]
      %v7193 = vld [vmem:[%s9 + $0xc] sm:$0xf]
      %v7194 = vld [vmem:[%s9 + $0x10] sm:$0xf]
      %v7195 = vld [vmem:[%s9 + $0x14] sm:$0xf]
      %v7196 = vld [vmem:[%s9 + $0x18] sm:$0xf]
      %v7197 = vld [vmem:[%s9 + $0x1c] sm:$0xf]
      %v7198 = vld [vmem:[%s9 + $0x20] sm:$0xf]
      %v7199 = vld [vmem:[%s9 + $0x24] sm:$0xf]
      %v7200 = vld [vmem:[%s9 + $0x28] sm:$0xf]
      %v7201 = vld [vmem:[%s9 + $0x2c] sm:$0xf]
      %v7202 = vld [vmem:[%s9 + $0x30] sm:$0xf]
      %v7203 = vld [vmem:[%s9 + $0x34] sm:$0xf]
      %v7204 = vld [vmem:[%s9 + $0x38] sm:$0xf]
      %v7205 = vld [vmem:[%s9 + $0x3c] sm:$0xf]
      %v7206 = vld [vmem:[%s10] sm:$0x1]
      %v7208 = vperm.slane %v7206, 0
      %v7226 = vunpack.c.l.b16 %v7190
      %v7227 = vunpack.c.l.b16 %v7191
      %v7228 = vunpack.c.l.b16 %v7192
      %v7229 = vunpack.c.l.b16 %v7193
      %v7230 = vunpack.c.l.b16 %v7194
      %v7231 = vunpack.c.l.b16 %v7195
      %v7232 = vunpack.c.l.b16 %v7196
      %v7233 = vunpack.c.l.b16 %v7197
      %v7234 = vunpack.c.l.b16 %v7198
      %v7235 = vunpack.c.l.b16 %v7199
      %v7236 = vunpack.c.l.b16 %v7200
      %v7237 = vunpack.c.l.b16 %v7201
      %v7238 = vunpack.c.l.b16 %v7202
      %v7239 = vunpack.c.l.b16 %v7203
      %v7240 = vunpack.c.l.b16 %v7204
      %v7241 = vunpack.c.l.b16 %v7205
      %v7242 = vpack.c.b16 %v7227, %v7226
      %v7243 = vpack.c.b16 %v7229, %v7228
      %v7244 = vpack.c.b16 %v7231, %v7230
      %v7245 = vpack.c.b16 %v7233, %v7232
      %v7246 = vpack.c.b16 %v7235, %v7234
      %v7247 = vpack.c.b16 %v7237, %v7236
      %v7248 = vpack.c.b16 %v7239, %v7238
      %v7249 = vpack.c.b16 %v7241, %v7240
      %7258 = vmatpush.bf16.msra.mxu0 %v7249
      %7259 = vmatpush.bf16.msra.mxu0 %v7248
      %7260 = vmatpush.bf16.msra.mxu0 %v7247
      %7261 = vmatpush.bf16.msra.mxu0 %v7246
      %7262 = vmatpush.bf16.msra.mxu0 %v7245
      %7263 = vmatpush.bf16.msra.mxu0 %v7244
      %7264 = vmatpush.bf16.msra.mxu0 %v7243
      %7265 = vmatpush.bf16.msra.mxu0 %v7242
      %7266 = vmatmul.bf16.gmra.mxu0 %v7189
      %v7267 = vpop.f32.mrf.mxu0
      %v7268 = vadd.f32 %v7208, %v7267
      %v7269 = vpop.f32.mrf.mxu0
      %7270 = vdwg.mxu0
      %7271 = vst [vmem:[%s389] sm:$0xff] %v7268
      %p7272 = scmp.lt.s32.totalorder %s22, 1
      %s7273 = scalar_select %p7272, %s22, 1
      %s7274 = smul.addr %s7273, 8
      %s7275 = scalar_lea.vmem %s11, %s7274
      // Predicated region
      $region65: #{lenet_forward.1} parent=63 // pred_check
        %p7276 = pneg %p276
      $region66: #{lenet_forward.1} parent=63 // pred_check_branch
        %7278 = sbr.rel (%p7276) target = $region68
      $region67: #{lenet_forward.1} parent=63 // pred_region
        _
      $region68: #{lenet_forward.1} parent=63 // pred_fallthru
        _
    $region64: #{lenet_forward.1} parent=5 // pred_fallthru
      _
    %p7279 = scmp.le.s32.totalorder 2, %s17
    // Predicated region
    $region69: #{lenet_forward.1} parent=5 // pred_check
      %p7280 = pneg %p7279
    $region70: #{lenet_forward.1} parent=5 // pred_check_branch
      %7282 = sbr.rel (%p7280) target = $region72
    $region71: #{lenet_forward.1} parent=5 // pred_region
      %s7283 = ssub.s32 %s17, 2
      // Predicated region
      $region73: #{lenet_forward.1} parent=71 // pred_check
        %p7284 = pneg %p282
      $region74: #{lenet_forward.1} parent=71 // pred_check_branch
        %7286 = sbr.rel (%p7284) target = $region76
      $region75: #{lenet_forward.1} parent=71 // pred_region
        %p7287 = scmp.lt.s32.totalorder %s23, 1
        %s7288 = scalar_select %p7287, %s23, 1
        %s7289 = smul.addr %s7288, 8
        %s7290 = scalar_lea.vmem %s11, %s7289
      $region76: #{lenet_forward.1} parent=71 // pred_fallthru
        _
    $region72: #{lenet_forward.1} parent=5 // pred_fallthru
      _
  $region6: #{lenet_forward.1} parent=0 // loop_footer
    %s21 = sadd.s32 1, %s17
  $region7: #{lenet_forward.1} parent=0 // loop_footer_branch
    %16 = sbr.rel target = $region3
  $region8: #{lenet_forward.1} parent=0 // loop_exit
    _

</llo_original>
